<compile_context>
chip_gen: v7x
topology: tpu7x:2x2x1
jax: 0.10.0
libtpu: 0.0.40
codegen_flags: <defaults>
</compile_context>

<pallas_src>
import jax
import jax.numpy as jnp
from jax import lax
from jax.experimental import pallas as pl
from jax.experimental.pallas import tpu as pltpu


# ----------------------------------------------------------------------------
# In-kernel helpers (traced inside the fused kernel; channel-second layout)
# ----------------------------------------------------------------------------
def _identity(n, dtype):
    """(n, n) identity built from a single 2-D iota compare."""
    return (lax.broadcasted_iota(jnp.int32, (n, n), 0)
            == lax.broadcasted_iota(jnp.int32, (n, n), 1)).astype(dtype)


def _mult_conv2_relu(x, eye, kfull, w5, bias):
    """MultLayer + SnConv2 + ReLU for one batch element.

    x     : (C, n, n) f32 activations (channel-second)
    kfull : (2*O*n, C*n) block-kron weights for the full-rank terms (m, m^T)
    w5    : (5, O, C)    low-rank weights: rows, cols, diag_i, diag_j, total
    bias  : (O, 1)
    returns (O, n, n) f32
    """
    C, n, _ = x.shape
    O = w5.shape[1]
    On = O * n

    # --- MultLayer: per-channel m[c] = x[c] @ x[c]  (f32 accumulation) -------
    m = jnp.einsum("cij,cjk->cik", x, x, preferred_element_type=jnp.float32)

    # --- full-rank terms (m, m^T): one block-kron MXU matmul, K = C*n --------
    m2 = m.reshape(C * n, n)                                       # last dim preserved
    ff = jnp.dot(kfull, m2, preferred_element_type=jnp.float32)    # (2*O*n, n)
    f_m = ff[:On].reshape(O, n, n)
    f_mt = ff[On:].reshape(O, n, n)
    full = f_m + jnp.transpose(f_mt, (0, 2, 1))                    # (O, n, n)

    # --- low-rank contractions ------------------------------------------------
    rows = jnp.sum(m, axis=2)                         # (C, n)  sum_j m[c,i,j]
    cols = jnp.sum(m, axis=1)                         # (C, n)  sum_i m[c,i,j]
    diag = jnp.sum(m * eye[None], axis=2)             # (C, n)  m[c,k,k]
    total = jnp.sum(rows, axis=1, keepdims=True)      # (C, 1)

    per_i = (jnp.dot(w5[0], rows, preferred_element_type=jnp.float32)    # rowsum
             + jnp.dot(w5[2], diag, preferred_element_type=jnp.float32)  # diag_i
             + jnp.dot(w5[4], total, preferred_element_type=jnp.float32) # total
             + bias)                                                     # (O, n)
    per_j = (jnp.dot(w5[1], cols, preferred_element_type=jnp.float32)    # colsum
             + jnp.dot(w5[3], diag, preferred_element_type=jnp.float32)) # diag_j

    y = full + per_i[:, :, None] + per_j[:, None, :]
    return jnp.maximum(y, 0.0)                        # ReLU


def _conv2to1(y, eye, v, b2):
    """SnConv2to1: (C, n, n) channel-second -> (n, OUT)."""
    diag = jnp.sum(y * eye[None], axis=2)             # (C, n)
    rows = jnp.sum(y, axis=2)                         # (C, n)
    cols = jnp.sum(y, axis=1)                         # (C, n)
    total = jnp.sum(rows, axis=1, keepdims=True)      # (C, 1)
    z = (jnp.dot(v[0], diag, preferred_element_type=jnp.float32)
         + jnp.dot(v[1], rows, preferred_element_type=jnp.float32)
         + jnp.dot(v[2], cols, preferred_element_type=jnp.float32)
         + jnp.dot(v[3], total, preferred_element_type=jnp.float32)
         + b2)                                        # (OUT, n)
    return z.T                                        # (n, OUT)


# ----------------------------------------------------------------------------
# Fully fused encoder kernel (all layers + final contraction, one launch)
# ----------------------------------------------------------------------------
def _make_encoder_kernel(num_layers):
    def kernel(*refs):
        # refs = [x, (kfull, w5, bias) * L, v4, b2, out]
        x_ref = refs[0]
        o_ref = refs[-1]
        n = x_ref.shape[-1]
        eye = _identity(n, jnp.float32)

        y = x_ref[0]                                   # (C0, n, n) f32
        for l in range(num_layers):                    # static unroll
            kfull = refs[1 + 3 * l][...]
            w5 = refs[2 + 3 * l][...]
            bias = refs[3 + 3 * l][...]
            y = _mult_conv2_relu(y, eye, kfull, w5, bias)

        v = refs[1 + 3 * num_layers][...]
        b2 = refs[2 + 3 * num_layers][...]
        o_ref[0] = _conv2to1(y, eye, v, b2)
    return kernel


def sn_mult_encoder_fused(x, prepped):
    """x: (B, n, n, C_in) channel-last -> (B, n, out_channels).

    `prepped` is the output of `prepare_params` (computed ONCE, outside jit).
    """
    B, n, _, C0 = x.shape
    layers = prepped["layers"]
    v4, b2 = prepped["contractive"]
    OUT = v4.shape[1]
    num_layers = len(layers)

    # One-time layout glue -> channel-second (tiny; see TODO at top of file).
    x_cs = jnp.transpose(x, (0, 3, 1, 2))              # (B, C0, n, n)

    in_specs = [pl.BlockSpec((1, C0, n, n), lambda b: (b, 0, 0, 0))]
    operands = [x_cs]
    weight_bytes = 0
    for (kf, w5, bias) in layers:
        in_specs += [
            pl.BlockSpec(kf.shape, lambda b: (0, 0)),
            pl.BlockSpec(w5.shape, lambda b: (0, 0, 0)),
            pl.BlockSpec(bias.shape, lambda b: (0, 0)),
        ]
        operands += [kf, w5, bias]
        weight_bytes += (kf.size + w5.size + bias.size) * 4
    in_specs += [
        pl.BlockSpec(v4.shape, lambda b: (0, 0, 0)),
        pl.BlockSpec(b2.shape, lambda b: (0, 0)),
    ]
    operands += [v4, b2]
    weight_bytes += (v4.size + b2.size) * 4

    # Conservative VMEM sanity check (v7x: 64 MiB physical, 32 MiB scoped default).
    block_bytes = C0 * n * n * 4 + n * OUT * 4
    assert 2 * (weight_bytes + block_bytes) < 24 * 1024 * 1024, (
        "weights + activation blocks exceed the conservative VMEM budget; "
        "see TODO(synk) about the kron full-rank form at larger n")

    return pl.pallas_call(
        _make_encoder_kernel(num_layers),
        out_shape=jax.ShapeDtypeStruct((B, n, OUT), jnp.float32),
        grid=(B,),
        in_specs=in_specs,
        out_specs=pl.BlockSpec((1, n, OUT), lambda b: (b, 0, 0)),
        compiler_params=pltpu.CompilerParams(dimension_semantics=("parallel",)),
    )(*operands)


# ----------------------------------------------------------------------------
# One-time weight preparation (runs ONCE, outside the jitted forward)
# ----------------------------------------------------------------------------
def prepare_params(params, n):
    """Precompute block-kron / stacked weights so no prep HLO runs per forward."""
    eye_n = jnp.eye(n, dtype=jnp.float32)
    layers = []
    for (w, b) in params["layers"]:
        C = w.shape[0] // 7
        O = w.shape[1]
        wt = jnp.transpose(w.reshape(7, C, O), (0, 2, 1))   # (7, O, C)
        # feature order: m, m^T, rows, cols, diag_i, diag_j, total
        kfull = jnp.concatenate(
            [jnp.kron(wt[0], eye_n), jnp.kron(wt[1], eye_n)], axis=0
        ).astype(jnp.float32)                                # (2*O*n, C*n)
        w5 = wt[2:].astype(jnp.float32)                      # (5, O, C)
        bias = b.reshape(O, 1).astype(jnp.float32)           # (O, 1)
        layers.append((kfull, w5, bias))
    wf, bf = params["contractive"]
    C = wf.shape[0] // 4
    OUT = wf.shape[1]
    v4 = jnp.transpose(wf.reshape(4, C, OUT), (0, 2, 1)).astype(jnp.float32)  # (4, OUT, C)
    b2 = bf.reshape(OUT, 1).astype(jnp.float32)
    return {"layers": layers, "contractive": (v4, b2)}


# ----------------------------------------------------------------------------
# Pure-JAX reference (channel-last, f32) for correctness checking
# ----------------------------------------------------------------------------
def _ref_layer(x, w, b):
    m = jnp.einsum("bijc,bjkc->bikc", x, x, precision=lax.Precision.HIGHEST)
    eye = jnp.eye(m.shape[1], dtype=m.dtype)[None, :, :, None]
    mt = jnp.transpose(m, (0, 2, 1, 3))
    rows = jnp.broadcast_to(m.sum(2, keepdims=True), m.shape)
    cols = jnp.broadcast_to(m.sum(1, keepdims=True), m.shape)
    diag_i = jnp.broadcast_to((m * eye).sum(2, keepdims=True), m.shape)
    diag_j = jnp.broadcast_to((m * eye).sum(1, keepdims=True), m.shape)
    total = jnp.broadcast_to(m.sum((1, 2), keepdims=True), m.shape)
    f = jnp.concatenate([m, mt, rows, cols, diag_i, diag_j, total], axis=-1)
    y = jnp.einsum("bijf,fo->bijo", f, w, precision=lax.Precision.HIGHEST) + b
    return jax.nn.relu(y)


def reference(x, params):
    for (w, b) in params["layers"]:
        x = _ref_layer(x, w, b)
    wf, bf = params["contractive"]
    n = x.shape[1]
    eye = jnp.eye(n, dtype=x.dtype)[None, :, :, None]
    diag = (x * eye).sum(2)
    rows = x.sum(2)
    cols = x.sum(1)
    total = jnp.broadcast_to(x.sum((1, 2))[:, None, :], rows.shape)
    f = jnp.concatenate([diag, rows, cols, total], axis=-1)
    return jnp.einsum("bnf,fo->bno", f, wf, precision=lax.Precision.HIGHEST) + bf


# ----------------------------------------------------------------------------
# Deterministic parameter init (shapes implied by the module's __init__)
# ----------------------------------------------------------------------------
def init_params(key, in_channels, hidden_channel_list, out_channels):
    params = {"layers": []}
    c = in_channels
    for h in hidden_channel_list:
        key, k1, k2 = jax.random.split(key, 3)
        fan_in = 7 * c
        w = jax.random.normal(k1, (fan_in, h), jnp.float32) / jnp.sqrt(fan_in)
        b = 0.01 * jax.random.normal(k2, (1, h), jnp.float32)
        params["layers"].append((w, b))
        c = h
    key, k1, k2 = jax.random.split(key, 3)
    fan_in = 4 * c
    wf = jax.random.normal(k1, (fan_in, out_channels), jnp.float32) / jnp.sqrt(fan_in)
    bf = 0.01 * jax.random.normal(k2, (1, out_channels), jnp.float32)
    params["contractive"] = (wf, bf)
    return params


if __name__ == "__main__":
    B, n = 2, 16
    in_channels, hidden, out_channels = 4, [8, 8], 4

    key = jax.random.PRNGKey(0)
    key, kx = jax.random.split(key)
    x = 0.3 * jax.random.normal(kx, (B, n, n, in_channels), jnp.float32)
    params = init_params(key, in_channels, hidden, out_channels)

    # Weight prep runs exactly once, OUTSIDE the jitted forward.
    prepped = jax.tree_util.tree_map(jnp.asarray, prepare_params(params, n))

    fwd = jax.jit(sn_mult_encoder_fused)
    out = jax.block_until_ready(fwd(x, prepped))
    ref = jax.block_until_ready(reference(x, params))

    assert out.shape == (B, n, out_channels), out.shape
    rel_err = float(jnp.max(jnp.abs(out - ref)) / (jnp.max(jnp.abs(ref)) + 1e-6))
    assert rel_err < 2e-2, f"kernel vs reference mismatch: rel err {rel_err}"
    print("KERNEL_OK")
</pallas_src>

<mosaic_0001>
module attributes {stable_mosaic.version = 11 : i64} {
  func.func @kernel(%arg0: i32, %arg1: memref<1x4x16x16xf32, #tpu.memory_space<vmem>>, %arg2: memref<256x64xf32, #tpu.memory_space<vmem>>, %arg3: memref<5x8x4xf32, #tpu.memory_space<vmem>>, %arg4: memref<8x1xf32, #tpu.memory_space<vmem>>, %arg5: memref<256x128xf32, #tpu.memory_space<vmem>>, %arg6: memref<5x8x8xf32, #tpu.memory_space<vmem>>, %arg7: memref<8x1xf32, #tpu.memory_space<vmem>>, %arg8: memref<4x4x8xf32, #tpu.memory_space<vmem>>, %arg9: memref<4x1xf32, #tpu.memory_space<vmem>>, %arg10: memref<1x16x4xf32, #tpu.memory_space<vmem>>) attributes {dimension_semantics = [#tpu.dimension_semantics<parallel>], iteration_bounds = array<i64: 2>, scalar_prefetch = 0 : i64, scratch_operands = 0 : i64, tpu.core_type = #tpu.core_type<tc>, window_params = [{transform_indices = @transform_0, window_bounds = array<i64: 1, 4, 16, 16>}, {pipeline_mode = #tpu.pipeline_mode<synchronous>, transform_indices = @transform_1, window_bounds = array<i64: 256, 64>}, {pipeline_mode = #tpu.pipeline_mode<synchronous>, transform_indices = @transform_2, window_bounds = array<i64: 5, 8, 4>}, {pipeline_mode = #tpu.pipeline_mode<synchronous>, transform_indices = @transform_3, window_bounds = array<i64: 8, 1>}, {pipeline_mode = #tpu.pipeline_mode<synchronous>, transform_indices = @transform_4, window_bounds = array<i64: 256, 128>}, {pipeline_mode = #tpu.pipeline_mode<synchronous>, transform_indices = @transform_5, window_bounds = array<i64: 5, 8, 8>}, {pipeline_mode = #tpu.pipeline_mode<synchronous>, transform_indices = @transform_6, window_bounds = array<i64: 8, 1>}, {pipeline_mode = #tpu.pipeline_mode<synchronous>, transform_indices = @transform_7, window_bounds = array<i64: 4, 4, 8>}, {pipeline_mode = #tpu.pipeline_mode<synchronous>, transform_indices = @transform_8, window_bounds = array<i64: 4, 1>}, {transform_indices = @transform_9, window_bounds = array<i64: 1, 16, 4>}]} {
    %0 = tpu.iota {dimensions = array<i32: 0>} : vector<16x16xi32>
    %1 = tpu.iota {dimensions = array<i32: 1>} : vector<16x16xi32>
    %2 = arith.cmpi eq, %0, %1 : vector<16x16xi32>
    %3 = arith.extui %2 : vector<16x16xi1> to vector<16x16xi32>
    %4 = arith.sitofp %3 : vector<16x16xi32> to vector<16x16xf32>
    %c0 = arith.constant 0 : index
    %c0_0 = arith.constant 0 : index
    %c0_1 = arith.constant 0 : index
    %c0_2 = arith.constant 0 : index
    %5 = vector.load %arg1[%c0, %c0_0, %c0_1, %c0_2] : memref<1x4x16x16xf32, #tpu.memory_space<vmem>>, vector<1x4x16x16xf32>
    %6 = vector.shape_cast %5 : vector<1x4x16x16xf32> to vector<4x16x16xf32>
    %c0_3 = arith.constant 0 : index
    %c0_4 = arith.constant 0 : index
    %7 = vector.load %arg2[%c0_3, %c0_4] : memref<256x64xf32, #tpu.memory_space<vmem>>, vector<256x64xf32>
    %c0_5 = arith.constant 0 : index
    %c0_6 = arith.constant 0 : index
    %c0_7 = arith.constant 0 : index
    %8 = vector.load %arg3[%c0_5, %c0_6, %c0_7] : memref<5x8x4xf32, #tpu.memory_space<vmem>>, vector<5x8x4xf32>
    %c0_8 = arith.constant 0 : index
    %c0_9 = arith.constant 0 : index
    %9 = vector.load %arg4[%c0_8, %c0_9] : memref<8x1xf32, #tpu.memory_space<vmem>>, vector<8x1xf32>
    "tpu.trace_start"() <{level = 10 : i32, message = "cij,cjk->cik"}> : () -> ()
    %cst = arith.constant dense<0.000000e+00> : vector<4x16x16xf32>
    %10 = tpu.matmul %6, %6, %cst {dimension_numbers = #tpu.dot_dimension_numbers<[2], [1], [1], [2], [0, 0, 0, 1, 1, 2], [0], [0]>} : vector<4x16x16xf32>, vector<4x16x16xf32>, vector<4x16x16xf32> -> vector<4x16x16xf32>
    "tpu.trace_stop"() : () -> ()
    %11 = vector.shape_cast %10 : vector<4x16x16xf32> to vector<64x16xf32>
    %cst_10 = arith.constant dense<0.000000e+00> : vector<256x16xf32>
    %12 = tpu.matmul %7, %11, %cst_10 {dimension_numbers = #tpu.dot_dimension_numbers<[1], [0], [0], [1], [0, 0, 1, 1], [], []>} : vector<256x64xf32>, vector<64x16xf32>, vector<256x16xf32> -> vector<256x16xf32>
    %13 = vector.extract_strided_slice %12 {offsets = [0, 0], sizes = [128, 16], strides = [1, 1]} : vector<256x16xf32> to vector<128x16xf32>
    %14 = vector.shape_cast %13 : vector<128x16xf32> to vector<8x16x16xf32>
    %15 = vector.extract_strided_slice %12 {offsets = [128, 0], sizes = [128, 16], strides = [1, 1]} : vector<256x16xf32> to vector<128x16xf32>
    %16 = vector.shape_cast %15 : vector<128x16xf32> to vector<8x16x16xf32>
    %17 = tpu.transpose %16, [0, 2, 1] : vector<8x16x16xf32> -> vector<8x16x16xf32>
    %18 = arith.addf %14, %17 : vector<8x16x16xf32>
    %cst_11 = arith.constant dense<0.000000e+00> : vector<4x16xf32>
    %19 = vector.multi_reduction <add>, %10, %cst_11 [2] : vector<4x16x16xf32> to vector<4x16xf32>
    %cst_12 = arith.constant dense<0.000000e+00> : vector<4x16xf32>
    %20 = vector.multi_reduction <add>, %10, %cst_12 [1] : vector<4x16x16xf32> to vector<4x16xf32>
    %21 = vector.shape_cast %4 : vector<16x16xf32> to vector<1x16x16xf32>
    %22 = vector.broadcast %21 : vector<1x16x16xf32> to vector<4x16x16xf32>
    %23 = arith.mulf %10, %22 : vector<4x16x16xf32>
    %cst_13 = arith.constant dense<0.000000e+00> : vector<4x16xf32>
    %24 = vector.multi_reduction <add>, %23, %cst_13 [2] : vector<4x16x16xf32> to vector<4x16xf32>
    %cst_14 = arith.constant dense<0.000000e+00> : vector<4xf32>
    %25 = vector.multi_reduction <add>, %19, %cst_14 [1] : vector<4x16xf32> to vector<4xf32>
    %26 = vector.shape_cast %25 : vector<4xf32> to vector<4x1xf32>
    %27 = vector.extract_strided_slice %8 {offsets = [0, 0, 0], sizes = [1, 8, 4], strides = [1, 1, 1]} : vector<5x8x4xf32> to vector<1x8x4xf32>
    %28 = vector.shape_cast %27 : vector<1x8x4xf32> to vector<8x4xf32>
    %cst_15 = arith.constant dense<0.000000e+00> : vector<8x16xf32>
    %29 = tpu.matmul %28, %19, %cst_15 {dimension_numbers = #tpu.dot_dimension_numbers<[1], [0], [0], [1], [0, 0, 1, 1], [], []>} : vector<8x4xf32>, vector<4x16xf32>, vector<8x16xf32> -> vector<8x16xf32>
    %30 = vector.extract_strided_slice %8 {offsets = [2, 0, 0], sizes = [1, 8, 4], strides = [1, 1, 1]} : vector<5x8x4xf32> to vector<1x8x4xf32>
    %31 = vector.shape_cast %30 : vector<1x8x4xf32> to vector<8x4xf32>
    %cst_16 = arith.constant dense<0.000000e+00> : vector<8x16xf32>
    %32 = tpu.matmul %31, %24, %cst_16 {dimension_numbers = #tpu.dot_dimension_numbers<[1], [0], [0], [1], [0, 0, 1, 1], [], []>} : vector<8x4xf32>, vector<4x16xf32>, vector<8x16xf32> -> vector<8x16xf32>
    %33 = arith.addf %29, %32 : vector<8x16xf32>
    %34 = vector.extract_strided_slice %8 {offsets = [4, 0, 0], sizes = [1, 8, 4], strides = [1, 1, 1]} : vector<5x8x4xf32> to vector<1x8x4xf32>
    %35 = vector.shape_cast %34 : vector<1x8x4xf32> to vector<8x4xf32>
    %cst_17 = arith.constant dense<0.000000e+00> : vector<8x1xf32>
    %36 = tpu.matmul %35, %26, %cst_17 {dimension_numbers = #tpu.dot_dimension_numbers<[1], [0], [0], [1], [0, 0, 1, 1], [], []>} : vector<8x4xf32>, vector<4x1xf32>, vector<8x1xf32> -> vector<8x1xf32>
    %37 = vector.broadcast %36 : vector<8x1xf32> to vector<8x16xf32>
    %38 = arith.addf %33, %37 : vector<8x16xf32>
    %39 = vector.broadcast %9 : vector<8x1xf32> to vector<8x16xf32>
    %40 = arith.addf %38, %39 : vector<8x16xf32>
    %41 = vector.extract_strided_slice %8 {offsets = [1, 0, 0], sizes = [1, 8, 4], strides = [1, 1, 1]} : vector<5x8x4xf32> to vector<1x8x4xf32>
    %42 = vector.shape_cast %41 : vector<1x8x4xf32> to vector<8x4xf32>
    %cst_18 = arith.constant dense<0.000000e+00> : vector<8x16xf32>
    %43 = tpu.matmul %42, %20, %cst_18 {dimension_numbers = #tpu.dot_dimension_numbers<[1], [0], [0], [1], [0, 0, 1, 1], [], []>} : vector<8x4xf32>, vector<4x16xf32>, vector<8x16xf32> -> vector<8x16xf32>
    %44 = vector.extract_strided_slice %8 {offsets = [3, 0, 0], sizes = [1, 8, 4], strides = [1, 1, 1]} : vector<5x8x4xf32> to vector<1x8x4xf32>
    %45 = vector.shape_cast %44 : vector<1x8x4xf32> to vector<8x4xf32>
    %cst_19 = arith.constant dense<0.000000e+00> : vector<8x16xf32>
    %46 = tpu.matmul %45, %24, %cst_19 {dimension_numbers = #tpu.dot_dimension_numbers<[1], [0], [0], [1], [0, 0, 1, 1], [], []>} : vector<8x4xf32>, vector<4x16xf32>, vector<8x16xf32> -> vector<8x16xf32>
    %47 = arith.addf %43, %46 : vector<8x16xf32>
    %48 = vector.shape_cast %40 : vector<8x16xf32> to vector<8x16x1xf32>
    %49 = vector.broadcast %48 : vector<8x16x1xf32> to vector<8x16x16xf32>
    %50 = arith.addf %18, %49 : vector<8x16x16xf32>
    %51 = vector.shape_cast %47 : vector<8x16xf32> to vector<8x1x16xf32>
    %52 = vector.broadcast %51 : vector<8x1x16xf32> to vector<8x16x16xf32>
    %53 = arith.addf %50, %52 : vector<8x16x16xf32>
    %cst_20 = arith.constant 0.000000e+00 : f32
    %54 = vector.broadcast %cst_20 : f32 to vector<8x16x16xf32>
    %55 = arith.maximumf %53, %54 : vector<8x16x16xf32>
    %c0_21 = arith.constant 0 : index
    %c0_22 = arith.constant 0 : index
    %56 = vector.load %arg5[%c0_21, %c0_22] : memref<256x128xf32, #tpu.memory_space<vmem>>, vector<256x128xf32>
    %c0_23 = arith.constant 0 : index
    %c0_24 = arith.constant 0 : index
    %c0_25 = arith.constant 0 : index
    %57 = vector.load %arg6[%c0_23, %c0_24, %c0_25] : memref<5x8x8xf32, #tpu.memory_space<vmem>>, vector<5x8x8xf32>
    %c0_26 = arith.constant 0 : index
    %c0_27 = arith.constant 0 : index
    %58 = vector.load %arg7[%c0_26, %c0_27] : memref<8x1xf32, #tpu.memory_space<vmem>>, vector<8x1xf32>
    "tpu.trace_start"() <{level = 10 : i32, message = "cij,cjk->cik"}> : () -> ()
    %cst_28 = arith.constant dense<0.000000e+00> : vector<8x16x16xf32>
    %59 = tpu.matmul %55, %55, %cst_28 {dimension_numbers = #tpu.dot_dimension_numbers<[2], [1], [1], [2], [0, 0, 0, 1, 1, 2], [0], [0]>} : vector<8x16x16xf32>, vector<8x16x16xf32>, vector<8x16x16xf32> -> vector<8x16x16xf32>
    "tpu.trace_stop"() : () -> ()
    %60 = vector.shape_cast %59 : vector<8x16x16xf32> to vector<128x16xf32>
    %cst_29 = arith.constant dense<0.000000e+00> : vector<256x16xf32>
    %61 = tpu.matmul %56, %60, %cst_29 {dimension_numbers = #tpu.dot_dimension_numbers<[1], [0], [0], [1], [0, 0, 1, 1], [], []>} : vector<256x128xf32>, vector<128x16xf32>, vector<256x16xf32> -> vector<256x16xf32>
    %62 = vector.extract_strided_slice %61 {offsets = [0, 0], sizes = [128, 16], strides = [1, 1]} : vector<256x16xf32> to vector<128x16xf32>
    %63 = vector.shape_cast %62 : vector<128x16xf32> to vector<8x16x16xf32>
    %64 = vector.extract_strided_slice %61 {offsets = [128, 0], sizes = [128, 16], strides = [1, 1]} : vector<256x16xf32> to vector<128x16xf32>
    %65 = vector.shape_cast %64 : vector<128x16xf32> to vector<8x16x16xf32>
    %66 = tpu.transpose %65, [0, 2, 1] : vector<8x16x16xf32> -> vector<8x16x16xf32>
    %67 = arith.addf %63, %66 : vector<8x16x16xf32>
    %cst_30 = arith.constant dense<0.000000e+00> : vector<8x16xf32>
    %68 = vector.multi_reduction <add>, %59, %cst_30 [2] : vector<8x16x16xf32> to vector<8x16xf32>
    %cst_31 = arith.constant dense<0.000000e+00> : vector<8x16xf32>
    %69 = vector.multi_reduction <add>, %59, %cst_31 [1] : vector<8x16x16xf32> to vector<8x16xf32>
    %70 = vector.shape_cast %4 : vector<16x16xf32> to vector<1x16x16xf32>
    %71 = vector.broadcast %70 : vector<1x16x16xf32> to vector<8x16x16xf32>
    %72 = arith.mulf %59, %71 : vector<8x16x16xf32>
    %cst_32 = arith.constant dense<0.000000e+00> : vector<8x16xf32>
    %73 = vector.multi_reduction <add>, %72, %cst_32 [2] : vector<8x16x16xf32> to vector<8x16xf32>
    %cst_33 = arith.constant dense<0.000000e+00> : vector<8xf32>
    %74 = vector.multi_reduction <add>, %68, %cst_33 [1] : vector<8x16xf32> to vector<8xf32>
    %75 = vector.shape_cast %74 : vector<8xf32> to vector<8x1xf32>
    %76 = vector.extract_strided_slice %57 {offsets = [0, 0, 0], sizes = [1, 8, 8], strides = [1, 1, 1]} : vector<5x8x8xf32> to vector<1x8x8xf32>
    %77 = vector.shape_cast %76 : vector<1x8x8xf32> to vector<8x8xf32>
    %cst_34 = arith.constant dense<0.000000e+00> : vector<8x16xf32>
    %78 = tpu.matmul %77, %68, %cst_34 {dimension_numbers = #tpu.dot_dimension_numbers<[1], [0], [0], [1], [0, 0, 1, 1], [], []>} : vector<8x8xf32>, vector<8x16xf32>, vector<8x16xf32> -> vector<8x16xf32>
    %79 = vector.extract_strided_slice %57 {offsets = [2, 0, 0], sizes = [1, 8, 8], strides = [1, 1, 1]} : vector<5x8x8xf32> to vector<1x8x8xf32>
    %80 = vector.shape_cast %79 : vector<1x8x8xf32> to vector<8x8xf32>
    %cst_35 = arith.constant dense<0.000000e+00> : vector<8x16xf32>
    %81 = tpu.matmul %80, %73, %cst_35 {dimension_numbers = #tpu.dot_dimension_numbers<[1], [0], [0], [1], [0, 0, 1, 1], [], []>} : vector<8x8xf32>, vector<8x16xf32>, vector<8x16xf32> -> vector<8x16xf32>
    %82 = arith.addf %78, %81 : vector<8x16xf32>
    %83 = vector.extract_strided_slice %57 {offsets = [4, 0, 0], sizes = [1, 8, 8], strides = [1, 1, 1]} : vector<5x8x8xf32> to vector<1x8x8xf32>
    %84 = vector.shape_cast %83 : vector<1x8x8xf32> to vector<8x8xf32>
    %cst_36 = arith.constant dense<0.000000e+00> : vector<8x1xf32>
    %85 = tpu.matmul %84, %75, %cst_36 {dimension_numbers = #tpu.dot_dimension_numbers<[1], [0], [0], [1], [0, 0, 1, 1], [], []>} : vector<8x8xf32>, vector<8x1xf32>, vector<8x1xf32> -> vector<8x1xf32>
    %86 = vector.broadcast %85 : vector<8x1xf32> to vector<8x16xf32>
    %87 = arith.addf %82, %86 : vector<8x16xf32>
    %88 = vector.broadcast %58 : vector<8x1xf32> to vector<8x16xf32>
    %89 = arith.addf %87, %88 : vector<8x16xf32>
    %90 = vector.extract_strided_slice %57 {offsets = [1, 0, 0], sizes = [1, 8, 8], strides = [1, 1, 1]} : vector<5x8x8xf32> to vector<1x8x8xf32>
    %91 = vector.shape_cast %90 : vector<1x8x8xf32> to vector<8x8xf32>
    %cst_37 = arith.constant dense<0.000000e+00> : vector<8x16xf32>
    %92 = tpu.matmul %91, %69, %cst_37 {dimension_numbers = #tpu.dot_dimension_numbers<[1], [0], [0], [1], [0, 0, 1, 1], [], []>} : vector<8x8xf32>, vector<8x16xf32>, vector<8x16xf32> -> vector<8x16xf32>
    %93 = vector.extract_strided_slice %57 {offsets = [3, 0, 0], sizes = [1, 8, 8], strides = [1, 1, 1]} : vector<5x8x8xf32> to vector<1x8x8xf32>
    %94 = vector.shape_cast %93 : vector<1x8x8xf32> to vector<8x8xf32>
    %cst_38 = arith.constant dense<0.000000e+00> : vector<8x16xf32>
    %95 = tpu.matmul %94, %73, %cst_38 {dimension_numbers = #tpu.dot_dimension_numbers<[1], [0], [0], [1], [0, 0, 1, 1], [], []>} : vector<8x8xf32>, vector<8x16xf32>, vector<8x16xf32> -> vector<8x16xf32>
    %96 = arith.addf %92, %95 : vector<8x16xf32>
    %97 = vector.shape_cast %89 : vector<8x16xf32> to vector<8x16x1xf32>
    %98 = vector.broadcast %97 : vector<8x16x1xf32> to vector<8x16x16xf32>
    %99 = arith.addf %67, %98 : vector<8x16x16xf32>
    %100 = vector.shape_cast %96 : vector<8x16xf32> to vector<8x1x16xf32>
    %101 = vector.broadcast %100 : vector<8x1x16xf32> to vector<8x16x16xf32>
    %102 = arith.addf %99, %101 : vector<8x16x16xf32>
    %cst_39 = arith.constant 0.000000e+00 : f32
    %103 = vector.broadcast %cst_39 : f32 to vector<8x16x16xf32>
    %104 = arith.maximumf %102, %103 : vector<8x16x16xf32>
    %c0_40 = arith.constant 0 : index
    %c0_41 = arith.constant 0 : index
    %c0_42 = arith.constant 0 : index
    %105 = vector.load %arg8[%c0_40, %c0_41, %c0_42] : memref<4x4x8xf32, #tpu.memory_space<vmem>>, vector<4x4x8xf32>
    %c0_43 = arith.constant 0 : index
    %c0_44 = arith.constant 0 : index
    %106 = vector.load %arg9[%c0_43, %c0_44] : memref<4x1xf32, #tpu.memory_space<vmem>>, vector<4x1xf32>
    %107 = vector.shape_cast %4 : vector<16x16xf32> to vector<1x16x16xf32>
    %108 = vector.broadcast %107 : vector<1x16x16xf32> to vector<8x16x16xf32>
    %109 = arith.mulf %104, %108 : vector<8x16x16xf32>
    %cst_45 = arith.constant dense<0.000000e+00> : vector<8x16xf32>
    %110 = vector.multi_reduction <add>, %109, %cst_45 [2] : vector<8x16x16xf32> to vector<8x16xf32>
    %cst_46 = arith.constant dense<0.000000e+00> : vector<8x16xf32>
    %111 = vector.multi_reduction <add>, %104, %cst_46 [2] : vector<8x16x16xf32> to vector<8x16xf32>
    %cst_47 = arith.constant dense<0.000000e+00> : vector<8x16xf32>
    %112 = vector.multi_reduction <add>, %104, %cst_47 [1] : vector<8x16x16xf32> to vector<8x16xf32>
    %cst_48 = arith.constant dense<0.000000e+00> : vector<8xf32>
    %113 = vector.multi_reduction <add>, %111, %cst_48 [1] : vector<8x16xf32> to vector<8xf32>
    %114 = vector.shape_cast %113 : vector<8xf32> to vector<8x1xf32>
    %115 = vector.extract_strided_slice %105 {offsets = [0, 0, 0], sizes = [1, 4, 8], strides = [1, 1, 1]} : vector<4x4x8xf32> to vector<1x4x8xf32>
    %116 = vector.shape_cast %115 : vector<1x4x8xf32> to vector<4x8xf32>
    %cst_49 = arith.constant dense<0.000000e+00> : vector<4x16xf32>
    %117 = tpu.matmul %116, %110, %cst_49 {dimension_numbers = #tpu.dot_dimension_numbers<[1], [0], [0], [1], [0, 0, 1, 1], [], []>} : vector<4x8xf32>, vector<8x16xf32>, vector<4x16xf32> -> vector<4x16xf32>
    %118 = vector.extract_strided_slice %105 {offsets = [1, 0, 0], sizes = [1, 4, 8], strides = [1, 1, 1]} : vector<4x4x8xf32> to vector<1x4x8xf32>
    %119 = vector.shape_cast %118 : vector<1x4x8xf32> to vector<4x8xf32>
    %cst_50 = arith.constant dense<0.000000e+00> : vector<4x16xf32>
    %120 = tpu.matmul %119, %111, %cst_50 {dimension_numbers = #tpu.dot_dimension_numbers<[1], [0], [0], [1], [0, 0, 1, 1], [], []>} : vector<4x8xf32>, vector<8x16xf32>, vector<4x16xf32> -> vector<4x16xf32>
    %121 = arith.addf %117, %120 : vector<4x16xf32>
    %122 = vector.extract_strided_slice %105 {offsets = [2, 0, 0], sizes = [1, 4, 8], strides = [1, 1, 1]} : vector<4x4x8xf32> to vector<1x4x8xf32>
    %123 = vector.shape_cast %122 : vector<1x4x8xf32> to vector<4x8xf32>
    %cst_51 = arith.constant dense<0.000000e+00> : vector<4x16xf32>
    %124 = tpu.matmul %123, %112, %cst_51 {dimension_numbers = #tpu.dot_dimension_numbers<[1], [0], [0], [1], [0, 0, 1, 1], [], []>} : vector<4x8xf32>, vector<8x16xf32>, vector<4x16xf32> -> vector<4x16xf32>
    %125 = arith.addf %121, %124 : vector<4x16xf32>
    %126 = vector.extract_strided_slice %105 {offsets = [3, 0, 0], sizes = [1, 4, 8], strides = [1, 1, 1]} : vector<4x4x8xf32> to vector<1x4x8xf32>
    %127 = vector.shape_cast %126 : vector<1x4x8xf32> to vector<4x8xf32>
    %cst_52 = arith.constant dense<0.000000e+00> : vector<4x1xf32>
    %128 = tpu.matmul %127, %114, %cst_52 {dimension_numbers = #tpu.dot_dimension_numbers<[1], [0], [0], [1], [0, 0, 1, 1], [], []>} : vector<4x8xf32>, vector<8x1xf32>, vector<4x1xf32> -> vector<4x1xf32>
    %129 = vector.broadcast %128 : vector<4x1xf32> to vector<4x16xf32>
    %130 = arith.addf %125, %129 : vector<4x16xf32>
    %131 = vector.broadcast %106 : vector<4x1xf32> to vector<4x16xf32>
    %132 = arith.addf %130, %131 : vector<4x16xf32>
    %133 = tpu.transpose %132, [1, 0] : vector<4x16xf32> -> vector<16x4xf32>
    %c0_53 = arith.constant 0 : index
    %c0_54 = arith.constant 0 : index
    %c0_55 = arith.constant 0 : index
    %134 = vector.load %arg10[%c0_53, %c0_54, %c0_55] : memref<1x16x4xf32, #tpu.memory_space<vmem>>, vector<1x16x4xf32>
    %135 = vector.shape_cast %134 : vector<1x16x4xf32> to vector<16x4xf32>
    %136 = vector.shape_cast %133 : vector<16x4xf32> to vector<1x16x4xf32>
    tpu.vector_store %arg10[%c0_53, %c0_54, %c0_55], %136 {strides = array<i32>} : memref<1x16x4xf32, #tpu.memory_space<vmem>>, vector<1x16x4xf32>,
    return
  }
  func.func @transform_0(%arg0: i32) -> (i32, i32, i32, i32) {
    %c0_i32 = arith.constant 0 : i32
    %c0_i32_0 = arith.constant 0 : i32
    %c0_i32_1 = arith.constant 0 : i32
    %c0_i32_2 = arith.constant 0 : i32
    return %arg0, %c0_i32, %c0_i32_0, %c0_i32_1 : i32, i32, i32, i32
  }
  func.func @transform_1(%arg0: i32) -> (i32, i32) {
    %c0_i32 = arith.constant 0 : i32
    %c0_i32_0 = arith.constant 0 : i32
    %c0_i32_1 = arith.constant 0 : i32
    return %c0_i32, %c0_i32_0 : i32, i32
  }
  func.func @transform_2(%arg0: i32) -> (i32, i32, i32) {
    %c0_i32 = arith.constant 0 : i32
    %c0_i32_0 = arith.constant 0 : i32
    %c0_i32_1 = arith.constant 0 : i32
    %c0_i32_2 = arith.constant 0 : i32
    return %c0_i32, %c0_i32_0, %c0_i32_1 : i32, i32, i32
  }
  func.func @transform_3(%arg0: i32) -> (i32, i32) {
    %c0_i32 = arith.constant 0 : i32
    %c0_i32_0 = arith.constant 0 : i32
    %c0_i32_1 = arith.constant 0 : i32
    return %c0_i32, %c0_i32_0 : i32, i32
  }
  func.func @transform_4(%arg0: i32) -> (i32, i32) {
    %c0_i32 = arith.constant 0 : i32
    %c0_i32_0 = arith.constant 0 : i32
    %c0_i32_1 = arith.constant 0 : i32
    return %c0_i32, %c0_i32_0 : i32, i32
  }
  func.func @transform_5(%arg0: i32) -> (i32, i32, i32) {
    %c0_i32 = arith.constant 0 : i32
    %c0_i32_0 = arith.constant 0 : i32
    %c0_i32_1 = arith.constant 0 : i32
    %c0_i32_2 = arith.constant 0 : i32
    return %c0_i32, %c0_i32_0, %c0_i32_1 : i32, i32, i32
  }
  func.func @transform_6(%arg0: i32) -> (i32, i32) {
    %c0_i32 = arith.constant 0 : i32
    %c0_i32_0 = arith.constant 0 : i32
    %c0_i32_1 = arith.constant 0 : i32
    return %c0_i32, %c0_i32_0 : i32, i32
  }
  func.func @transform_7(%arg0: i32) -> (i32, i32, i32) {
    %c0_i32 = arith.constant 0 : i32
    %c0_i32_0 = arith.constant 0 : i32
    %c0_i32_1 = arith.constant 0 : i32
    %c0_i32_2 = arith.constant 0 : i32
    return %c0_i32, %c0_i32_0, %c0_i32_1 : i32, i32, i32
  }
  func.func @transform_8(%arg0: i32) -> (i32, i32) {
    %c0_i32 = arith.constant 0 : i32
    %c0_i32_0 = arith.constant 0 : i32
    %c0_i32_1 = arith.constant 0 : i32
    return %c0_i32, %c0_i32_0 : i32, i32
  }
  func.func @transform_9(%arg0: i32) -> (i32, i32, i32) {
    %c0_i32 = arith.constant 0 : i32
    %c0_i32_0 = arith.constant 0 : i32
    %c0_i32_1 = arith.constant 0 : i32
    return %arg0, %c0_i32, %c0_i32_0 : i32, i32, i32
  }
}

</mosaic_0001>

<llo_original>
// kernel: sn_mult_encoder_fused.1
$region0: #{sn_mult_encoder_fused.1}
  #allocation0 [shape = 'u32[]', space=smem, size = 0x4, offset = 0x4, fixed_abs, tag = 'smem constant byte address 0x4 - core index']
  #allocation1 [shape = 'u32[144,128]{1,0:T(1,128)}', space=vmem, size = 0x12000, scoped, tag = 'internal scratch']
  %s0 = inlined_call_operand.vmem [shape: f32[2,4,16,16], index: 0, kind: input, shape index: {}]
  %s1 = inlined_call_operand.vmem [shape: f32[256,64], index: 1, kind: input, shape index: {}]
  %s2 = inlined_call_operand.vmem [shape: f32[5,8,4], index: 2, kind: input, shape index: {}]
  %s3 = inlined_call_operand.vmem [shape: f32[8,1], index: 3, kind: input, shape index: {}]
  %s4 = inlined_call_operand.vmem [shape: f32[256,128], index: 4, kind: input, shape index: {}]
  %s5 = inlined_call_operand.vmem [shape: f32[5,8,8], index: 5, kind: input, shape index: {}]
  %s6 = inlined_call_operand.vmem [shape: f32[8,1], index: 6, kind: input, shape index: {}]
  %s7 = inlined_call_operand.vmem [shape: f32[4,4,8], index: 7, kind: input, shape index: {}]
  %s8 = inlined_call_operand.vmem [shape: f32[4,1], index: 8, kind: input, shape index: {}]
  %s9 = inlined_call_operand.vmem [shape: f32[2,16,4], index: 9, kind: output, shape index: {}]
  %s10 = sld [smem:[#allocation0]]
  $region69: #{sn_mult_encoder_fused.1} parent=0
    _
  %s12 = ssub.s32 1, %s10
  %s13 = scalar_select 0, %s12, %s10
  loop: start=0, step=1, limit=4
  $region2: #{sn_mult_encoder_fused.1} parent=0 // loop_pre_header
    _
  $region3: #{sn_mult_encoder_fused.1} parent=0 // loop_header
    %s15 = sphi 0, %s19
    %p16 = scmp.ge.s32.totalorder %s15, 4
    %s25 = sphi 0, %s27
    %s28 = sphi 0, %s25
    %s29 = sphi 0, %s28
    %s45 = sphi 0, %s29
    %s49 = sphi 0, %s49
    %s51 = sphi 0, %s49
    %s52 = sphi 0, %s51
    %s66 = sphi 0, %s52
    %s70 = sphi 0, %s70
    %s72 = sphi 0, %s70
    %s73 = sphi 0, %s72
    %s87 = sphi 0, %s73
    %s91 = sphi 0, %s91
    %s93 = sphi 0, %s91
    %s94 = sphi 0, %s93
    %s108 = sphi 0, %s94
    %s112 = sphi 0, %s112
    %s114 = sphi 0, %s112
    %s115 = sphi 0, %s114
    %s129 = sphi 0, %s115
    %s133 = sphi 0, %s133
    %s135 = sphi 0, %s133
    %s136 = sphi 0, %s135
    %s150 = sphi 0, %s136
    %s154 = sphi 0, %s154
    %s156 = sphi 0, %s154
    %s157 = sphi 0, %s156
    %s171 = sphi 0, %s157
    %s175 = sphi 0, %s175
    %s177 = sphi 0, %s175
    %s178 = sphi 0, %s177
    %s192 = sphi 0, %s178
    %s196 = sphi 0, %s196
    %s198 = sphi 0, %s196
    %s199 = sphi 0, %s198
    %s213 = sphi 0, %s199
    %s219 = sphi 0, %s221
    %s222 = sphi 0, %s219
    %s223 = sphi 0, %s222
    %s239 = sphi 0, %s223
  $region4: #{sn_mult_encoder_fused.1} parent=0 // loop_header_branch
    %18 = sbr.rel (%p16) target = $region8
  $region5: #{sn_mult_encoder_fused.1} parent=0 // loop_body
    %s20 = ssub.s32 %s15, 1
    %s21 = ssub.s32 %s15, 2
    %s22 = sadd.s32 %s15, 1
    %s23 = ssub.s32 %s15, %s22
    %p24 = scmp.eq.s32.totalorder %s23, 0
    %s26 = sadd.s32 %s25, 1
    %s27 = scalar_select %p24, %s25, %s26
    %p30 = pneg %p24
    %p31 = scmp.eq.s32.totalorder %s15, 1
    %p32 = por %p30, %p31
    %p33 = scmp.ne.s32.totalorder %s25, %s28
    %p34 = scmp.eq.s32.totalorder %s15, 0
    %p35 = por %p33, %p34
    %p36 = scmp.ne.s32.totalorder %s25, %s28
    %p37 = scmp.eq.s32.totalorder %s20, 1
    %p38 = por %p36, %p37
    %p39 = scmp.ne.s32.totalorder %s28, %s29
    %p40 = scmp.eq.s32.totalorder %s20, 0
    %p41 = por %p39, %p40
    %p42 = scmp.ne.s32.totalorder %s28, %s29
    %p43 = scmp.eq.s32.totalorder %s21, 1
    %p44 = por %p42, %p43
    %p46 = scmp.ne.s32.totalorder %s29, %s45
    %p47 = scmp.eq.s32.totalorder %s21, 0
    %p48 = por %p46, %p47
    %s50 = sadd.s32 %s49, 1
    %p53 = scmp.eq.s32.totalorder %s15, 1
    %p54 = scmp.ne.s32.totalorder %s49, %s51
    %p55 = scmp.eq.s32.totalorder %s15, 0
    %p56 = por %p54, %p55
    %p57 = scmp.ne.s32.totalorder %s49, %s51
    %p58 = scmp.eq.s32.totalorder %s20, 1
    %p59 = por %p57, %p58
    %p60 = scmp.ne.s32.totalorder %s51, %s52
    %p61 = scmp.eq.s32.totalorder %s20, 0
    %p62 = por %p60, %p61
    %p63 = scmp.ne.s32.totalorder %s51, %s52
    %p64 = scmp.eq.s32.totalorder %s21, 1
    %p65 = por %p63, %p64
    %p67 = scmp.ne.s32.totalorder %s52, %s66
    %p68 = scmp.eq.s32.totalorder %s21, 0
    %p69 = por %p67, %p68
    %s71 = sadd.s32 %s70, 1
    %p74 = scmp.eq.s32.totalorder %s15, 1
    %p75 = scmp.ne.s32.totalorder %s70, %s72
    %p76 = scmp.eq.s32.totalorder %s15, 0
    %p77 = por %p75, %p76
    %p78 = scmp.ne.s32.totalorder %s70, %s72
    %p79 = scmp.eq.s32.totalorder %s20, 1
    %p80 = por %p78, %p79
    %p81 = scmp.ne.s32.totalorder %s72, %s73
    %p82 = scmp.eq.s32.totalorder %s20, 0
    %p83 = por %p81, %p82
    %p84 = scmp.ne.s32.totalorder %s72, %s73
    %p85 = scmp.eq.s32.totalorder %s21, 1
    %p86 = por %p84, %p85
    %p88 = scmp.ne.s32.totalorder %s73, %s87
    %p89 = scmp.eq.s32.totalorder %s21, 0
    %p90 = por %p88, %p89
    %s92 = sadd.s32 %s91, 1
    %p95 = scmp.eq.s32.totalorder %s15, 1
    %p96 = scmp.ne.s32.totalorder %s91, %s93
    %p97 = scmp.eq.s32.totalorder %s15, 0
    %p98 = por %p96, %p97
    %p99 = scmp.ne.s32.totalorder %s91, %s93
    %p100 = scmp.eq.s32.totalorder %s20, 1
    %p101 = por %p99, %p100
    %p102 = scmp.ne.s32.totalorder %s93, %s94
    %p103 = scmp.eq.s32.totalorder %s20, 0
    %p104 = por %p102, %p103
    %p105 = scmp.ne.s32.totalorder %s93, %s94
    %p106 = scmp.eq.s32.totalorder %s21, 1
    %p107 = por %p105, %p106
    %p109 = scmp.ne.s32.totalorder %s94, %s108
    %p110 = scmp.eq.s32.totalorder %s21, 0
    %p111 = por %p109, %p110
    %s113 = sadd.s32 %s112, 1
    %p116 = scmp.eq.s32.totalorder %s15, 1
    %p117 = scmp.ne.s32.totalorder %s112, %s114
    %p118 = scmp.eq.s32.totalorder %s15, 0
    %p119 = por %p117, %p118
    %p120 = scmp.ne.s32.totalorder %s112, %s114
    %p121 = scmp.eq.s32.totalorder %s20, 1
    %p122 = por %p120, %p121
    %p123 = scmp.ne.s32.totalorder %s114, %s115
    %p124 = scmp.eq.s32.totalorder %s20, 0
    %p125 = por %p123, %p124
    %p126 = scmp.ne.s32.totalorder %s114, %s115
    %p127 = scmp.eq.s32.totalorder %s21, 1
    %p128 = por %p126, %p127
    %p130 = scmp.ne.s32.totalorder %s115, %s129
    %p131 = scmp.eq.s32.totalorder %s21, 0
    %p132 = por %p130, %p131
    %s134 = sadd.s32 %s133, 1
    %p137 = scmp.eq.s32.totalorder %s15, 1
    %p138 = scmp.ne.s32.totalorder %s133, %s135
    %p139 = scmp.eq.s32.totalorder %s15, 0
    %p140 = por %p138, %p139
    %p141 = scmp.ne.s32.totalorder %s133, %s135
    %p142 = scmp.eq.s32.totalorder %s20, 1
    %p143 = por %p141, %p142
    %p144 = scmp.ne.s32.totalorder %s135, %s136
    %p145 = scmp.eq.s32.totalorder %s20, 0
    %p146 = por %p144, %p145
    %p147 = scmp.ne.s32.totalorder %s135, %s136
    %p148 = scmp.eq.s32.totalorder %s21, 1
    %p149 = por %p147, %p148
    %p151 = scmp.ne.s32.totalorder %s136, %s150
    %p152 = scmp.eq.s32.totalorder %s21, 0
    %p153 = por %p151, %p152
    %s155 = sadd.s32 %s154, 1
    %p158 = scmp.eq.s32.totalorder %s15, 1
    %p159 = scmp.ne.s32.totalorder %s154, %s156
    %p160 = scmp.eq.s32.totalorder %s15, 0
    %p161 = por %p159, %p160
    %p162 = scmp.ne.s32.totalorder %s154, %s156
    %p163 = scmp.eq.s32.totalorder %s20, 1
    %p164 = por %p162, %p163
    %p165 = scmp.ne.s32.totalorder %s156, %s157
    %p166 = scmp.eq.s32.totalorder %s20, 0
    %p167 = por %p165, %p166
    %p168 = scmp.ne.s32.totalorder %s156, %s157
    %p169 = scmp.eq.s32.totalorder %s21, 1
    %p170 = por %p168, %p169
    %p172 = scmp.ne.s32.totalorder %s157, %s171
    %p173 = scmp.eq.s32.totalorder %s21, 0
    %p174 = por %p172, %p173
    %s176 = sadd.s32 %s175, 1
    %p179 = scmp.eq.s32.totalorder %s15, 1
    %p180 = scmp.ne.s32.totalorder %s175, %s177
    %p181 = scmp.eq.s32.totalorder %s15, 0
    %p182 = por %p180, %p181
    %p183 = scmp.ne.s32.totalorder %s175, %s177
    %p184 = scmp.eq.s32.totalorder %s20, 1
    %p185 = por %p183, %p184
    %p186 = scmp.ne.s32.totalorder %s177, %s178
    %p187 = scmp.eq.s32.totalorder %s20, 0
    %p188 = por %p186, %p187
    %p189 = scmp.ne.s32.totalorder %s177, %s178
    %p190 = scmp.eq.s32.totalorder %s21, 1
    %p191 = por %p189, %p190
    %p193 = scmp.ne.s32.totalorder %s178, %s192
    %p194 = scmp.eq.s32.totalorder %s21, 0
    %p195 = por %p193, %p194
    %s197 = sadd.s32 %s196, 1
    %p200 = scmp.eq.s32.totalorder %s15, 1
    %p201 = scmp.ne.s32.totalorder %s196, %s198
    %p202 = scmp.eq.s32.totalorder %s15, 0
    %p203 = por %p201, %p202
    %p204 = scmp.ne.s32.totalorder %s196, %s198
    %p205 = scmp.eq.s32.totalorder %s20, 1
    %p206 = por %p204, %p205
    %p207 = scmp.ne.s32.totalorder %s198, %s199
    %p208 = scmp.eq.s32.totalorder %s20, 0
    %p209 = por %p207, %p208
    %p210 = scmp.ne.s32.totalorder %s198, %s199
    %p211 = scmp.eq.s32.totalorder %s21, 1
    %p212 = por %p210, %p211
    %p214 = scmp.ne.s32.totalorder %s199, %s213
    %p215 = scmp.eq.s32.totalorder %s21, 0
    %p216 = por %p214, %p215
    %s217 = ssub.s32 %s15, %s22
    %p218 = scmp.eq.s32.totalorder %s217, 0
    %s220 = sadd.s32 %s219, 1
    %s221 = scalar_select %p218, %s219, %s220
    %p224 = pneg %p218
    %p225 = scmp.eq.s32.totalorder %s15, 1
    %p226 = por %p224, %p225
    %p227 = scmp.ne.s32.totalorder %s219, %s222
    %p228 = scmp.eq.s32.totalorder %s15, 0
    %p229 = por %p227, %p228
    %p230 = scmp.ne.s32.totalorder %s219, %s222
    %p231 = scmp.eq.s32.totalorder %s20, 1
    %p232 = por %p230, %p231
    %p233 = scmp.ne.s32.totalorder %s222, %s223
    %p234 = scmp.eq.s32.totalorder %s20, 0
    %p235 = por %p233, %p234
    %p236 = scmp.ne.s32.totalorder %s222, %s223
    %p237 = scmp.eq.s32.totalorder %s21, 1
    %p238 = por %p236, %p237
    %p240 = scmp.ne.s32.totalorder %s223, %s239
    %p241 = scmp.eq.s32.totalorder %s21, 0
    %p242 = por %p240, %p241
    %p243 = scmp.le.s32.totalorder 1, %s15
    %p244 = scmp.lt.s32.totalorder %s15, 3
    %p245 = pnand %p243, %p244
    %p246 = pneg %p245
    // Predicated region
    $region9: #{sn_mult_encoder_fused.1} parent=5 // pred_check
      _
    $region10: #{sn_mult_encoder_fused.1} parent=5 // pred_check_branch
      %248 = sbr.rel (%p245) target = $region12
    $region11: #{sn_mult_encoder_fused.1} parent=5 // pred_region
      %s249 = ssub.s32 %s15, 1
      // Predicated region
      $region13: #{sn_mult_encoder_fused.1} parent=11 // pred_check
        %p250 = pneg %p62
      $region14: #{sn_mult_encoder_fused.1} parent=11 // pred_check_branch
        %252 = sbr.rel (%p250) target = $region16
      $region15: #{sn_mult_encoder_fused.1} parent=11 // pred_region
        _
      $region16: #{sn_mult_encoder_fused.1} parent=11 // pred_fallthru
        _
      // Predicated region
      $region17: #{sn_mult_encoder_fused.1} parent=11 // pred_check
        %p253 = pneg %p83
      $region18: #{sn_mult_encoder_fused.1} parent=11 // pred_check_branch
        %255 = sbr.rel (%p253) target = $region20
      $region19: #{sn_mult_encoder_fused.1} parent=11 // pred_region
        _
      $region20: #{sn_mult_encoder_fused.1} parent=11 // pred_fallthru
        _
      // Predicated region
      $region21: #{sn_mult_encoder_fused.1} parent=11 // pred_check
        %p256 = pneg %p104
      $region22: #{sn_mult_encoder_fused.1} parent=11 // pred_check_branch
        %258 = sbr.rel (%p256) target = $region24
      $region23: #{sn_mult_encoder_fused.1} parent=11 // pred_region
        _
      $region24: #{sn_mult_encoder_fused.1} parent=11 // pred_fallthru
        _
      // Predicated region
      $region25: #{sn_mult_encoder_fused.1} parent=11 // pred_check
        %p259 = pneg %p125
      $region26: #{sn_mult_encoder_fused.1} parent=11 // pred_check_branch
        %261 = sbr.rel (%p259) target = $region28
      $region27: #{sn_mult_encoder_fused.1} parent=11 // pred_region
        _
      $region28: #{sn_mult_encoder_fused.1} parent=11 // pred_fallthru
        _
      // Predicated region
      $region29: #{sn_mult_encoder_fused.1} parent=11 // pred_check
        %p262 = pneg %p146
      $region30: #{sn_mult_encoder_fused.1} parent=11 // pred_check_branch
        %264 = sbr.rel (%p262) target = $region32
      $region31: #{sn_mult_encoder_fused.1} parent=11 // pred_region
        _
      $region32: #{sn_mult_encoder_fused.1} parent=11 // pred_fallthru
        _
      // Predicated region
      $region33: #{sn_mult_encoder_fused.1} parent=11 // pred_check
        %p265 = pneg %p167
      $region34: #{sn_mult_encoder_fused.1} parent=11 // pred_check_branch
        %267 = sbr.rel (%p265) target = $region36
      $region35: #{sn_mult_encoder_fused.1} parent=11 // pred_region
        _
      $region36: #{sn_mult_encoder_fused.1} parent=11 // pred_fallthru
        _
      // Predicated region
      $region37: #{sn_mult_encoder_fused.1} parent=11 // pred_check
        %p268 = pneg %p188
      $region38: #{sn_mult_encoder_fused.1} parent=11 // pred_check_branch
        %270 = sbr.rel (%p268) target = $region40
      $region39: #{sn_mult_encoder_fused.1} parent=11 // pred_region
        _
      $region40: #{sn_mult_encoder_fused.1} parent=11 // pred_fallthru
        _
      // Predicated region
      $region41: #{sn_mult_encoder_fused.1} parent=11 // pred_check
        %p271 = pneg %p209
      $region42: #{sn_mult_encoder_fused.1} parent=11 // pred_check_branch
        %273 = sbr.rel (%p271) target = $region44
      $region43: #{sn_mult_encoder_fused.1} parent=11 // pred_region
        _
      $region44: #{sn_mult_encoder_fused.1} parent=11 // pred_fallthru
        _
    $region12: #{sn_mult_encoder_fused.1} parent=5 // pred_fallthru
      _
    %p274 = scmp.lt.s32.totalorder %s15, 2
    // Predicated region
    $region45: #{sn_mult_encoder_fused.1} parent=5 // pred_check
      %p275 = pneg %p274
    $region46: #{sn_mult_encoder_fused.1} parent=5 // pred_check_branch
      %277 = sbr.rel (%p275) target = $region48
    $region47: #{sn_mult_encoder_fused.1} parent=5 // pred_region
      // Predicated region
      $region49: #{sn_mult_encoder_fused.1} parent=47 // pred_check
        %p278 = pneg %p35
      $region50: #{sn_mult_encoder_fused.1} parent=47 // pred_check_branch
        %280 = sbr.rel (%p278) target = $region52
      $region51: #{sn_mult_encoder_fused.1} parent=47 // pred_region
        %p281 = scmp.lt.s32.totalorder %s15, 1
        %s282 = scalar_select %p281, %s15, 1
        %s283 = smul.addr %s282, 8
        %s284 = smul.addr %s283, 8
        %s285 = scalar_lea.vmem %s0, %s284
      $region52: #{sn_mult_encoder_fused.1} parent=47 // pred_fallthru
        _
    $region48: #{sn_mult_encoder_fused.1} parent=5 // pred_fallthru
      _
    %p286 = scmp.le.s32.totalorder 1, %s15
    %p287 = scmp.lt.s32.totalorder %s15, 3
    %p288 = pnand %p286, %p287
    %p289 = pneg %p288
    // Predicated region
    $region53: #{sn_mult_encoder_fused.1} parent=5 // pred_check
      _
    $region54: #{sn_mult_encoder_fused.1} parent=5 // pred_check_branch
      %291 = sbr.rel (%p288) target = $region56
    $region55: #{sn_mult_encoder_fused.1} parent=5 // pred_region
      %s292 = ssub.s32 %s15, 1
      %p293 = scmp.lt.s32.totalorder %s20, 1
      %s294 = scalar_select %p293, %s20, 1
      %s295 = smul.addr %s294, 8
      %s296 = smul.addr %s295, 8
      %s297 = scalar_lea.vmem %s0, %s296
      %p298 = pneg %p41
      %p299 = pneg %p38
      %p300 = pneg %p62
      %p301 = pneg %p59
      %p302 = pneg %p83
      %p303 = pneg %p80
      %p304 = pneg %p104
      %p305 = pneg %p101
      %p306 = pneg %p125
      %p307 = pneg %p122
      %p308 = pneg %p146
      %p309 = pneg %p143
      %p310 = pneg %p167
      %p311 = pneg %p164
      %p312 = pneg %p188
      %p313 = pneg %p185
      %p314 = pneg %p209
      %p315 = pneg %p206
      %p316 = pneg %p235
      %p317 = pneg %p232
      %p318 = scmp.lt.s32.totalorder %s20, 1
      %s319 = scalar_select %p318, %s20, 1
      %s320 = smul.addr %s319, 2
      %s321 = smul.addr %s320, 8
      %s322 = scalar_lea.vmem %s9, %s321
      %p323 = scmp.lt.s32.totalorder %s20, 1
      %s324 = scalar_select %p323, %s20, 1
      %s325 = smul.addr %s324, 8
      %s326 = smul.addr %s325, 8
      %s327 = scalar_lea.vmem %s0, %s326
      %p328 = scmp.lt.s32.totalorder %s20, 1
      %s329 = scalar_select %p328, %s20, 1
      %s330 = smul.addr %s329, 2
      %s331 = smul.addr %s330, 8
      %s332 = scalar_lea.vmem %s9, %s331
      %v333 = vlaneseq
      %v334 = vshrl.u32 %v333, 7
      %v335 = vadd.s32 %v334, 8
      %v336 = vlaneseq
      %v337 = vand.u32 %v336, 127
      %vm338 = vcmp.eq.s32.totalorder %v334, %v337
      %vm339 = vcmp.eq.s32.totalorder %v335, %v337
      %v340 = vsel %vm338, 1, 0
      %v341 = vsel %vm339, 1, 0
      %v342 = vcvt.s32.f32 %v340
      %v343 = vcvt.s32.f32 %v341
      %v344 = vld [vmem:[%s327] sm:$0xff]
      %v345 = vld [vmem:[%s327 + $0x8] sm:$0xff]
      %v346 = vld [vmem:[%s327 + $0x10] sm:$0xff]
      %v347 = vld [vmem:[%s327 + $0x18] sm:$0xff]
      %v348 = vld [vmem:[%s327 + $0x20] sm:$0xff]
      %v349 = vld [vmem:[%s327 + $0x28] sm:$0xff]
      %v350 = vld [vmem:[%s327 + $0x30] sm:$0xff]
      %v351 = vld [vmem:[%s327 + $0x38] sm:$0xff]
      %v352 = vld [vmem:[%s1] sm:$0xff]
      %v353 = vld [vmem:[%s1 + $0x8] sm:$0xff]
      %v354 = vld [vmem:[%s1 + $0x10] sm:$0xff]
      %v355 = vld [vmem:[%s1 + $0x18] sm:$0xff]
      %v356 = vld [vmem:[%s1 + $0x20] sm:$0xff]
      %v357 = vld [vmem:[%s1 + $0x28] sm:$0xff]
      %v358 = vld [vmem:[%s1 + $0x30] sm:$0xff]
      %v359 = vld [vmem:[%s1 + $0x38] sm:$0xff]
      %v360 = vld [vmem:[%s1 + $0x40] sm:$0xff]
      %v361 = vld [vmem:[%s1 + $0x48] sm:$0xff]
      %v362 = vld [vmem:[%s1 + $0x50] sm:$0xff]
      %v363 = vld [vmem:[%s1 + $0x58] sm:$0xff]
      %v364 = vld [vmem:[%s1 + $0x60] sm:$0xff]
      %v365 = vld [vmem:[%s1 + $0x68] sm:$0xff]
      %v366 = vld [vmem:[%s1 + $0x70] sm:$0xff]
      %v367 = vld [vmem:[%s1 + $0x78] sm:$0xff]
      %v368 = vld [vmem:[%s1 + $0x80] sm:$0xff]
      %v369 = vld [vmem:[%s1 + $0x88] sm:$0xff]
      %v370 = vld [vmem:[%s1 + $0x90] sm:$0xff]
      %v371 = vld [vmem:[%s1 + $0x98] sm:$0xff]
      %v372 = vld [vmem:[%s1 + $0xa0] sm:$0xff]
      %v373 = vld [vmem:[%s1 + $0xa8] sm:$0xff]
      %v374 = vld [vmem:[%s1 + $0xb0] sm:$0xff]
      %v375 = vld [vmem:[%s1 + $0xb8] sm:$0xff]
      %v376 = vld [vmem:[%s1 + $0xc0] sm:$0xff]
      %v377 = vld [vmem:[%s1 + $0xc8] sm:$0xff]
      %v378 = vld [vmem:[%s1 + $0xd0] sm:$0xff]
      %v379 = vld [vmem:[%s1 + $0xd8] sm:$0xff]
      %v380 = vld [vmem:[%s1 + $0xe0] sm:$0xff]
      %v381 = vld [vmem:[%s1 + $0xe8] sm:$0xff]
      %v382 = vld [vmem:[%s1 + $0xf0] sm:$0xff]
      %v383 = vld [vmem:[%s1 + $0xf8] sm:$0xff]
      %v384 = vld [vmem:[%s2] sm:$0xff]
      %v385 = vld [vmem:[%s2 + $0x8] sm:$0xff]
      %v386 = vld [vmem:[%s2 + $0x10] sm:$0xff]
      %v387 = vld [vmem:[%s2 + $0x18] sm:$0xff]
      %v388 = vld [vmem:[%s2 + $0x20] sm:$0xff]
      %v389 = vld [vmem:[%s3] sm:$0xff]
      %vm390 = vcmask 130048
      %v392 = vsel %vm390, %v344, 0
      %v395 = vsel %vm390, %v345, 0
      %397 = vmatprep.subr.mxu0 0.0
      %398 = vmatpush1.msra.mxu0 %v344
      %399 = vmatprep.subr.mxu0 0.0
      %400 = vmatpush1.msra.mxu0 %v345
      %401 = vmatprep.subr.mxu0 0.0
      %402 = vmatpush1.msra.mxu0 0.0
      %403 = vmatprep.subr.mxu0 0.0
      %404 = vmatpush1.msra.mxu0 0.0
      %405 = vmatprep.subr.mxu0 0.0
      %406 = vmatpush1.msra.mxu0 0.0
      %407 = vmatprep.subr.mxu0 0.0
      %408 = vmatpush1.msra.mxu0 0.0
      %409 = vmatprep.subr.mxu0 0.0
      %410 = vmatpush1.msra.mxu0 0.0
      %411 = vmatprep.subr.mxu0 0.0
      %412 = vmatpush1.msra.mxu0 0.0
      %413 = vmatprep.subr.mxu0 0.0
      %414 = vmatpush1.msra.mxu0 0.0
      %415 = vmatprep.subr.mxu0 0.0
      %416 = vmatpush1.msra.mxu0 0.0
      %417 = vmatprep.subr.mxu0 0.0
      %418 = vmatpush1.msra.mxu0 0.0
      %419 = vmatprep.subr.mxu0 0.0
      %420 = vmatpush1.msra.mxu0 0.0
      %421 = vmatprep.subr.mxu0 0.0
      %422 = vmatpush1.msra.mxu0 0.0
      %423 = vmatprep.subr.mxu0 0.0
      %424 = vmatpush1.msra.mxu0 0.0
      %425 = vmatprep.subr.mxu0 0.0
      %426 = vmatpush1.msra.mxu0 0.0
      %427 = vmatprep.subr.mxu0 0.0
      %428 = vmatpush1.msra.mxu0 0.0
      %429 = vmatprep.subr.mxu0 0.0
      %430 = vmatpush1.msra.mxu0 0.0
      %431 = vmatprep.subr.mxu0 0.0
      %432 = vmatpush1.msra.mxu0 0.0
      %433 = vmatprep.subr.mxu0 0.0
      %434 = vmatpush1.msra.mxu0 0.0
      %435 = vmatprep.subr.mxu0 0.0
      %436 = vmatpush1.msra.mxu0 0.0
      %437 = vmatprep.subr.mxu0 0.0
      %438 = vmatpush1.msra.mxu0 0.0
      %439 = vmatprep.subr.mxu0 0.0
      %440 = vmatpush1.msra.mxu0 0.0
      %441 = vmatprep.subr.mxu0 0.0
      %442 = vmatpush1.msra.mxu0 0.0
      %443 = vmatprep.subr.mxu0 0.0
      %444 = vmatpush1.msra.mxu0 0.0
      %445 = vmatprep.subr.mxu0 0.0
      %446 = vmatpush1.msra.mxu0 0.0
      %447 = vmatprep.subr.mxu0 0.0
      %448 = vmatpush1.msra.mxu0 0.0
      %449 = vmatprep.subr.mxu0 0.0
      %450 = vmatpush1.msra.mxu0 0.0
      %451 = vmatprep.subr.mxu0 0.0
      %452 = vmatpush1.msra.mxu0 0.0
      %453 = vmatprep.subr.mxu0 0.0
      %454 = vmatpush1.msra.mxu0 0.0
      %455 = vmatprep.subr.mxu0 0.0
      %456 = vmatpush1.msra.mxu0 0.0
      %457 = vmatprep.subr.mxu0 0.0
      %458 = vmatpush1.msra.mxu0 0.0
      %459 = vmatprep.subr.mxu0 0.0
      %460 = vmatpush1.msra.mxu0 0.0
      %461 = vmatprep.mubr.f32.mxu0 0.0
      %462 = vmatmul.mubr.f32.gmra.mrb[0].mxu0 %v392
      %v463 = vpop.f32.mrb[0].mxu0
      %v464 = vadd.f32 0.0, %v463
      %v465 = vpop.f32.mrb[0].mxu0
      %466 = vmatprep.mubr.f32.mxu0 0.0
      %467 = vmatmul.mubr.f32.gmra.mrb[0].mxu0 %v395
      %v468 = vpop.f32.mrb[0].mxu0
      %v469 = vadd.f32 0.0, %v468
      %v470 = vpop.f32.mrb[0].mxu0
      %471 = vdwg.mxu0
      %v473 = vsel %vm390, %v346, 0
      %v476 = vsel %vm390, %v347, 0
      %478 = vmatprep.subr.mxu0 0.0
      %479 = vmatpush1.msra.mxu0 %v346
      %480 = vmatprep.subr.mxu0 0.0
      %481 = vmatpush1.msra.mxu0 %v347
      %482 = vmatprep.subr.mxu0 0.0
      %483 = vmatpush1.msra.mxu0 0.0
      %484 = vmatprep.subr.mxu0 0.0
      %485 = vmatpush1.msra.mxu0 0.0
      %486 = vmatprep.subr.mxu0 0.0
      %487 = vmatpush1.msra.mxu0 0.0
      %488 = vmatprep.subr.mxu0 0.0
      %489 = vmatpush1.msra.mxu0 0.0
      %490 = vmatprep.subr.mxu0 0.0
      %491 = vmatpush1.msra.mxu0 0.0
      %492 = vmatprep.subr.mxu0 0.0
      %493 = vmatpush1.msra.mxu0 0.0
      %494 = vmatprep.subr.mxu0 0.0
      %495 = vmatpush1.msra.mxu0 0.0
      %496 = vmatprep.subr.mxu0 0.0
      %497 = vmatpush1.msra.mxu0 0.0
      %498 = vmatprep.subr.mxu0 0.0
      %499 = vmatpush1.msra.mxu0 0.0
      %500 = vmatprep.subr.mxu0 0.0
      %501 = vmatpush1.msra.mxu0 0.0
      %502 = vmatprep.subr.mxu0 0.0
      %503 = vmatpush1.msra.mxu0 0.0
      %504 = vmatprep.subr.mxu0 0.0
      %505 = vmatpush1.msra.mxu0 0.0
      %506 = vmatprep.subr.mxu0 0.0
      %507 = vmatpush1.msra.mxu0 0.0
      %508 = vmatprep.subr.mxu0 0.0
      %509 = vmatpush1.msra.mxu0 0.0
      %510 = vmatprep.subr.mxu0 0.0
      %511 = vmatpush1.msra.mxu0 0.0
      %512 = vmatprep.subr.mxu0 0.0
      %513 = vmatpush1.msra.mxu0 0.0
      %514 = vmatprep.subr.mxu0 0.0
      %515 = vmatpush1.msra.mxu0 0.0
      %516 = vmatprep.subr.mxu0 0.0
      %517 = vmatpush1.msra.mxu0 0.0
      %518 = vmatprep.subr.mxu0 0.0
      %519 = vmatpush1.msra.mxu0 0.0
      %520 = vmatprep.subr.mxu0 0.0
      %521 = vmatpush1.msra.mxu0 0.0
      %522 = vmatprep.subr.mxu0 0.0
      %523 = vmatpush1.msra.mxu0 0.0
      %524 = vmatprep.subr.mxu0 0.0
      %525 = vmatpush1.msra.mxu0 0.0
      %526 = vmatprep.subr.mxu0 0.0
      %527 = vmatpush1.msra.mxu0 0.0
      %528 = vmatprep.subr.mxu0 0.0
      %529 = vmatpush1.msra.mxu0 0.0
      %530 = vmatprep.subr.mxu0 0.0
      %531 = vmatpush1.msra.mxu0 0.0
      %532 = vmatprep.subr.mxu0 0.0
      %533 = vmatpush1.msra.mxu0 0.0
      %534 = vmatprep.subr.mxu0 0.0
      %535 = vmatpush1.msra.mxu0 0.0
      %536 = vmatprep.subr.mxu0 0.0
      %537 = vmatpush1.msra.mxu0 0.0
      %538 = vmatprep.subr.mxu0 0.0
      %539 = vmatpush1.msra.mxu0 0.0
      %540 = vmatprep.subr.mxu0 0.0
      %541 = vmatpush1.msra.mxu0 0.0
      %542 = vmatprep.mubr.f32.mxu0 0.0
      %543 = vmatmul.mubr.f32.gmra.mrb[0].mxu0 %v473
      %v544 = vpop.f32.mrb[0].mxu0
      %v545 = vadd.f32 0.0, %v544
      %v546 = vpop.f32.mrb[0].mxu0
      %547 = vmatprep.mubr.f32.mxu0 0.0
      %548 = vmatmul.mubr.f32.gmra.mrb[0].mxu0 %v476
      %v549 = vpop.f32.mrb[0].mxu0
      %v550 = vadd.f32 0.0, %v549
      %v551 = vpop.f32.mrb[0].mxu0
      %552 = vdwg.mxu0
      %v554 = vsel %vm390, %v348, 0
      %v557 = vsel %vm390, %v349, 0
      %559 = vmatprep.subr.mxu0 0.0
      %560 = vmatpush1.msra.mxu0 %v348
      %561 = vmatprep.subr.mxu0 0.0
      %562 = vmatpush1.msra.mxu0 %v349
      %563 = vmatprep.subr.mxu0 0.0
      %564 = vmatpush1.msra.mxu0 0.0
      %565 = vmatprep.subr.mxu0 0.0
      %566 = vmatpush1.msra.mxu0 0.0
      %567 = vmatprep.subr.mxu0 0.0
      %568 = vmatpush1.msra.mxu0 0.0
      %569 = vmatprep.subr.mxu0 0.0
      %570 = vmatpush1.msra.mxu0 0.0
      %571 = vmatprep.subr.mxu0 0.0
      %572 = vmatpush1.msra.mxu0 0.0
      %573 = vmatprep.subr.mxu0 0.0
      %574 = vmatpush1.msra.mxu0 0.0
      %575 = vmatprep.subr.mxu0 0.0
      %576 = vmatpush1.msra.mxu0 0.0
      %577 = vmatprep.subr.mxu0 0.0
      %578 = vmatpush1.msra.mxu0 0.0
      %579 = vmatprep.subr.mxu0 0.0
      %580 = vmatpush1.msra.mxu0 0.0
      %581 = vmatprep.subr.mxu0 0.0
      %582 = vmatpush1.msra.mxu0 0.0
      %583 = vmatprep.subr.mxu0 0.0
      %584 = vmatpush1.msra.mxu0 0.0
      %585 = vmatprep.subr.mxu0 0.0
      %586 = vmatpush1.msra.mxu0 0.0
      %587 = vmatprep.subr.mxu0 0.0
      %588 = vmatpush1.msra.mxu0 0.0
      %589 = vmatprep.subr.mxu0 0.0
      %590 = vmatpush1.msra.mxu0 0.0
      %591 = vmatprep.subr.mxu0 0.0
      %592 = vmatpush1.msra.mxu0 0.0
      %593 = vmatprep.subr.mxu0 0.0
      %594 = vmatpush1.msra.mxu0 0.0
      %595 = vmatprep.subr.mxu0 0.0
      %596 = vmatpush1.msra.mxu0 0.0
      %597 = vmatprep.subr.mxu0 0.0
      %598 = vmatpush1.msra.mxu0 0.0
      %599 = vmatprep.subr.mxu0 0.0
      %600 = vmatpush1.msra.mxu0 0.0
      %601 = vmatprep.subr.mxu0 0.0
      %602 = vmatpush1.msra.mxu0 0.0
      %603 = vmatprep.subr.mxu0 0.0
      %604 = vmatpush1.msra.mxu0 0.0
      %605 = vmatprep.subr.mxu0 0.0
      %606 = vmatpush1.msra.mxu0 0.0
      %607 = vmatprep.subr.mxu0 0.0
      %608 = vmatpush1.msra.mxu0 0.0
      %609 = vmatprep.subr.mxu0 0.0
      %610 = vmatpush1.msra.mxu0 0.0
      %611 = vmatprep.subr.mxu0 0.0
      %612 = vmatpush1.msra.mxu0 0.0
      %613 = vmatprep.subr.mxu0 0.0
      %614 = vmatpush1.msra.mxu0 0.0
      %615 = vmatprep.subr.mxu0 0.0
      %616 = vmatpush1.msra.mxu0 0.0
      %617 = vmatprep.subr.mxu0 0.0
      %618 = vmatpush1.msra.mxu0 0.0
      %619 = vmatprep.subr.mxu0 0.0
      %620 = vmatpush1.msra.mxu0 0.0
      %621 = vmatprep.subr.mxu0 0.0
      %622 = vmatpush1.msra.mxu0 0.0
      %623 = vmatprep.mubr.f32.mxu0 0.0
      %624 = vmatmul.mubr.f32.gmra.mrb[0].mxu0 %v554
      %v625 = vpop.f32.mrb[0].mxu0
      %v626 = vadd.f32 0.0, %v625
      %v627 = vpop.f32.mrb[0].mxu0
      %628 = vmatprep.mubr.f32.mxu0 0.0
      %629 = vmatmul.mubr.f32.gmra.mrb[0].mxu0 %v557
      %v630 = vpop.f32.mrb[0].mxu0
      %v631 = vadd.f32 0.0, %v630
      %v632 = vpop.f32.mrb[0].mxu0
      %633 = vdwg.mxu0
      %v635 = vsel %vm390, %v350, 0
      %v638 = vsel %vm390, %v351, 0
      %640 = vmatprep.subr.mxu0 0.0
      %641 = vmatpush1.msra.mxu0 %v350
      %642 = vmatprep.subr.mxu0 0.0
      %643 = vmatpush1.msra.mxu0 %v351
      %644 = vmatprep.subr.mxu0 0.0
      %645 = vmatpush1.msra.mxu0 0.0
      %646 = vmatprep.subr.mxu0 0.0
      %647 = vmatpush1.msra.mxu0 0.0
      %648 = vmatprep.subr.mxu0 0.0
      %649 = vmatpush1.msra.mxu0 0.0
      %650 = vmatprep.subr.mxu0 0.0
      %651 = vmatpush1.msra.mxu0 0.0
      %652 = vmatprep.subr.mxu0 0.0
      %653 = vmatpush1.msra.mxu0 0.0
      %654 = vmatprep.subr.mxu0 0.0
      %655 = vmatpush1.msra.mxu0 0.0
      %656 = vmatprep.subr.mxu0 0.0
      %657 = vmatpush1.msra.mxu0 0.0
      %658 = vmatprep.subr.mxu0 0.0
      %659 = vmatpush1.msra.mxu0 0.0
      %660 = vmatprep.subr.mxu0 0.0
      %661 = vmatpush1.msra.mxu0 0.0
      %662 = vmatprep.subr.mxu0 0.0
      %663 = vmatpush1.msra.mxu0 0.0
      %664 = vmatprep.subr.mxu0 0.0
      %665 = vmatpush1.msra.mxu0 0.0
      %666 = vmatprep.subr.mxu0 0.0
      %667 = vmatpush1.msra.mxu0 0.0
      %668 = vmatprep.subr.mxu0 0.0
      %669 = vmatpush1.msra.mxu0 0.0
      %670 = vmatprep.subr.mxu0 0.0
      %671 = vmatpush1.msra.mxu0 0.0
      %672 = vmatprep.subr.mxu0 0.0
      %673 = vmatpush1.msra.mxu0 0.0
      %674 = vmatprep.subr.mxu0 0.0
      %675 = vmatpush1.msra.mxu0 0.0
      %676 = vmatprep.subr.mxu0 0.0
      %677 = vmatpush1.msra.mxu0 0.0
      %678 = vmatprep.subr.mxu0 0.0
      %679 = vmatpush1.msra.mxu0 0.0
      %680 = vmatprep.subr.mxu0 0.0
      %681 = vmatpush1.msra.mxu0 0.0
      %682 = vmatprep.subr.mxu0 0.0
      %683 = vmatpush1.msra.mxu0 0.0
      %684 = vmatprep.subr.mxu0 0.0
      %685 = vmatpush1.msra.mxu0 0.0
      %686 = vmatprep.subr.mxu0 0.0
      %687 = vmatpush1.msra.mxu0 0.0
      %688 = vmatprep.subr.mxu0 0.0
      %689 = vmatpush1.msra.mxu0 0.0
      %690 = vmatprep.subr.mxu0 0.0
      %691 = vmatpush1.msra.mxu0 0.0
      %692 = vmatprep.subr.mxu0 0.0
      %693 = vmatpush1.msra.mxu0 0.0
      %694 = vmatprep.subr.mxu0 0.0
      %695 = vmatpush1.msra.mxu0 0.0
      %696 = vmatprep.subr.mxu0 0.0
      %697 = vmatpush1.msra.mxu0 0.0
      %698 = vmatprep.subr.mxu0 0.0
      %699 = vmatpush1.msra.mxu0 0.0
      %700 = vmatprep.subr.mxu0 0.0
      %701 = vmatpush1.msra.mxu0 0.0
      %702 = vmatprep.subr.mxu0 0.0
      %703 = vmatpush1.msra.mxu0 0.0
      %704 = vmatprep.mubr.f32.mxu0 0.0
      %705 = vmatmul.mubr.f32.gmra.mrb[0].mxu0 %v635
      %v706 = vpop.f32.mrb[0].mxu0
      %v707 = vadd.f32 0.0, %v706
      %v708 = vpop.f32.mrb[0].mxu0
      %709 = vmatprep.mubr.f32.mxu0 0.0
      %710 = vmatmul.mubr.f32.gmra.mrb[0].mxu0 %v638
      %v711 = vpop.f32.mrb[0].mxu0
      %v712 = vadd.f32 0.0, %v711
      %v713 = vpop.f32.mrb[0].mxu0
      %714 = vdwg.mxu0
      %vm715 = vcmask 523264
      %v717 = vsel %vm715, %v352, 0
      %v720 = vsel %vm715, %v353, 0
      %v723 = vsel %vm715, %v354, 0
      %v726 = vsel %vm715, %v355, 0
      %v729 = vsel %vm715, %v356, 0
      %v732 = vsel %vm715, %v357, 0
      %v735 = vsel %vm715, %v358, 0
      %v738 = vsel %vm715, %v359, 0
      %v741 = vsel %vm715, %v360, 0
      %v744 = vsel %vm715, %v361, 0
      %v747 = vsel %vm715, %v362, 0
      %v750 = vsel %vm715, %v363, 0
      %v753 = vsel %vm715, %v364, 0
      %v756 = vsel %vm715, %v365, 0
      %v759 = vsel %vm715, %v366, 0
      %v762 = vsel %vm715, %v367, 0
      %v765 = vsel %vm715, %v368, 0
      %v768 = vsel %vm715, %v369, 0
      %v771 = vsel %vm715, %v370, 0
      %v774 = vsel %vm715, %v371, 0
      %v777 = vsel %vm715, %v372, 0
      %v780 = vsel %vm715, %v373, 0
      %v783 = vsel %vm715, %v374, 0
      %v786 = vsel %vm715, %v375, 0
      %v789 = vsel %vm715, %v376, 0
      %v792 = vsel %vm715, %v377, 0
      %v795 = vsel %vm715, %v378, 0
      %v798 = vsel %vm715, %v379, 0
      %v801 = vsel %vm715, %v380, 0
      %v804 = vsel %vm715, %v381, 0
      %v807 = vsel %vm715, %v382, 0
      %v810 = vsel %vm715, %v383, 0
      %812 = vmatprep.subr.mxu0 0.0
      %813 = vmatpush1.msra.mxu0 %v464
      %814 = vmatprep.subr.mxu0 0.0
      %815 = vmatpush1.msra.mxu0 %v469
      %816 = vmatprep.subr.mxu0 0.0
      %817 = vmatpush1.msra.mxu0 %v545
      %818 = vmatprep.subr.mxu0 0.0
      %819 = vmatpush1.msra.mxu0 %v550
      %820 = vmatprep.subr.mxu0 0.0
      %821 = vmatpush1.msra.mxu0 %v626
      %822 = vmatprep.subr.mxu0 0.0
      %823 = vmatpush1.msra.mxu0 %v631
      %824 = vmatprep.subr.mxu0 0.0
      %825 = vmatpush1.msra.mxu0 %v707
      %826 = vmatprep.subr.mxu0 0.0
      %827 = vmatpush1.msra.mxu0 %v712
      %828 = vmatprep.subr.mxu0 0.0
      %829 = vmatpush1.msra.mxu0 0.0
      %830 = vmatprep.subr.mxu0 0.0
      %831 = vmatpush1.msra.mxu0 0.0
      %832 = vmatprep.subr.mxu0 0.0
      %833 = vmatpush1.msra.mxu0 0.0
      %834 = vmatprep.subr.mxu0 0.0
      %835 = vmatpush1.msra.mxu0 0.0
      %836 = vmatprep.subr.mxu0 0.0
      %837 = vmatpush1.msra.mxu0 0.0
      %838 = vmatprep.subr.mxu0 0.0
      %839 = vmatpush1.msra.mxu0 0.0
      %840 = vmatprep.subr.mxu0 0.0
      %841 = vmatpush1.msra.mxu0 0.0
      %842 = vmatprep.subr.mxu0 0.0
      %843 = vmatpush1.msra.mxu0 0.0
      %844 = vmatprep.subr.mxu0 0.0
      %845 = vmatpush1.msra.mxu0 0.0
      %846 = vmatprep.subr.mxu0 0.0
      %847 = vmatpush1.msra.mxu0 0.0
      %848 = vmatprep.subr.mxu0 0.0
      %849 = vmatpush1.msra.mxu0 0.0
      %850 = vmatprep.subr.mxu0 0.0
      %851 = vmatpush1.msra.mxu0 0.0
      %852 = vmatprep.subr.mxu0 0.0
      %853 = vmatpush1.msra.mxu0 0.0
      %854 = vmatprep.subr.mxu0 0.0
      %855 = vmatpush1.msra.mxu0 0.0
      %856 = vmatprep.subr.mxu0 0.0
      %857 = vmatpush1.msra.mxu0 0.0
      %858 = vmatprep.subr.mxu0 0.0
      %859 = vmatpush1.msra.mxu0 0.0
      %860 = vmatprep.subr.mxu0 0.0
      %861 = vmatpush1.msra.mxu0 0.0
      %862 = vmatprep.subr.mxu0 0.0
      %863 = vmatpush1.msra.mxu0 0.0
      %864 = vmatprep.subr.mxu0 0.0
      %865 = vmatpush1.msra.mxu0 0.0
      %866 = vmatprep.subr.mxu0 0.0
      %867 = vmatpush1.msra.mxu0 0.0
      %868 = vmatprep.subr.mxu0 0.0
      %869 = vmatpush1.msra.mxu0 0.0
      %870 = vmatprep.subr.mxu0 0.0
      %871 = vmatpush1.msra.mxu0 0.0
      %872 = vmatprep.subr.mxu0 0.0
      %873 = vmatpush1.msra.mxu0 0.0
      %874 = vmatprep.subr.mxu0 0.0
      %875 = vmatpush1.msra.mxu0 0.0
      %876 = vmatprep.mubr.f32.mxu0 0.0
      %877 = vmatmul.mubr.f32.gmra.mrb[0].mxu0 %v717
      %v878 = vpop.f32.mrb[0].mxu0
      %v879 = vadd.f32 0.0, %v878
      %v880 = vpop.f32.mrb[0].mxu0
      %881 = vmatprep.mubr.f32.mxu0 0.0
      %882 = vmatmul.mubr.f32.gmra.mrb[0].mxu0 %v720
      %v883 = vpop.f32.mrb[0].mxu0
      %v884 = vadd.f32 0.0, %v883
      %v885 = vpop.f32.mrb[0].mxu0
      %886 = vmatprep.mubr.f32.mxu0 0.0
      %887 = vmatmul.mubr.f32.gmra.mrb[0].mxu0 %v723
      %v888 = vpop.f32.mrb[0].mxu0
      %v889 = vadd.f32 0.0, %v888
      %v890 = vpop.f32.mrb[0].mxu0
      %891 = vmatprep.mubr.f32.mxu0 0.0
      %892 = vmatmul.mubr.f32.gmra.mrb[0].mxu0 %v726
      %v893 = vpop.f32.mrb[0].mxu0
      %v894 = vadd.f32 0.0, %v893
      %v895 = vpop.f32.mrb[0].mxu0
      %896 = vmatprep.mubr.f32.mxu0 0.0
      %897 = vmatmul.mubr.f32.gmra.mrb[0].mxu0 %v729
      %v898 = vpop.f32.mrb[0].mxu0
      %v899 = vadd.f32 0.0, %v898
      %v900 = vpop.f32.mrb[0].mxu0
      %901 = vmatprep.mubr.f32.mxu0 0.0
      %902 = vmatmul.mubr.f32.gmra.mrb[0].mxu0 %v732
      %v903 = vpop.f32.mrb[0].mxu0
      %v904 = vadd.f32 0.0, %v903
      %v905 = vpop.f32.mrb[0].mxu0
      %906 = vmatprep.mubr.f32.mxu0 0.0
      %907 = vmatmul.mubr.f32.gmra.mrb[0].mxu0 %v735
      %v908 = vpop.f32.mrb[0].mxu0
      %v909 = vadd.f32 0.0, %v908
      %v910 = vpop.f32.mrb[0].mxu0
      %911 = vmatprep.mubr.f32.mxu0 0.0
      %912 = vmatmul.mubr.f32.gmra.mrb[0].mxu0 %v738
      %v913 = vpop.f32.mrb[0].mxu0
      %v914 = vadd.f32 0.0, %v913
      %v915 = vpop.f32.mrb[0].mxu0
      %916 = vmatprep.mubr.f32.mxu0 0.0
      %917 = vmatmul.mubr.f32.gmra.mrb[0].mxu0 %v741
      %v918 = vpop.f32.mrb[0].mxu0
      %v919 = vadd.f32 0.0, %v918
      %v920 = vpop.f32.mrb[0].mxu0
      %921 = vmatprep.mubr.f32.mxu0 0.0
      %922 = vmatmul.mubr.f32.gmra.mrb[0].mxu0 %v744
      %v923 = vpop.f32.mrb[0].mxu0
      %v924 = vadd.f32 0.0, %v923
      %v925 = vpop.f32.mrb[0].mxu0
      %926 = vmatprep.mubr.f32.mxu0 0.0
      %927 = vmatmul.mubr.f32.gmra.mrb[0].mxu0 %v747
      %v928 = vpop.f32.mrb[0].mxu0
      %v929 = vadd.f32 0.0, %v928
      %v930 = vpop.f32.mrb[0].mxu0
      %931 = vmatprep.mubr.f32.mxu0 0.0
      %932 = vmatmul.mubr.f32.gmra.mrb[0].mxu0 %v750
      %v933 = vpop.f32.mrb[0].mxu0
      %v934 = vadd.f32 0.0, %v933
      %v935 = vpop.f32.mrb[0].mxu0
      %936 = vmatprep.mubr.f32.mxu0 0.0
      %937 = vmatmul.mubr.f32.gmra.mrb[0].mxu0 %v753
      %v938 = vpop.f32.mrb[0].mxu0
      %v939 = vadd.f32 0.0, %v938
      %v940 = vpop.f32.mrb[0].mxu0
      %941 = vmatprep.mubr.f32.mxu0 0.0
      %942 = vmatmul.mubr.f32.gmra.mrb[0].mxu0 %v756
      %v943 = vpop.f32.mrb[0].mxu0
      %v944 = vadd.f32 0.0, %v943
      %v945 = vpop.f32.mrb[0].mxu0
      %946 = vmatprep.mubr.f32.mxu0 0.0
      %947 = vmatmul.mubr.f32.gmra.mrb[0].mxu0 %v759
      %v948 = vpop.f32.mrb[0].mxu0
      %v949 = vadd.f32 0.0, %v948
      %v950 = vpop.f32.mrb[0].mxu0
      %951 = vmatprep.mubr.f32.mxu0 0.0
      %952 = vmatmul.mubr.f32.gmra.mrb[0].mxu0 %v762
      %v953 = vpop.f32.mrb[0].mxu0
      %v954 = vadd.f32 0.0, %v953
      %v955 = vpop.f32.mrb[0].mxu0
      %956 = vmatprep.mubr.f32.mxu0 0.0
      %957 = vmatmul.mubr.f32.gmra.mrb[0].mxu0 %v765
      %v958 = vpop.f32.mrb[0].mxu0
      %v959 = vadd.f32 0.0, %v958
      %v960 = vpop.f32.mrb[0].mxu0
      %961 = vmatprep.mubr.f32.mxu0 0.0
      %962 = vmatmul.mubr.f32.gmra.mrb[0].mxu0 %v768
      %v963 = vpop.f32.mrb[0].mxu0
      %v964 = vadd.f32 0.0, %v963
      %v965 = vpop.f32.mrb[0].mxu0
      %966 = vmatprep.mubr.f32.mxu0 0.0
      %967 = vmatmul.mubr.f32.gmra.mrb[0].mxu0 %v771
      %v968 = vpop.f32.mrb[0].mxu0
      %v969 = vadd.f32 0.0, %v968
      %v970 = vpop.f32.mrb[0].mxu0
      %971 = vmatprep.mubr.f32.mxu0 0.0
      %972 = vmatmul.mubr.f32.gmra.mrb[0].mxu0 %v774
      %v973 = vpop.f32.mrb[0].mxu0
      %v974 = vadd.f32 0.0, %v973
      %v975 = vpop.f32.mrb[0].mxu0
      %976 = vmatprep.mubr.f32.mxu0 0.0
      %977 = vmatmul.mubr.f32.gmra.mrb[0].mxu0 %v777
      %v978 = vpop.f32.mrb[0].mxu0
      %v979 = vadd.f32 0.0, %v978
      %v980 = vpop.f32.mrb[0].mxu0
      %981 = vmatprep.mubr.f32.mxu0 0.0
      %982 = vmatmul.mubr.f32.gmra.mrb[0].mxu0 %v780
      %v983 = vpop.f32.mrb[0].mxu0
      %v984 = vadd.f32 0.0, %v983
      %v985 = vpop.f32.mrb[0].mxu0
      %986 = vmatprep.mubr.f32.mxu0 0.0
      %987 = vmatmul.mubr.f32.gmra.mrb[0].mxu0 %v783
      %v988 = vpop.f32.mrb[0].mxu0
      %v989 = vadd.f32 0.0, %v988
      %v990 = vpop.f32.mrb[0].mxu0
      %991 = vmatprep.mubr.f32.mxu0 0.0
      %992 = vmatmul.mubr.f32.gmra.mrb[0].mxu0 %v786
      %v993 = vpop.f32.mrb[0].mxu0
      %v994 = vadd.f32 0.0, %v993
      %v995 = vpop.f32.mrb[0].mxu0
      %996 = vmatprep.mubr.f32.mxu0 0.0
      %997 = vmatmul.mubr.f32.gmra.mrb[0].mxu0 %v789
      %v998 = vpop.f32.mrb[0].mxu0
      %v999 = vadd.f32 0.0, %v998
      %v1000 = vpop.f32.mrb[0].mxu0
      %1001 = vmatprep.mubr.f32.mxu0 0.0
      %1002 = vmatmul.mubr.f32.gmra.mrb[0].mxu0 %v792
      %v1003 = vpop.f32.mrb[0].mxu0
      %v1004 = vadd.f32 0.0, %v1003
      %v1005 = vpop.f32.mrb[0].mxu0
      %1006 = vmatprep.mubr.f32.mxu0 0.0
      %1007 = vmatmul.mubr.f32.gmra.mrb[0].mxu0 %v795
      %v1008 = vpop.f32.mrb[0].mxu0
      %v1009 = vadd.f32 0.0, %v1008
      %v1010 = vpop.f32.mrb[0].mxu0
      %1011 = vmatprep.mubr.f32.mxu0 0.0
      %1012 = vmatmul.mubr.f32.gmra.mrb[0].mxu0 %v798
      %v1013 = vpop.f32.mrb[0].mxu0
      %v1014 = vadd.f32 0.0, %v1013
      %v1015 = vpop.f32.mrb[0].mxu0
      %1016 = vmatprep.mubr.f32.mxu0 0.0
      %1017 = vmatmul.mubr.f32.gmra.mrb[0].mxu0 %v801
      %v1018 = vpop.f32.mrb[0].mxu0
      %v1019 = vadd.f32 0.0, %v1018
      %v1020 = vpop.f32.mrb[0].mxu0
      %1021 = vmatprep.mubr.f32.mxu0 0.0
      %1022 = vmatmul.mubr.f32.gmra.mrb[0].mxu0 %v804
      %v1023 = vpop.f32.mrb[0].mxu0
      %v1024 = vadd.f32 0.0, %v1023
      %v1025 = vpop.f32.mrb[0].mxu0
      %1026 = vmatprep.mubr.f32.mxu0 0.0
      %1027 = vmatmul.mubr.f32.gmra.mrb[0].mxu0 %v807
      %v1028 = vpop.f32.mrb[0].mxu0
      %v1029 = vadd.f32 0.0, %v1028
      %v1030 = vpop.f32.mrb[0].mxu0
      %1031 = vmatprep.mubr.f32.mxu0 0.0
      %1032 = vmatmul.mubr.f32.gmra.mrb[0].mxu0 %v810
      %v1033 = vpop.f32.mrb[0].mxu0
      %v1034 = vadd.f32 0.0, %v1033
      %v1035 = vpop.f32.mrb[0].mxu0
      %1036 = vdwg.mxu0
      %1037 = vxpose.xlu0.b32.start [1/16] %v959, 128
      %1038 = vxpose.xlu0.b32.cont [2/16] %v964, 128
      %1039 = vxpose.xlu0.b32.cont [3/16] 0.0, 128
      %1040 = vxpose.xlu0.b32.cont [4/16] 0.0, 128
      %1041 = vxpose.xlu0.b32.cont [5/16] 0.0, 128
      %1042 = vxpose.xlu0.b32.cont [6/16] 0.0, 128
      %1043 = vxpose.xlu0.b32.cont [7/16] 0.0, 128
      %1044 = vxpose.xlu0.b32.cont [8/16] 0.0, 128
      %1045 = vxpose.xlu0.b32.cont [9/16] 0.0, 128
      %1046 = vxpose.xlu0.b32.cont [10/16] 0.0, 128
      %1047 = vxpose.xlu0.b32.cont [11/16] 0.0, 128
      %1048 = vxpose.xlu0.b32.cont [12/16] 0.0, 128
      %1049 = vxpose.xlu0.b32.cont [13/16] 0.0, 128
      %1050 = vxpose.xlu0.b32.cont [14/16] 0.0, 128
      %1051 = vxpose.xlu0.b32.cont [15/16] 0.0, 128
      %1052 = vxpose.xlu0.b32.end [16/16] 0.0, 128
      %v1053 = vpop.trf.xlu0
      %v1054 = vpop.trf.xlu0
      %v1055 = vpop.trf.xlu0
      %v1056 = vpop.trf.xlu0
      %v1057 = vpop.trf.xlu0
      %v1058 = vpop.trf.xlu0
      %v1059 = vpop.trf.xlu0
      %v1060 = vpop.trf.xlu0
      %v1061 = vpop.trf.xlu0
      %v1062 = vpop.trf.xlu0
      %v1063 = vpop.trf.xlu0
      %v1064 = vpop.trf.xlu0
      %v1065 = vpop.trf.xlu0
      %v1066 = vpop.trf.xlu0
      %v1067 = vpop.trf.xlu0
      %v1068 = vpop.trf.xlu0
      %1069 = vxpose.xlu0.b32.start [1/16] %v969, 128
      %1070 = vxpose.xlu0.b32.cont [2/16] %v974, 128
      %1071 = vxpose.xlu0.b32.cont [3/16] 0.0, 128
      %1072 = vxpose.xlu0.b32.cont [4/16] 0.0, 128
      %1073 = vxpose.xlu0.b32.cont [5/16] 0.0, 128
      %1074 = vxpose.xlu0.b32.cont [6/16] 0.0, 128
      %1075 = vxpose.xlu0.b32.cont [7/16] 0.0, 128
      %1076 = vxpose.xlu0.b32.cont [8/16] 0.0, 128
      %1077 = vxpose.xlu0.b32.cont [9/16] 0.0, 128
      %1078 = vxpose.xlu0.b32.cont [10/16] 0.0, 128
      %1079 = vxpose.xlu0.b32.cont [11/16] 0.0, 128
      %1080 = vxpose.xlu0.b32.cont [12/16] 0.0, 128
      %1081 = vxpose.xlu0.b32.cont [13/16] 0.0, 128
      %1082 = vxpose.xlu0.b32.cont [14/16] 0.0, 128
      %1083 = vxpose.xlu0.b32.cont [15/16] 0.0, 128
      %1084 = vxpose.xlu0.b32.end [16/16] 0.0, 128
      %v1085 = vpop.trf.xlu0
      %v1086 = vpop.trf.xlu0
      %v1087 = vpop.trf.xlu0
      %v1088 = vpop.trf.xlu0
      %v1089 = vpop.trf.xlu0
      %v1090 = vpop.trf.xlu0
      %v1091 = vpop.trf.xlu0
      %v1092 = vpop.trf.xlu0
      %v1093 = vpop.trf.xlu0
      %v1094 = vpop.trf.xlu0
      %v1095 = vpop.trf.xlu0
      %v1096 = vpop.trf.xlu0
      %v1097 = vpop.trf.xlu0
      %v1098 = vpop.trf.xlu0
      %v1099 = vpop.trf.xlu0
      %v1100 = vpop.trf.xlu0
      %1101 = vxpose.xlu0.b32.start [1/16] %v979, 128
      %1102 = vxpose.xlu0.b32.cont [2/16] %v984, 128
      %1103 = vxpose.xlu0.b32.cont [3/16] 0.0, 128
      %1104 = vxpose.xlu0.b32.cont [4/16] 0.0, 128
      %1105 = vxpose.xlu0.b32.cont [5/16] 0.0, 128
      %1106 = vxpose.xlu0.b32.cont [6/16] 0.0, 128
      %1107 = vxpose.xlu0.b32.cont [7/16] 0.0, 128
      %1108 = vxpose.xlu0.b32.cont [8/16] 0.0, 128
      %1109 = vxpose.xlu0.b32.cont [9/16] 0.0, 128
      %1110 = vxpose.xlu0.b32.cont [10/16] 0.0, 128
      %1111 = vxpose.xlu0.b32.cont [11/16] 0.0, 128
      %1112 = vxpose.xlu0.b32.cont [12/16] 0.0, 128
      %1113 = vxpose.xlu0.b32.cont [13/16] 0.0, 128
      %1114 = vxpose.xlu0.b32.cont [14/16] 0.0, 128
      %1115 = vxpose.xlu0.b32.cont [15/16] 0.0, 128
      %1116 = vxpose.xlu0.b32.end [16/16] 0.0, 128
      %v1117 = vpop.trf.xlu0
      %v1118 = vpop.trf.xlu0
      %v1119 = vpop.trf.xlu0
      %v1120 = vpop.trf.xlu0
      %v1121 = vpop.trf.xlu0
      %v1122 = vpop.trf.xlu0
      %v1123 = vpop.trf.xlu0
      %v1124 = vpop.trf.xlu0
      %v1125 = vpop.trf.xlu0
      %v1126 = vpop.trf.xlu0
      %v1127 = vpop.trf.xlu0
      %v1128 = vpop.trf.xlu0
      %v1129 = vpop.trf.xlu0
      %v1130 = vpop.trf.xlu0
      %v1131 = vpop.trf.xlu0
      %v1132 = vpop.trf.xlu0
      %1133 = vxpose.xlu0.b32.start [1/16] %v989, 128
      %1134 = vxpose.xlu0.b32.cont [2/16] %v994, 128
      %1135 = vxpose.xlu0.b32.cont [3/16] 0.0, 128
      %1136 = vxpose.xlu0.b32.cont [4/16] 0.0, 128
      %1137 = vxpose.xlu0.b32.cont [5/16] 0.0, 128
      %1138 = vxpose.xlu0.b32.cont [6/16] 0.0, 128
      %1139 = vxpose.xlu0.b32.cont [7/16] 0.0, 128
      %1140 = vxpose.xlu0.b32.cont [8/16] 0.0, 128
      %1141 = vxpose.xlu0.b32.cont [9/16] 0.0, 128
      %1142 = vxpose.xlu0.b32.cont [10/16] 0.0, 128
      %1143 = vxpose.xlu0.b32.cont [11/16] 0.0, 128
      %1144 = vxpose.xlu0.b32.cont [12/16] 0.0, 128
      %1145 = vxpose.xlu0.b32.cont [13/16] 0.0, 128
      %1146 = vxpose.xlu0.b32.cont [14/16] 0.0, 128
      %1147 = vxpose.xlu0.b32.cont [15/16] 0.0, 128
      %1148 = vxpose.xlu0.b32.end [16/16] 0.0, 128
      %v1149 = vpop.trf.xlu0
      %v1150 = vpop.trf.xlu0
      %v1151 = vpop.trf.xlu0
      %v1152 = vpop.trf.xlu0
      %v1153 = vpop.trf.xlu0
      %v1154 = vpop.trf.xlu0
      %v1155 = vpop.trf.xlu0
      %v1156 = vpop.trf.xlu0
      %v1157 = vpop.trf.xlu0
      %v1158 = vpop.trf.xlu0
      %v1159 = vpop.trf.xlu0
      %v1160 = vpop.trf.xlu0
      %v1161 = vpop.trf.xlu0
      %v1162 = vpop.trf.xlu0
      %v1163 = vpop.trf.xlu0
      %v1164 = vpop.trf.xlu0
      %1165 = vxpose.xlu0.b32.start [1/16] %v999, 128
      %1166 = vxpose.xlu0.b32.cont [2/16] %v1004, 128
      %1167 = vxpose.xlu0.b32.cont [3/16] 0.0, 128
      %1168 = vxpose.xlu0.b32.cont [4/16] 0.0, 128
      %1169 = vxpose.xlu0.b32.cont [5/16] 0.0, 128
      %1170 = vxpose.xlu0.b32.cont [6/16] 0.0, 128
      %1171 = vxpose.xlu0.b32.cont [7/16] 0.0, 128
      %1172 = vxpose.xlu0.b32.cont [8/16] 0.0, 128
      %1173 = vxpose.xlu0.b32.cont [9/16] 0.0, 128
      %1174 = vxpose.xlu0.b32.cont [10/16] 0.0, 128
      %1175 = vxpose.xlu0.b32.cont [11/16] 0.0, 128
      %1176 = vxpose.xlu0.b32.cont [12/16] 0.0, 128
      %1177 = vxpose.xlu0.b32.cont [13/16] 0.0, 128
      %1178 = vxpose.xlu0.b32.cont [14/16] 0.0, 128
      %1179 = vxpose.xlu0.b32.cont [15/16] 0.0, 128
      %1180 = vxpose.xlu0.b32.end [16/16] 0.0, 128
      %v1181 = vpop.trf.xlu0
      %v1182 = vpop.trf.xlu0
      %v1183 = vpop.trf.xlu0
      %v1184 = vpop.trf.xlu0
      %v1185 = vpop.trf.xlu0
      %v1186 = vpop.trf.xlu0
      %v1187 = vpop.trf.xlu0
      %v1188 = vpop.trf.xlu0
      %v1189 = vpop.trf.xlu0
      %v1190 = vpop.trf.xlu0
      %v1191 = vpop.trf.xlu0
      %v1192 = vpop.trf.xlu0
      %v1193 = vpop.trf.xlu0
      %v1194 = vpop.trf.xlu0
      %v1195 = vpop.trf.xlu0
      %v1196 = vpop.trf.xlu0
      %1197 = vxpose.xlu0.b32.start [1/16] %v1009, 128
      %1198 = vxpose.xlu0.b32.cont [2/16] %v1014, 128
      %1199 = vxpose.xlu0.b32.cont [3/16] 0.0, 128
      %1200 = vxpose.xlu0.b32.cont [4/16] 0.0, 128
      %1201 = vxpose.xlu0.b32.cont [5/16] 0.0, 128
      %1202 = vxpose.xlu0.b32.cont [6/16] 0.0, 128
      %1203 = vxpose.xlu0.b32.cont [7/16] 0.0, 128
      %1204 = vxpose.xlu0.b32.cont [8/16] 0.0, 128
      %1205 = vxpose.xlu0.b32.cont [9/16] 0.0, 128
      %1206 = vxpose.xlu0.b32.cont [10/16] 0.0, 128
      %1207 = vxpose.xlu0.b32.cont [11/16] 0.0, 128
      %1208 = vxpose.xlu0.b32.cont [12/16] 0.0, 128
      %1209 = vxpose.xlu0.b32.cont [13/16] 0.0, 128
      %1210 = vxpose.xlu0.b32.cont [14/16] 0.0, 128
      %1211 = vxpose.xlu0.b32.cont [15/16] 0.0, 128
      %1212 = vxpose.xlu0.b32.end [16/16] 0.0, 128
      %v1213 = vpop.trf.xlu0
      %v1214 = vpop.trf.xlu0
      %v1215 = vpop.trf.xlu0
      %v1216 = vpop.trf.xlu0
      %v1217 = vpop.trf.xlu0
      %v1218 = vpop.trf.xlu0
      %v1219 = vpop.trf.xlu0
      %v1220 = vpop.trf.xlu0
      %v1221 = vpop.trf.xlu0
      %v1222 = vpop.trf.xlu0
      %v1223 = vpop.trf.xlu0
      %v1224 = vpop.trf.xlu0
      %v1225 = vpop.trf.xlu0
      %v1226 = vpop.trf.xlu0
      %v1227 = vpop.trf.xlu0
      %v1228 = vpop.trf.xlu0
      %1229 = vxpose.xlu0.b32.start [1/16] %v1019, 128
      %1230 = vxpose.xlu0.b32.cont [2/16] %v1024, 128
      %1231 = vxpose.xlu0.b32.cont [3/16] 0.0, 128
      %1232 = vxpose.xlu0.b32.cont [4/16] 0.0, 128
      %1233 = vxpose.xlu0.b32.cont [5/16] 0.0, 128
      %1234 = vxpose.xlu0.b32.cont [6/16] 0.0, 128
      %1235 = vxpose.xlu0.b32.cont [7/16] 0.0, 128
      %1236 = vxpose.xlu0.b32.cont [8/16] 0.0, 128
      %1237 = vxpose.xlu0.b32.cont [9/16] 0.0, 128
      %1238 = vxpose.xlu0.b32.cont [10/16] 0.0, 128
      %1239 = vxpose.xlu0.b32.cont [11/16] 0.0, 128
      %1240 = vxpose.xlu0.b32.cont [12/16] 0.0, 128
      %1241 = vxpose.xlu0.b32.cont [13/16] 0.0, 128
      %1242 = vxpose.xlu0.b32.cont [14/16] 0.0, 128
      %1243 = vxpose.xlu0.b32.cont [15/16] 0.0, 128
      %1244 = vxpose.xlu0.b32.end [16/16] 0.0, 128
      %v1245 = vpop.trf.xlu0
      %v1246 = vpop.trf.xlu0
      %v1247 = vpop.trf.xlu0
      %v1248 = vpop.trf.xlu0
      %v1249 = vpop.trf.xlu0
      %v1250 = vpop.trf.xlu0
      %v1251 = vpop.trf.xlu0
      %v1252 = vpop.trf.xlu0
      %v1253 = vpop.trf.xlu0
      %v1254 = vpop.trf.xlu0
      %v1255 = vpop.trf.xlu0
      %v1256 = vpop.trf.xlu0
      %v1257 = vpop.trf.xlu0
      %v1258 = vpop.trf.xlu0
      %v1259 = vpop.trf.xlu0
      %v1260 = vpop.trf.xlu0
      %1261 = vxpose.xlu0.b32.start [1/16] %v1029, 128
      %1262 = vxpose.xlu0.b32.cont [2/16] %v1034, 128
      %1263 = vxpose.xlu0.b32.cont [3/16] 0.0, 128
      %1264 = vxpose.xlu0.b32.cont [4/16] 0.0, 128
      %1265 = vxpose.xlu0.b32.cont [5/16] 0.0, 128
      %1266 = vxpose.xlu0.b32.cont [6/16] 0.0, 128
      %1267 = vxpose.xlu0.b32.cont [7/16] 0.0, 128
      %1268 = vxpose.xlu0.b32.cont [8/16] 0.0, 128
      %1269 = vxpose.xlu0.b32.cont [9/16] 0.0, 128
      %1270 = vxpose.xlu0.b32.cont [10/16] 0.0, 128
      %1271 = vxpose.xlu0.b32.cont [11/16] 0.0, 128
      %1272 = vxpose.xlu0.b32.cont [12/16] 0.0, 128
      %1273 = vxpose.xlu0.b32.cont [13/16] 0.0, 128
      %1274 = vxpose.xlu0.b32.cont [14/16] 0.0, 128
      %1275 = vxpose.xlu0.b32.cont [15/16] 0.0, 128
      %1276 = vxpose.xlu0.b32.end [16/16] 0.0, 128
      %v1277 = vpop.trf.xlu0
      %v1278 = vpop.trf.xlu0
      %v1279 = vpop.trf.xlu0
      %v1280 = vpop.trf.xlu0
      %v1281 = vpop.trf.xlu0
      %v1282 = vpop.trf.xlu0
      %v1283 = vpop.trf.xlu0
      %v1284 = vpop.trf.xlu0
      %v1285 = vpop.trf.xlu0
      %v1286 = vpop.trf.xlu0
      %v1287 = vpop.trf.xlu0
      %v1288 = vpop.trf.xlu0
      %v1289 = vpop.trf.xlu0
      %v1290 = vpop.trf.xlu0
      %v1291 = vpop.trf.xlu0
      %v1292 = vpop.trf.xlu0
      %v1293 = vadd.f32 %v879, %v1053
      %v1294 = vadd.f32 %v884, %v1054
      %v1295 = vadd.f32 %v889, %v1085
      %v1296 = vadd.f32 %v894, %v1086
      %v1297 = vadd.f32 %v899, %v1117
      %v1298 = vadd.f32 %v904, %v1118
      %v1299 = vadd.f32 %v909, %v1149
      %v1300 = vadd.f32 %v914, %v1150
      %v1301 = vadd.f32 %v919, %v1181
      %v1302 = vadd.f32 %v924, %v1182
      %v1303 = vadd.f32 %v929, %v1213
      %v1304 = vadd.f32 %v934, %v1214
      %v1305 = vadd.f32 %v939, %v1245
      %v1306 = vadd.f32 %v944, %v1246
      %v1307 = vadd.f32 %v949, %v1277
      %v1308 = vadd.f32 %v954, %v1278
      %v1309 = vsel %vm390, %v464, 0.0
      %1310 = vadd.xlane.f32.xlu0 %v1309
      %v1311 = vpop.xlane.xlu0 %1310
      %v1312 = vsel %vm390, %v469, 0.0
      %1313 = vadd.xlane.f32.xlu0 %v1312
      %v1314 = vpop.xlane.xlu0 %1313
      %v1315 = vsel %vm390, %v545, 0.0
      %1316 = vadd.xlane.f32.xlu0 %v1315
      %v1317 = vpop.xlane.xlu0 %1316
      %v1318 = vsel %vm390, %v550, 0.0
      %1319 = vadd.xlane.f32.xlu0 %v1318
      %v1320 = vpop.xlane.xlu0 %1319
      %v1321 = vsel %vm390, %v626, 0.0
      %1322 = vadd.xlane.f32.xlu0 %v1321
      %v1323 = vpop.xlane.xlu0 %1322
      %v1324 = vsel %vm390, %v631, 0.0
      %1325 = vadd.xlane.f32.xlu0 %v1324
      %v1326 = vpop.xlane.xlu0 %1325
      %v1327 = vsel %vm390, %v707, 0.0
      %1328 = vadd.xlane.f32.xlu0 %v1327
      %v1329 = vpop.xlane.xlu0 %1328
      %v1330 = vsel %vm390, %v712, 0.0
      %1331 = vadd.xlane.f32.xlu0 %v1330
      %v1332 = vpop.xlane.xlu0 %1331
      %v1333 = vadd.f32 %v1309, %v1312
      %v1334 = vrot.slane %v1333, 4
      %v1335 = vadd.f32 %v1333, %v1334
      %v1336 = vrot.slane %v1335, 2
      %v1337 = vadd.f32 %v1335, %v1336
      %v1338 = vrot.slane %v1337, 1
      %v1339 = vadd.f32 %v1337, %v1338
      %v1340 = vadd.f32 %v1315, %v1318
      %v1341 = vrot.slane %v1340, 4
      %v1342 = vadd.f32 %v1340, %v1341
      %v1343 = vrot.slane %v1342, 2
      %v1344 = vadd.f32 %v1342, %v1343
      %v1345 = vrot.slane %v1344, 1
      %v1346 = vadd.f32 %v1344, %v1345
      %v1347 = vadd.f32 %v1321, %v1324
      %v1348 = vrot.slane %v1347, 4
      %v1349 = vadd.f32 %v1347, %v1348
      %v1350 = vrot.slane %v1349, 2
      %v1351 = vadd.f32 %v1349, %v1350
      %v1352 = vrot.slane %v1351, 1
      %v1353 = vadd.f32 %v1351, %v1352
      %v1354 = vadd.f32 %v1327, %v1330
      %v1355 = vrot.slane %v1354, 4
      %v1356 = vadd.f32 %v1354, %v1355
      %v1357 = vrot.slane %v1356, 2
      %v1358 = vadd.f32 %v1356, %v1357
      %v1359 = vrot.slane %v1358, 1
      %v1360 = vadd.f32 %v1358, %v1359
      %v1361 = vmul.f32 %v464, %v342
      %v1362 = vmul.f32 %v469, %v343
      %v1363 = vmul.f32 %v545, %v342
      %v1364 = vmul.f32 %v550, %v343
      %v1365 = vmul.f32 %v626, %v342
      %v1366 = vmul.f32 %v631, %v343
      %v1367 = vmul.f32 %v707, %v342
      %v1368 = vmul.f32 %v712, %v343
      %v1369 = vsel %vm390, %v1361, 0.0
      %1370 = vadd.xlane.f32.xlu0 %v1369
      %v1371 = vpop.xlane.xlu0 %1370
      %v1372 = vsel %vm390, %v1362, 0.0
      %1373 = vadd.xlane.f32.xlu0 %v1372
      %v1374 = vpop.xlane.xlu0 %1373
      %v1375 = vsel %vm390, %v1363, 0.0
      %1376 = vadd.xlane.f32.xlu0 %v1375
      %v1377 = vpop.xlane.xlu0 %1376
      %v1378 = vsel %vm390, %v1364, 0.0
      %1379 = vadd.xlane.f32.xlu0 %v1378
      %v1380 = vpop.xlane.xlu0 %1379
      %v1381 = vsel %vm390, %v1365, 0.0
      %1382 = vadd.xlane.f32.xlu0 %v1381
      %v1383 = vpop.xlane.xlu0 %1382
      %v1384 = vsel %vm390, %v1366, 0.0
      %1385 = vadd.xlane.f32.xlu0 %v1384
      %v1386 = vpop.xlane.xlu0 %1385
      %v1387 = vsel %vm390, %v1367, 0.0
      %1388 = vadd.xlane.f32.xlu0 %v1387
      %v1389 = vpop.xlane.xlu0 %1388
      %v1390 = vsel %vm390, %v1368, 0.0
      %1391 = vadd.xlane.f32.xlu0 %v1390
      %v1392 = vpop.xlane.xlu0 %1391
      %v1401 = vlaneseq
      %v1402 = vshrl.u32 %v1401, 7
      %v1403 = vsub.s32 %v337, %v1402
      %v1404 = vrot.slane %v1311, %v1403
      %v1405 = vadd.s32 %v337, 4294967288
      %v1406 = vlaneseq
      %v1407 = vshrl.u32 %v1406, 7
      %v1408 = vsub.s32 %v1405, %v1407
      %v1409 = vrot.slane %v1314, %v1408
      %vm1410 = vcmask 130112
      %v1411 = vsel %vm1410, %v1409, %v1404
      %v1412 = vlaneseq
      %v1413 = vshrl.u32 %v1412, 7
      %v1414 = vsub.s32 %v337, %v1413
      %v1415 = vrot.slane %v1317, %v1414
      %v1416 = vlaneseq
      %v1417 = vshrl.u32 %v1416, 7
      %v1418 = vsub.s32 %v1405, %v1417
      %v1419 = vrot.slane %v1320, %v1418
      %v1420 = vsel %vm1410, %v1419, %v1415
      %v1421 = vlaneseq
      %v1422 = vshrl.u32 %v1421, 7
      %v1423 = vsub.s32 %v337, %v1422
      %v1424 = vrot.slane %v1323, %v1423
      %v1425 = vlaneseq
      %v1426 = vshrl.u32 %v1425, 7
      %v1427 = vsub.s32 %v1405, %v1426
      %v1428 = vrot.slane %v1326, %v1427
      %v1429 = vsel %vm1410, %v1428, %v1424
      %v1430 = vlaneseq
      %v1431 = vshrl.u32 %v1430, 7
      %v1432 = vsub.s32 %v337, %v1431
      %v1433 = vrot.slane %v1329, %v1432
      %v1434 = vlaneseq
      %v1435 = vshrl.u32 %v1434, 7
      %v1436 = vsub.s32 %v1405, %v1435
      %v1437 = vrot.slane %v1332, %v1436
      %v1438 = vsel %vm1410, %v1437, %v1433
      %vm1439 = vcmask 1041409
      %v1440 = vsel %vm1439, %v1420, %v1411
      %vm1441 = vcmask 1042434
      %v1442 = vsel %vm1441, %v1429, %v1440
      %vm1443 = vcmask 1043459
      %v1444 = vsel %vm1443, %v1438, %v1442
      %vm1446 = vcmask 125952
      %v1447 = vsel %vm1446, %v1444, 0.0
      %1448 = vadd.xlane.f32.xlu0 %v1447
      %v1449 = vpop.xlane.xlu0 %1448
      %v1458 = vlaneseq
      %v1459 = vshrl.u32 %v1458, 7
      %v1460 = vsub.s32 %v337, %v1459
      %v1461 = vrot.slane %v1371, %v1460
      %v1462 = vlaneseq
      %v1463 = vshrl.u32 %v1462, 7
      %v1464 = vsub.s32 %v1405, %v1463
      %v1465 = vrot.slane %v1374, %v1464
      %v1466 = vsel %vm1410, %v1465, %v1461
      %v1467 = vlaneseq
      %v1468 = vshrl.u32 %v1467, 7
      %v1469 = vsub.s32 %v337, %v1468
      %v1470 = vrot.slane %v1377, %v1469
      %v1471 = vlaneseq
      %v1472 = vshrl.u32 %v1471, 7
      %v1473 = vsub.s32 %v1405, %v1472
      %v1474 = vrot.slane %v1380, %v1473
      %v1475 = vsel %vm1410, %v1474, %v1470
      %v1476 = vlaneseq
      %v1477 = vshrl.u32 %v1476, 7
      %v1478 = vsub.s32 %v337, %v1477
      %v1479 = vrot.slane %v1383, %v1478
      %v1480 = vlaneseq
      %v1481 = vshrl.u32 %v1480, 7
      %v1482 = vsub.s32 %v1405, %v1481
      %v1483 = vrot.slane %v1386, %v1482
      %v1484 = vsel %vm1410, %v1483, %v1479
      %v1485 = vlaneseq
      %v1486 = vshrl.u32 %v1485, 7
      %v1487 = vsub.s32 %v337, %v1486
      %v1488 = vrot.slane %v1389, %v1487
      %v1489 = vlaneseq
      %v1490 = vshrl.u32 %v1489, 7
      %v1491 = vsub.s32 %v1405, %v1490
      %v1492 = vrot.slane %v1392, %v1491
      %v1493 = vsel %vm1410, %v1492, %v1488
      %v1494 = vsel %vm1439, %v1475, %v1466
      %v1495 = vsel %vm1441, %v1484, %v1494
      %v1496 = vsel %vm1443, %v1493, %v1495
      %vm1497 = vcmask 31744
      %v1499 = vsel %vm1497, %v386, 0
      %vm1501 = vcmask 1043456
      %v1502 = vsel %vm1501, %v1496, 0
      %1504 = vmatprep.subr.mxu0 0.0
      %1505 = vmatpush1.msra.mxu0 %v1502
      %1506 = vmatprep.subr.mxu0 0.0
      %1507 = vmatpush1.msra.mxu0 0.0
      %1508 = vmatprep.subr.mxu0 0.0
      %1509 = vmatpush1.msra.mxu0 0.0
      %1510 = vmatprep.subr.mxu0 0.0
      %1511 = vmatpush1.msra.mxu0 0.0
      %1512 = vmatprep.subr.mxu0 0.0
      %1513 = vmatpush1.msra.mxu0 0.0
      %1514 = vmatprep.subr.mxu0 0.0
      %1515 = vmatpush1.msra.mxu0 0.0
      %1516 = vmatprep.subr.mxu0 0.0
      %1517 = vmatpush1.msra.mxu0 0.0
      %1518 = vmatprep.subr.mxu0 0.0
      %1519 = vmatpush1.msra.mxu0 0.0
      %1520 = vmatprep.subr.mxu0 0.0
      %1521 = vmatpush1.msra.mxu0 0.0
      %1522 = vmatprep.subr.mxu0 0.0
      %1523 = vmatpush1.msra.mxu0 0.0
      %1524 = vmatprep.subr.mxu0 0.0
      %1525 = vmatpush1.msra.mxu0 0.0
      %1526 = vmatprep.subr.mxu0 0.0
      %1527 = vmatpush1.msra.mxu0 0.0
      %1528 = vmatprep.subr.mxu0 0.0
      %1529 = vmatpush1.msra.mxu0 0.0
      %1530 = vmatprep.subr.mxu0 0.0
      %1531 = vmatpush1.msra.mxu0 0.0
      %1532 = vmatprep.subr.mxu0 0.0
      %1533 = vmatpush1.msra.mxu0 0.0
      %1534 = vmatprep.subr.mxu0 0.0
      %1535 = vmatpush1.msra.mxu0 0.0
      %1536 = vmatprep.subr.mxu0 0.0
      %1537 = vmatpush1.msra.mxu0 0.0
      %1538 = vmatprep.subr.mxu0 0.0
      %1539 = vmatpush1.msra.mxu0 0.0
      %1540 = vmatprep.subr.mxu0 0.0
      %1541 = vmatpush1.msra.mxu0 0.0
      %1542 = vmatprep.subr.mxu0 0.0
      %1543 = vmatpush1.msra.mxu0 0.0
      %1544 = vmatprep.subr.mxu0 0.0
      %1545 = vmatpush1.msra.mxu0 0.0
      %1546 = vmatprep.subr.mxu0 0.0
      %1547 = vmatpush1.msra.mxu0 0.0
      %1548 = vmatprep.subr.mxu0 0.0
      %1549 = vmatpush1.msra.mxu0 0.0
      %1550 = vmatprep.subr.mxu0 0.0
      %1551 = vmatpush1.msra.mxu0 0.0
      %1552 = vmatprep.subr.mxu0 0.0
      %1553 = vmatpush1.msra.mxu0 0.0
      %1554 = vmatprep.subr.mxu0 0.0
      %1555 = vmatpush1.msra.mxu0 0.0
      %1556 = vmatprep.subr.mxu0 0.0
      %1557 = vmatpush1.msra.mxu0 0.0
      %1558 = vmatprep.subr.mxu0 0.0
      %1559 = vmatpush1.msra.mxu0 0.0
      %1560 = vmatprep.subr.mxu0 0.0
      %1561 = vmatpush1.msra.mxu0 0.0
      %1562 = vmatprep.subr.mxu0 0.0
      %1563 = vmatpush1.msra.mxu0 0.0
      %1564 = vmatprep.subr.mxu0 0.0
      %1565 = vmatpush1.msra.mxu0 0.0
      %1566 = vmatprep.subr.mxu0 0.0
      %1567 = vmatpush1.msra.mxu0 0.0
      %1568 = vmatprep.mubr.f32.mxu0 0.0
      %1569 = vmatmul.mubr.f32.gmra.mrb[0].mxu0 %v1499
      %v1570 = vpop.f32.mrb[0].mxu0
      %v1571 = vadd.f32 0.0, %v1570
      %v1572 = vpop.f32.mrb[0].mxu0
      %1573 = vdwg.mxu0
      %v1575 = vsel %vm1497, %v384, 0
      %v1577 = vsel %vm1501, %v1444, 0
      %1579 = vmatprep.subr.mxu0 0.0
      %1580 = vmatpush1.msra.mxu0 %v1577
      %1581 = vmatprep.subr.mxu0 0.0
      %1582 = vmatpush1.msra.mxu0 0.0
      %1583 = vmatprep.subr.mxu0 0.0
      %1584 = vmatpush1.msra.mxu0 0.0
      %1585 = vmatprep.subr.mxu0 0.0
      %1586 = vmatpush1.msra.mxu0 0.0
      %1587 = vmatprep.subr.mxu0 0.0
      %1588 = vmatpush1.msra.mxu0 0.0
      %1589 = vmatprep.subr.mxu0 0.0
      %1590 = vmatpush1.msra.mxu0 0.0
      %1591 = vmatprep.subr.mxu0 0.0
      %1592 = vmatpush1.msra.mxu0 0.0
      %1593 = vmatprep.subr.mxu0 0.0
      %1594 = vmatpush1.msra.mxu0 0.0
      %1595 = vmatprep.subr.mxu0 0.0
      %1596 = vmatpush1.msra.mxu0 0.0
      %1597 = vmatprep.subr.mxu0 0.0
      %1598 = vmatpush1.msra.mxu0 0.0
      %1599 = vmatprep.subr.mxu0 0.0
      %1600 = vmatpush1.msra.mxu0 0.0
      %1601 = vmatprep.subr.mxu0 0.0
      %1602 = vmatpush1.msra.mxu0 0.0
      %1603 = vmatprep.subr.mxu0 0.0
      %1604 = vmatpush1.msra.mxu0 0.0
      %1605 = vmatprep.subr.mxu0 0.0
      %1606 = vmatpush1.msra.mxu0 0.0
      %1607 = vmatprep.subr.mxu0 0.0
      %1608 = vmatpush1.msra.mxu0 0.0
      %1609 = vmatprep.subr.mxu0 0.0
      %1610 = vmatpush1.msra.mxu0 0.0
      %1611 = vmatprep.subr.mxu0 0.0
      %1612 = vmatpush1.msra.mxu0 0.0
      %1613 = vmatprep.subr.mxu0 0.0
      %1614 = vmatpush1.msra.mxu0 0.0
      %1615 = vmatprep.subr.mxu0 0.0
      %1616 = vmatpush1.msra.mxu0 0.0
      %1617 = vmatprep.subr.mxu0 0.0
      %1618 = vmatpush1.msra.mxu0 0.0
      %1619 = vmatprep.subr.mxu0 0.0
      %1620 = vmatpush1.msra.mxu0 0.0
      %1621 = vmatprep.subr.mxu0 0.0
      %1622 = vmatpush1.msra.mxu0 0.0
      %1623 = vmatprep.subr.mxu0 0.0
      %1624 = vmatpush1.msra.mxu0 0.0
      %1625 = vmatprep.subr.mxu0 0.0
      %1626 = vmatpush1.msra.mxu0 0.0
      %1627 = vmatprep.subr.mxu0 0.0
      %1628 = vmatpush1.msra.mxu0 0.0
      %1629 = vmatprep.subr.mxu0 0.0
      %1630 = vmatpush1.msra.mxu0 0.0
      %1631 = vmatprep.subr.mxu0 0.0
      %1632 = vmatpush1.msra.mxu0 0.0
      %1633 = vmatprep.subr.mxu0 0.0
      %1634 = vmatpush1.msra.mxu0 0.0
      %1635 = vmatprep.subr.mxu0 0.0
      %1636 = vmatpush1.msra.mxu0 0.0
      %1637 = vmatprep.subr.mxu0 0.0
      %1638 = vmatpush1.msra.mxu0 0.0
      %1639 = vmatprep.subr.mxu0 0.0
      %1640 = vmatpush1.msra.mxu0 0.0
      %1641 = vmatprep.subr.mxu0 0.0
      %1642 = vmatpush1.msra.mxu0 0.0
      %1643 = vmatprep.mubr.f32.mxu0 0.0
      %1644 = vmatmul.mubr.f32.gmra.mrb[0].mxu0 %v1575
      %v1645 = vpop.f32.mrb[0].mxu0
      %v1646 = vadd.f32 %v1571, %v1645
      %v1647 = vpop.f32.mrb[0].mxu0
      %1648 = vdwg.mxu0
      %v1650 = vsel %vm1497, %v388, 0
      %v1653 = vsel %vm1501, %v1449, 0
      %1655 = vmatprep.subr.mxu0 0.0
      %1656 = vmatpush1.msra.mxu0 %v1653
      %1657 = vmatprep.subr.mxu0 0.0
      %1658 = vmatpush1.msra.mxu0 0.0
      %1659 = vmatprep.subr.mxu0 0.0
      %1660 = vmatpush1.msra.mxu0 0.0
      %1661 = vmatprep.subr.mxu0 0.0
      %1662 = vmatpush1.msra.mxu0 0.0
      %1663 = vmatprep.subr.mxu0 0.0
      %1664 = vmatpush1.msra.mxu0 0.0
      %1665 = vmatprep.subr.mxu0 0.0
      %1666 = vmatpush1.msra.mxu0 0.0
      %1667 = vmatprep.subr.mxu0 0.0
      %1668 = vmatpush1.msra.mxu0 0.0
      %1669 = vmatprep.subr.mxu0 0.0
      %1670 = vmatpush1.msra.mxu0 0.0
      %1671 = vmatprep.subr.mxu0 0.0
      %1672 = vmatpush1.msra.mxu0 0.0
      %1673 = vmatprep.subr.mxu0 0.0
      %1674 = vmatpush1.msra.mxu0 0.0
      %1675 = vmatprep.subr.mxu0 0.0
      %1676 = vmatpush1.msra.mxu0 0.0
      %1677 = vmatprep.subr.mxu0 0.0
      %1678 = vmatpush1.msra.mxu0 0.0
      %1679 = vmatprep.subr.mxu0 0.0
      %1680 = vmatpush1.msra.mxu0 0.0
      %1681 = vmatprep.subr.mxu0 0.0
      %1682 = vmatpush1.msra.mxu0 0.0
      %1683 = vmatprep.subr.mxu0 0.0
      %1684 = vmatpush1.msra.mxu0 0.0
      %1685 = vmatprep.subr.mxu0 0.0
      %1686 = vmatpush1.msra.mxu0 0.0
      %1687 = vmatprep.subr.mxu0 0.0
      %1688 = vmatpush1.msra.mxu0 0.0
      %1689 = vmatprep.subr.mxu0 0.0
      %1690 = vmatpush1.msra.mxu0 0.0
      %1691 = vmatprep.subr.mxu0 0.0
      %1692 = vmatpush1.msra.mxu0 0.0
      %1693 = vmatprep.subr.mxu0 0.0
      %1694 = vmatpush1.msra.mxu0 0.0
      %1695 = vmatprep.subr.mxu0 0.0
      %1696 = vmatpush1.msra.mxu0 0.0
      %1697 = vmatprep.subr.mxu0 0.0
      %1698 = vmatpush1.msra.mxu0 0.0
      %1699 = vmatprep.subr.mxu0 0.0
      %1700 = vmatpush1.msra.mxu0 0.0
      %1701 = vmatprep.subr.mxu0 0.0
      %1702 = vmatpush1.msra.mxu0 0.0
      %1703 = vmatprep.subr.mxu0 0.0
      %1704 = vmatpush1.msra.mxu0 0.0
      %1705 = vmatprep.subr.mxu0 0.0
      %1706 = vmatpush1.msra.mxu0 0.0
      %1707 = vmatprep.subr.mxu0 0.0
      %1708 = vmatpush1.msra.mxu0 0.0
      %1709 = vmatprep.subr.mxu0 0.0
      %1710 = vmatpush1.msra.mxu0 0.0
      %1711 = vmatprep.subr.mxu0 0.0
      %1712 = vmatpush1.msra.mxu0 0.0
      %1713 = vmatprep.subr.mxu0 0.0
      %1714 = vmatpush1.msra.mxu0 0.0
      %1715 = vmatprep.subr.mxu0 0.0
      %1716 = vmatpush1.msra.mxu0 0.0
      %1717 = vmatprep.subr.mxu0 0.0
      %1718 = vmatpush1.msra.mxu0 0.0
      %1719 = vmatprep.mubr.f32.mxu0 0.0
      %1720 = vmatmul.mubr.f32.gmra.mrb[0].mxu0 %v1650
      %v1721 = vpop.f32.mrb[0].mxu0
      %v1722 = vadd.f32 0.0, %v1721
      %v1723 = vpop.f32.mrb[0].mxu0
      %1724 = vdwg.mxu0
      %1726 = vset.pattern.permute.xlu0 0
      %1727 = vperm.xlu0 %1726, %v1722
      %v1728 = vpop.permute.xlu0 %1727
      %v1730 = vadd.f32 %v1646, %v1728
      %1732 = vset.pattern.permute.xlu0 0
      %1733 = vperm.xlu0 %1732, %v389
      %v1734 = vpop.permute.xlu0 %1733
      %v1736 = vadd.f32 %v1730, %v1734
      %v1738 = vsel %vm1497, %v387, 0
      %1740 = vmatprep.subr.mxu0 0.0
      %1741 = vmatpush1.msra.mxu0 %v1502
      %1742 = vmatprep.subr.mxu0 0.0
      %1743 = vmatpush1.msra.mxu0 0.0
      %1744 = vmatprep.subr.mxu0 0.0
      %1745 = vmatpush1.msra.mxu0 0.0
      %1746 = vmatprep.subr.mxu0 0.0
      %1747 = vmatpush1.msra.mxu0 0.0
      %1748 = vmatprep.subr.mxu0 0.0
      %1749 = vmatpush1.msra.mxu0 0.0
      %1750 = vmatprep.subr.mxu0 0.0
      %1751 = vmatpush1.msra.mxu0 0.0
      %1752 = vmatprep.subr.mxu0 0.0
      %1753 = vmatpush1.msra.mxu0 0.0
      %1754 = vmatprep.subr.mxu0 0.0
      %1755 = vmatpush1.msra.mxu0 0.0
      %1756 = vmatprep.subr.mxu0 0.0
      %1757 = vmatpush1.msra.mxu0 0.0
      %1758 = vmatprep.subr.mxu0 0.0
      %1759 = vmatpush1.msra.mxu0 0.0
      %1760 = vmatprep.subr.mxu0 0.0
      %1761 = vmatpush1.msra.mxu0 0.0
      %1762 = vmatprep.subr.mxu0 0.0
      %1763 = vmatpush1.msra.mxu0 0.0
      %1764 = vmatprep.subr.mxu0 0.0
      %1765 = vmatpush1.msra.mxu0 0.0
      %1766 = vmatprep.subr.mxu0 0.0
      %1767 = vmatpush1.msra.mxu0 0.0
      %1768 = vmatprep.subr.mxu0 0.0
      %1769 = vmatpush1.msra.mxu0 0.0
      %1770 = vmatprep.subr.mxu0 0.0
      %1771 = vmatpush1.msra.mxu0 0.0
      %1772 = vmatprep.subr.mxu0 0.0
      %1773 = vmatpush1.msra.mxu0 0.0
      %1774 = vmatprep.subr.mxu0 0.0
      %1775 = vmatpush1.msra.mxu0 0.0
      %1776 = vmatprep.subr.mxu0 0.0
      %1777 = vmatpush1.msra.mxu0 0.0
      %1778 = vmatprep.subr.mxu0 0.0
      %1779 = vmatpush1.msra.mxu0 0.0
      %1780 = vmatprep.subr.mxu0 0.0
      %1781 = vmatpush1.msra.mxu0 0.0
      %1782 = vmatprep.subr.mxu0 0.0
      %1783 = vmatpush1.msra.mxu0 0.0
      %1784 = vmatprep.subr.mxu0 0.0
      %1785 = vmatpush1.msra.mxu0 0.0
      %1786 = vmatprep.subr.mxu0 0.0
      %1787 = vmatpush1.msra.mxu0 0.0
      %1788 = vmatprep.subr.mxu0 0.0
      %1789 = vmatpush1.msra.mxu0 0.0
      %1790 = vmatprep.subr.mxu0 0.0
      %1791 = vmatpush1.msra.mxu0 0.0
      %1792 = vmatprep.subr.mxu0 0.0
      %1793 = vmatpush1.msra.mxu0 0.0
      %1794 = vmatprep.subr.mxu0 0.0
      %1795 = vmatpush1.msra.mxu0 0.0
      %1796 = vmatprep.subr.mxu0 0.0
      %1797 = vmatpush1.msra.mxu0 0.0
      %1798 = vmatprep.subr.mxu0 0.0
      %1799 = vmatpush1.msra.mxu0 0.0
      %1800 = vmatprep.subr.mxu0 0.0
      %1801 = vmatpush1.msra.mxu0 0.0
      %1802 = vmatprep.subr.mxu0 0.0
      %1803 = vmatpush1.msra.mxu0 0.0
      %1804 = vmatprep.mubr.f32.mxu0 0.0
      %1805 = vmatmul.mubr.f32.gmra.mrb[0].mxu0 %v1738
      %v1806 = vpop.f32.mrb[0].mxu0
      %v1807 = vadd.f32 0.0, %v1806
      %v1808 = vpop.f32.mrb[0].mxu0
      %1809 = vdwg.mxu0
      %v1814 = vsel %vm1439, %v1346, %v1339
      %v1815 = vsel %vm1441, %v1353, %v1814
      %v1816 = vsel %vm1443, %v1360, %v1815
      %v1818 = vsel %vm1497, %v385, 0
      %v1820 = vsel %vm1501, %v1816, 0
      %1822 = vmatprep.subr.mxu0 0.0
      %1823 = vmatpush1.msra.mxu0 %v1820
      %1824 = vmatprep.subr.mxu0 0.0
      %1825 = vmatpush1.msra.mxu0 0.0
      %1826 = vmatprep.subr.mxu0 0.0
      %1827 = vmatpush1.msra.mxu0 0.0
      %1828 = vmatprep.subr.mxu0 0.0
      %1829 = vmatpush1.msra.mxu0 0.0
      %1830 = vmatprep.subr.mxu0 0.0
      %1831 = vmatpush1.msra.mxu0 0.0
      %1832 = vmatprep.subr.mxu0 0.0
      %1833 = vmatpush1.msra.mxu0 0.0
      %1834 = vmatprep.subr.mxu0 0.0
      %1835 = vmatpush1.msra.mxu0 0.0
      %1836 = vmatprep.subr.mxu0 0.0
      %1837 = vmatpush1.msra.mxu0 0.0
      %1838 = vmatprep.subr.mxu0 0.0
      %1839 = vmatpush1.msra.mxu0 0.0
      %1840 = vmatprep.subr.mxu0 0.0
      %1841 = vmatpush1.msra.mxu0 0.0
      %1842 = vmatprep.subr.mxu0 0.0
      %1843 = vmatpush1.msra.mxu0 0.0
      %1844 = vmatprep.subr.mxu0 0.0
      %1845 = vmatpush1.msra.mxu0 0.0
      %1846 = vmatprep.subr.mxu0 0.0
      %1847 = vmatpush1.msra.mxu0 0.0
      %1848 = vmatprep.subr.mxu0 0.0
      %1849 = vmatpush1.msra.mxu0 0.0
      %1850 = vmatprep.subr.mxu0 0.0
      %1851 = vmatpush1.msra.mxu0 0.0
      %1852 = vmatprep.subr.mxu0 0.0
      %1853 = vmatpush1.msra.mxu0 0.0
      %1854 = vmatprep.subr.mxu0 0.0
      %1855 = vmatpush1.msra.mxu0 0.0
      %1856 = vmatprep.subr.mxu0 0.0
      %1857 = vmatpush1.msra.mxu0 0.0
      %1858 = vmatprep.subr.mxu0 0.0
      %1859 = vmatpush1.msra.mxu0 0.0
      %1860 = vmatprep.subr.mxu0 0.0
      %1861 = vmatpush1.msra.mxu0 0.0
      %1862 = vmatprep.subr.mxu0 0.0
      %1863 = vmatpush1.msra.mxu0 0.0
      %1864 = vmatprep.subr.mxu0 0.0
      %1865 = vmatpush1.msra.mxu0 0.0
      %1866 = vmatprep.subr.mxu0 0.0
      %1867 = vmatpush1.msra.mxu0 0.0
      %1868 = vmatprep.subr.mxu0 0.0
      %1869 = vmatpush1.msra.mxu0 0.0
      %1870 = vmatprep.subr.mxu0 0.0
      %1871 = vmatpush1.msra.mxu0 0.0
      %1872 = vmatprep.subr.mxu0 0.0
      %1873 = vmatpush1.msra.mxu0 0.0
      %1874 = vmatprep.subr.mxu0 0.0
      %1875 = vmatpush1.msra.mxu0 0.0
      %1876 = vmatprep.subr.mxu0 0.0
      %1877 = vmatpush1.msra.mxu0 0.0
      %1878 = vmatprep.subr.mxu0 0.0
      %1879 = vmatpush1.msra.mxu0 0.0
      %1880 = vmatprep.subr.mxu0 0.0
      %1881 = vmatpush1.msra.mxu0 0.0
      %1882 = vmatprep.subr.mxu0 0.0
      %1883 = vmatpush1.msra.mxu0 0.0
      %1884 = vmatprep.subr.mxu0 0.0
      %1885 = vmatpush1.msra.mxu0 0.0
      %1886 = vmatprep.mubr.f32.mxu0 0.0
      %1887 = vmatmul.mubr.f32.gmra.mrb[0].mxu0 %v1818
      %v1888 = vpop.f32.mrb[0].mxu0
      %v1889 = vadd.f32 %v1807, %v1888
      %v1890 = vpop.f32.mrb[0].mxu0
      %1891 = vdwg.mxu0
      %v1892 = vlaneseq
      %v1893 = vshrl.u32 %v1892, 7
      %v1894 = vsub.s32 0, %v1893
      %v1895 = vrot.slane %v1736, %v1894
      %1897 = vbcast.lane.b32.xlu0 %v1895, 256
      %v1898 = vpop.permute.xlu0 %1897
      %s1900 = sor.u32 256, 8
      %1901 = vbcast.lane.b32.xlu0 %v1895, %s1900
      %v1902 = vpop.permute.xlu0 %1901
      %v1903 = vlaneseq
      %v1904 = vshrl.u32 %v1903, 7
      %v1905 = vsub.s32 1, %v1904
      %v1906 = vrot.slane %v1736, %v1905
      %1908 = vbcast.lane.b32.xlu0 %v1906, 256
      %v1909 = vpop.permute.xlu0 %1908
      %s1911 = sor.u32 256, 8
      %1912 = vbcast.lane.b32.xlu0 %v1906, %s1911
      %v1913 = vpop.permute.xlu0 %1912
      %v1914 = vlaneseq
      %v1915 = vshrl.u32 %v1914, 7
      %v1916 = vsub.s32 2, %v1915
      %v1917 = vrot.slane %v1736, %v1916
      %1919 = vbcast.lane.b32.xlu0 %v1917, 256
      %v1920 = vpop.permute.xlu0 %1919
      %s1922 = sor.u32 256, 8
      %1923 = vbcast.lane.b32.xlu0 %v1917, %s1922
      %v1924 = vpop.permute.xlu0 %1923
      %v1925 = vlaneseq
      %v1926 = vshrl.u32 %v1925, 7
      %v1927 = vsub.s32 3, %v1926
      %v1928 = vrot.slane %v1736, %v1927
      %1930 = vbcast.lane.b32.xlu0 %v1928, 256
      %v1931 = vpop.permute.xlu0 %1930
      %s1933 = sor.u32 256, 8
      %1934 = vbcast.lane.b32.xlu0 %v1928, %s1933
      %v1935 = vpop.permute.xlu0 %1934
      %v1936 = vlaneseq
      %v1937 = vshrl.u32 %v1936, 7
      %v1938 = vsub.s32 4, %v1937
      %v1939 = vrot.slane %v1736, %v1938
      %1941 = vbcast.lane.b32.xlu0 %v1939, 256
      %v1942 = vpop.permute.xlu0 %1941
      %s1944 = sor.u32 256, 8
      %1945 = vbcast.lane.b32.xlu0 %v1939, %s1944
      %v1946 = vpop.permute.xlu0 %1945
      %v1947 = vlaneseq
      %v1948 = vshrl.u32 %v1947, 7
      %v1949 = vsub.s32 5, %v1948
      %v1950 = vrot.slane %v1736, %v1949
      %1952 = vbcast.lane.b32.xlu0 %v1950, 256
      %v1953 = vpop.permute.xlu0 %1952
      %s1955 = sor.u32 256, 8
      %1956 = vbcast.lane.b32.xlu0 %v1950, %s1955
      %v1957 = vpop.permute.xlu0 %1956
      %v1958 = vlaneseq
      %v1959 = vshrl.u32 %v1958, 7
      %v1960 = vsub.s32 6, %v1959
      %v1961 = vrot.slane %v1736, %v1960
      %1963 = vbcast.lane.b32.xlu0 %v1961, 256
      %v1964 = vpop.permute.xlu0 %1963
      %s1966 = sor.u32 256, 8
      %1967 = vbcast.lane.b32.xlu0 %v1961, %s1966
      %v1968 = vpop.permute.xlu0 %1967
      %v1969 = vlaneseq
      %v1970 = vshrl.u32 %v1969, 7
      %v1971 = vsub.s32 7, %v1970
      %v1972 = vrot.slane %v1736, %v1971
      %1974 = vbcast.lane.b32.xlu0 %v1972, 256
      %v1975 = vpop.permute.xlu0 %1974
      %s1977 = sor.u32 256, 8
      %1978 = vbcast.lane.b32.xlu0 %v1972, %s1977
      %v1979 = vpop.permute.xlu0 %1978
      %v1980 = vadd.f32 %v1293, %v1898
      %v1981 = vadd.f32 %v1294, %v1902
      %v1982 = vadd.f32 %v1295, %v1909
      %v1983 = vadd.f32 %v1296, %v1913
      %v1984 = vadd.f32 %v1297, %v1920
      %v1985 = vadd.f32 %v1298, %v1924
      %v1986 = vadd.f32 %v1299, %v1931
      %v1987 = vadd.f32 %v1300, %v1935
      %v1988 = vadd.f32 %v1301, %v1942
      %v1989 = vadd.f32 %v1302, %v1946
      %v1990 = vadd.f32 %v1303, %v1953
      %v1991 = vadd.f32 %v1304, %v1957
      %v1992 = vadd.f32 %v1305, %v1964
      %v1993 = vadd.f32 %v1306, %v1968
      %v1994 = vadd.f32 %v1307, %v1975
      %v1995 = vadd.f32 %v1308, %v1979
      %v1997 = vcombine.high %v1889, %v1889
      %v1999 = vunpack.c.l.s4 1966171168
      %v2000 = vunpack.c.0.s8 %v1999
      %v2001 = vlaneseq
      %v2002 = vshrl.u32 %v2001, 7
      %v2003 = vsub.s32 %v2000, %v2002
      %v2004 = vrot.slane %v1889, %v2003
      %v2006 = vunpack.c.l.s4 1966171168
      %v2007 = vunpack.c.0.s8 %v2006
      %v2008 = vlaneseq
      %v2009 = vshrl.u32 %v2008, 7
      %v2010 = vsub.s32 %v2007, %v2009
      %v2011 = vrot.slane %v1997, %v2010
      %v2012 = vcombine.high %v2004, %v2004
      %v2013 = vcombine.high %v2011, %v2011
      %v2015 = vunpack.c.l.s4 1966171168
      %v2016 = vunpack.c.0.s8 %v2015
      %v2017 = vlaneseq
      %v2018 = vshrl.u32 %v2017, 7
      %v2019 = vsub.s32 %v2016, %v2018
      %v2020 = vrot.slane %v2004, %v2019
      %v2022 = vunpack.c.l.s4 1966171168
      %v2023 = vunpack.c.0.s8 %v2022
      %v2024 = vlaneseq
      %v2025 = vshrl.u32 %v2024, 7
      %v2026 = vsub.s32 %v2023, %v2025
      %v2027 = vrot.slane %v2011, %v2026
      %v2029 = vunpack.c.l.s4 1966171168
      %v2030 = vunpack.c.0.s8 %v2029
      %v2031 = vlaneseq
      %v2032 = vshrl.u32 %v2031, 7
      %v2033 = vsub.s32 %v2030, %v2032
      %v2034 = vrot.slane %v2012, %v2033
      %v2036 = vunpack.c.l.s4 1966171168
      %v2037 = vunpack.c.0.s8 %v2036
      %v2038 = vlaneseq
      %v2039 = vshrl.u32 %v2038, 7
      %v2040 = vsub.s32 %v2037, %v2039
      %v2041 = vrot.slane %v2013, %v2040
      %v2042 = vcombine.high %v2020, %v2020
      %v2043 = vcombine.high %v2027, %v2027
      %v2044 = vcombine.high %v2034, %v2034
      %v2045 = vcombine.high %v2041, %v2041
      %v2046 = vlaneseq
      %v2047 = vshrl.u32 %v2046, 7
      %v2048 = vsub.s32 0, %v2047
      %v2049 = vrot.slane %v2020, %v2048
      %v2050 = vlaneseq
      %v2051 = vshrl.u32 %v2050, 7
      %v2052 = vsub.s32 0, %v2051
      %v2053 = vrot.slane %v2034, %v2052
      %v2054 = vlaneseq
      %v2055 = vshrl.u32 %v2054, 7
      %v2056 = vsub.s32 0, %v2055
      %v2057 = vrot.slane %v2042, %v2056
      %v2058 = vlaneseq
      %v2059 = vshrl.u32 %v2058, 7
      %v2060 = vsub.s32 0, %v2059
      %v2061 = vrot.slane %v2044, %v2060
      %v2062 = vlaneseq
      %v2063 = vshrl.u32 %v2062, 7
      %v2064 = vsub.s32 0, %v2063
      %v2065 = vrot.slane %v2027, %v2064
      %v2066 = vlaneseq
      %v2067 = vshrl.u32 %v2066, 7
      %v2068 = vsub.s32 0, %v2067
      %v2069 = vrot.slane %v2041, %v2068
      %v2070 = vlaneseq
      %v2071 = vshrl.u32 %v2070, 7
      %v2072 = vsub.s32 0, %v2071
      %v2073 = vrot.slane %v2043, %v2072
      %v2074 = vlaneseq
      %v2075 = vshrl.u32 %v2074, 7
      %v2076 = vsub.s32 0, %v2075
      %v2077 = vrot.slane %v2045, %v2076
      %v2086 = vadd.f32 %v1980, %v2049
      %v2087 = vadd.f32 %v1981, %v2049
      %v2088 = vadd.f32 %v1982, %v2053
      %v2089 = vadd.f32 %v1983, %v2053
      %v2090 = vadd.f32 %v1984, %v2057
      %v2091 = vadd.f32 %v1985, %v2057
      %v2092 = vadd.f32 %v1986, %v2061
      %v2093 = vadd.f32 %v1987, %v2061
      %v2094 = vadd.f32 %v1988, %v2065
      %v2095 = vadd.f32 %v1989, %v2065
      %v2096 = vadd.f32 %v1990, %v2069
      %v2097 = vadd.f32 %v1991, %v2069
      %v2098 = vadd.f32 %v1992, %v2073
      %v2099 = vadd.f32 %v1993, %v2073
      %v2100 = vadd.f32 %v1994, %v2077
      %v2101 = vadd.f32 %v1995, %v2077
      %v2102 = vmax.f32 %v2086, 0.0
      %v2103 = vmax.f32 %v2087, 0.0
      %v2104 = vmax.f32 %v2088, 0.0
      %v2105 = vmax.f32 %v2089, 0.0
      %v2106 = vmax.f32 %v2090, 0.0
      %v2107 = vmax.f32 %v2091, 0.0
      %v2108 = vmax.f32 %v2092, 0.0
      %v2109 = vmax.f32 %v2093, 0.0
      %v2110 = vmax.f32 %v2094, 0.0
      %v2111 = vmax.f32 %v2095, 0.0
      %v2112 = vmax.f32 %v2096, 0.0
      %v2113 = vmax.f32 %v2097, 0.0
      %v2114 = vmax.f32 %v2098, 0.0
      %v2115 = vmax.f32 %v2099, 0.0
      %v2116 = vmax.f32 %v2100, 0.0
      %v2117 = vmax.f32 %v2101, 0.0
      %v2118 = vld [vmem:[%s4] sm:$0xff]
      %v2119 = vld [vmem:[%s4 + $0x8] sm:$0xff]
      %v2120 = vld [vmem:[%s4 + $0x10] sm:$0xff]
      %v2121 = vld [vmem:[%s4 + $0x18] sm:$0xff]
      %v2122 = vld [vmem:[%s4 + $0x20] sm:$0xff]
      %v2123 = vld [vmem:[%s4 + $0x28] sm:$0xff]
      %v2124 = vld [vmem:[%s4 + $0x30] sm:$0xff]
      %v2125 = vld [vmem:[%s4 + $0x38] sm:$0xff]
      %v2126 = vld [vmem:[%s4 + $0x40] sm:$0xff]
      %v2127 = vld [vmem:[%s4 + $0x48] sm:$0xff]
      %v2128 = vld [vmem:[%s4 + $0x50] sm:$0xff]
      %v2129 = vld [vmem:[%s4 + $0x58] sm:$0xff]
      %v2130 = vld [vmem:[%s4 + $0x60] sm:$0xff]
      %v2131 = vld [vmem:[%s4 + $0x68] sm:$0xff]
      %v2132 = vld [vmem:[%s4 + $0x70] sm:$0xff]
      %v2133 = vld [vmem:[%s4 + $0x78] sm:$0xff]
      %v2134 = vld [vmem:[%s4 + $0x80] sm:$0xff]
      %v2135 = vld [vmem:[%s4 + $0x88] sm:$0xff]
      %v2136 = vld [vmem:[%s4 + $0x90] sm:$0xff]
      %v2137 = vld [vmem:[%s4 + $0x98] sm:$0xff]
      %v2138 = vld [vmem:[%s4 + $0xa0] sm:$0xff]
      %v2139 = vld [vmem:[%s4 + $0xa8] sm:$0xff]
      %v2140 = vld [vmem:[%s4 + $0xb0] sm:$0xff]
      %v2141 = vld [vmem:[%s4 + $0xb8] sm:$0xff]
      %v2142 = vld [vmem:[%s4 + $0xc0] sm:$0xff]
      %v2143 = vld [vmem:[%s4 + $0xc8] sm:$0xff]
      %v2144 = vld [vmem:[%s4 + $0xd0] sm:$0xff]
      %v2145 = vld [vmem:[%s4 + $0xd8] sm:$0xff]
      %v2146 = vld [vmem:[%s4 + $0xe0] sm:$0xff]
      %v2147 = vld [vmem:[%s4 + $0xe8] sm:$0xff]
      %v2148 = vld [vmem:[%s4 + $0xf0] sm:$0xff]
      %v2149 = vld [vmem:[%s4 + $0xf8] sm:$0xff]
      %v2150 = vld [vmem:[%s5] sm:$0xff]
      %v2151 = vld [vmem:[%s5 + $0x8] sm:$0xff]
      %v2152 = vld [vmem:[%s5 + $0x10] sm:$0xff]
      %v2153 = vld [vmem:[%s5 + $0x18] sm:$0xff]
      %v2154 = vld [vmem:[%s5 + $0x20] sm:$0xff]
      %v2155 = vld [vmem:[%s6] sm:$0xff]
      %v2157 = vsel %vm390, %v2102, 0
      %v2160 = vsel %vm390, %v2103, 0
      %2162 = vmatprep.subr.mxu0 0.0
      %2163 = vmatpush1.msra.mxu0 %v2102
      %2164 = vmatprep.subr.mxu0 0.0
      %2165 = vmatpush1.msra.mxu0 %v2103
      %2166 = vmatprep.subr.mxu0 0.0
      %2167 = vmatpush1.msra.mxu0 0.0
      %2168 = vmatprep.subr.mxu0 0.0
      %2169 = vmatpush1.msra.mxu0 0.0
      %2170 = vmatprep.subr.mxu0 0.0
      %2171 = vmatpush1.msra.mxu0 0.0
      %2172 = vmatprep.subr.mxu0 0.0
      %2173 = vmatpush1.msra.mxu0 0.0
      %2174 = vmatprep.subr.mxu0 0.0
      %2175 = vmatpush1.msra.mxu0 0.0
      %2176 = vmatprep.subr.mxu0 0.0
      %2177 = vmatpush1.msra.mxu0 0.0
      %2178 = vmatprep.subr.mxu0 0.0
      %2179 = vmatpush1.msra.mxu0 0.0
      %2180 = vmatprep.subr.mxu0 0.0
      %2181 = vmatpush1.msra.mxu0 0.0
      %2182 = vmatprep.subr.mxu0 0.0
      %2183 = vmatpush1.msra.mxu0 0.0
      %2184 = vmatprep.subr.mxu0 0.0
      %2185 = vmatpush1.msra.mxu0 0.0
      %2186 = vmatprep.subr.mxu0 0.0
      %2187 = vmatpush1.msra.mxu0 0.0
      %2188 = vmatprep.subr.mxu0 0.0
      %2189 = vmatpush1.msra.mxu0 0.0
      %2190 = vmatprep.subr.mxu0 0.0
      %2191 = vmatpush1.msra.mxu0 0.0
      %2192 = vmatprep.subr.mxu0 0.0
      %2193 = vmatpush1.msra.mxu0 0.0
      %2194 = vmatprep.subr.mxu0 0.0
      %2195 = vmatpush1.msra.mxu0 0.0
      %2196 = vmatprep.subr.mxu0 0.0
      %2197 = vmatpush1.msra.mxu0 0.0
      %2198 = vmatprep.subr.mxu0 0.0
      %2199 = vmatpush1.msra.mxu0 0.0
      %2200 = vmatprep.subr.mxu0 0.0
      %2201 = vmatpush1.msra.mxu0 0.0
      %2202 = vmatprep.subr.mxu0 0.0
      %2203 = vmatpush1.msra.mxu0 0.0
      %2204 = vmatprep.subr.mxu0 0.0
      %2205 = vmatpush1.msra.mxu0 0.0
      %2206 = vmatprep.subr.mxu0 0.0
      %2207 = vmatpush1.msra.mxu0 0.0
      %2208 = vmatprep.subr.mxu0 0.0
      %2209 = vmatpush1.msra.mxu0 0.0
      %2210 = vmatprep.subr.mxu0 0.0
      %2211 = vmatpush1.msra.mxu0 0.0
      %2212 = vmatprep.subr.mxu0 0.0
      %2213 = vmatpush1.msra.mxu0 0.0
      %2214 = vmatprep.subr.mxu0 0.0
      %2215 = vmatpush1.msra.mxu0 0.0
      %2216 = vmatprep.subr.mxu0 0.0
      %2217 = vmatpush1.msra.mxu0 0.0
      %2218 = vmatprep.subr.mxu0 0.0
      %2219 = vmatpush1.msra.mxu0 0.0
      %2220 = vmatprep.subr.mxu0 0.0
      %2221 = vmatpush1.msra.mxu0 0.0
      %2222 = vmatprep.subr.mxu0 0.0
      %2223 = vmatpush1.msra.mxu0 0.0
      %2224 = vmatprep.subr.mxu0 0.0
      %2225 = vmatpush1.msra.mxu0 0.0
      %2226 = vmatprep.mubr.f32.mxu0 0.0
      %2227 = vmatmul.mubr.f32.gmra.mrb[0].mxu0 %v2157
      %v2228 = vpop.f32.mrb[0].mxu0
      %v2229 = vadd.f32 0.0, %v2228
      %v2230 = vpop.f32.mrb[0].mxu0
      %2231 = vmatprep.mubr.f32.mxu0 0.0
      %2232 = vmatmul.mubr.f32.gmra.mrb[0].mxu0 %v2160
      %v2233 = vpop.f32.mrb[0].mxu0
      %v2234 = vadd.f32 0.0, %v2233
      %v2235 = vpop.f32.mrb[0].mxu0
      %2236 = vdwg.mxu0
      %v2238 = vsel %vm390, %v2104, 0
      %v2241 = vsel %vm390, %v2105, 0
      %2243 = vmatprep.subr.mxu0 0.0
      %2244 = vmatpush1.msra.mxu0 %v2104
      %2245 = vmatprep.subr.mxu0 0.0
      %2246 = vmatpush1.msra.mxu0 %v2105
      %2247 = vmatprep.subr.mxu0 0.0
      %2248 = vmatpush1.msra.mxu0 0.0
      %2249 = vmatprep.subr.mxu0 0.0
      %2250 = vmatpush1.msra.mxu0 0.0
      %2251 = vmatprep.subr.mxu0 0.0
      %2252 = vmatpush1.msra.mxu0 0.0
      %2253 = vmatprep.subr.mxu0 0.0
      %2254 = vmatpush1.msra.mxu0 0.0
      %2255 = vmatprep.subr.mxu0 0.0
      %2256 = vmatpush1.msra.mxu0 0.0
      %2257 = vmatprep.subr.mxu0 0.0
      %2258 = vmatpush1.msra.mxu0 0.0
      %2259 = vmatprep.subr.mxu0 0.0
      %2260 = vmatpush1.msra.mxu0 0.0
      %2261 = vmatprep.subr.mxu0 0.0
      %2262 = vmatpush1.msra.mxu0 0.0
      %2263 = vmatprep.subr.mxu0 0.0
      %2264 = vmatpush1.msra.mxu0 0.0
      %2265 = vmatprep.subr.mxu0 0.0
      %2266 = vmatpush1.msra.mxu0 0.0
      %2267 = vmatprep.subr.mxu0 0.0
      %2268 = vmatpush1.msra.mxu0 0.0
      %2269 = vmatprep.subr.mxu0 0.0
      %2270 = vmatpush1.msra.mxu0 0.0
      %2271 = vmatprep.subr.mxu0 0.0
      %2272 = vmatpush1.msra.mxu0 0.0
      %2273 = vmatprep.subr.mxu0 0.0
      %2274 = vmatpush1.msra.mxu0 0.0
      %2275 = vmatprep.subr.mxu0 0.0
      %2276 = vmatpush1.msra.mxu0 0.0
      %2277 = vmatprep.subr.mxu0 0.0
      %2278 = vmatpush1.msra.mxu0 0.0
      %2279 = vmatprep.subr.mxu0 0.0
      %2280 = vmatpush1.msra.mxu0 0.0
      %2281 = vmatprep.subr.mxu0 0.0
      %2282 = vmatpush1.msra.mxu0 0.0
      %2283 = vmatprep.subr.mxu0 0.0
      %2284 = vmatpush1.msra.mxu0 0.0
      %2285 = vmatprep.subr.mxu0 0.0
      %2286 = vmatpush1.msra.mxu0 0.0
      %2287 = vmatprep.subr.mxu0 0.0
      %2288 = vmatpush1.msra.mxu0 0.0
      %2289 = vmatprep.subr.mxu0 0.0
      %2290 = vmatpush1.msra.mxu0 0.0
      %2291 = vmatprep.subr.mxu0 0.0
      %2292 = vmatpush1.msra.mxu0 0.0
      %2293 = vmatprep.subr.mxu0 0.0
      %2294 = vmatpush1.msra.mxu0 0.0
      %2295 = vmatprep.subr.mxu0 0.0
      %2296 = vmatpush1.msra.mxu0 0.0
      %2297 = vmatprep.subr.mxu0 0.0
      %2298 = vmatpush1.msra.mxu0 0.0
      %2299 = vmatprep.subr.mxu0 0.0
      %2300 = vmatpush1.msra.mxu0 0.0
      %2301 = vmatprep.subr.mxu0 0.0
      %2302 = vmatpush1.msra.mxu0 0.0
      %2303 = vmatprep.subr.mxu0 0.0
      %2304 = vmatpush1.msra.mxu0 0.0
      %2305 = vmatprep.subr.mxu0 0.0
      %2306 = vmatpush1.msra.mxu0 0.0
      %2307 = vmatprep.mubr.f32.mxu0 0.0
      %2308 = vmatmul.mubr.f32.gmra.mrb[0].mxu0 %v2238
      %v2309 = vpop.f32.mrb[0].mxu0
      %v2310 = vadd.f32 0.0, %v2309
      %v2311 = vpop.f32.mrb[0].mxu0
      %2312 = vmatprep.mubr.f32.mxu0 0.0
      %2313 = vmatmul.mubr.f32.gmra.mrb[0].mxu0 %v2241
      %v2314 = vpop.f32.mrb[0].mxu0
      %v2315 = vadd.f32 0.0, %v2314
      %v2316 = vpop.f32.mrb[0].mxu0
      %2317 = vdwg.mxu0
      %v2319 = vsel %vm390, %v2106, 0
      %v2322 = vsel %vm390, %v2107, 0
      %2324 = vmatprep.subr.mxu0 0.0
      %2325 = vmatpush1.msra.mxu0 %v2106
      %2326 = vmatprep.subr.mxu0 0.0
      %2327 = vmatpush1.msra.mxu0 %v2107
      %2328 = vmatprep.subr.mxu0 0.0
      %2329 = vmatpush1.msra.mxu0 0.0
      %2330 = vmatprep.subr.mxu0 0.0
      %2331 = vmatpush1.msra.mxu0 0.0
      %2332 = vmatprep.subr.mxu0 0.0
      %2333 = vmatpush1.msra.mxu0 0.0
      %2334 = vmatprep.subr.mxu0 0.0
      %2335 = vmatpush1.msra.mxu0 0.0
      %2336 = vmatprep.subr.mxu0 0.0
      %2337 = vmatpush1.msra.mxu0 0.0
      %2338 = vmatprep.subr.mxu0 0.0
      %2339 = vmatpush1.msra.mxu0 0.0
      %2340 = vmatprep.subr.mxu0 0.0
      %2341 = vmatpush1.msra.mxu0 0.0
      %2342 = vmatprep.subr.mxu0 0.0
      %2343 = vmatpush1.msra.mxu0 0.0
      %2344 = vmatprep.subr.mxu0 0.0
      %2345 = vmatpush1.msra.mxu0 0.0
      %2346 = vmatprep.subr.mxu0 0.0
      %2347 = vmatpush1.msra.mxu0 0.0
      %2348 = vmatprep.subr.mxu0 0.0
      %2349 = vmatpush1.msra.mxu0 0.0
      %2350 = vmatprep.subr.mxu0 0.0
      %2351 = vmatpush1.msra.mxu0 0.0
      %2352 = vmatprep.subr.mxu0 0.0
      %2353 = vmatpush1.msra.mxu0 0.0
      %2354 = vmatprep.subr.mxu0 0.0
      %2355 = vmatpush1.msra.mxu0 0.0
      %2356 = vmatprep.subr.mxu0 0.0
      %2357 = vmatpush1.msra.mxu0 0.0
      %2358 = vmatprep.subr.mxu0 0.0
      %2359 = vmatpush1.msra.mxu0 0.0
      %2360 = vmatprep.subr.mxu0 0.0
      %2361 = vmatpush1.msra.mxu0 0.0
      %2362 = vmatprep.subr.mxu0 0.0
      %2363 = vmatpush1.msra.mxu0 0.0
      %2364 = vmatprep.subr.mxu0 0.0
      %2365 = vmatpush1.msra.mxu0 0.0
      %2366 = vmatprep.subr.mxu0 0.0
      %2367 = vmatpush1.msra.mxu0 0.0
      %2368 = vmatprep.subr.mxu0 0.0
      %2369 = vmatpush1.msra.mxu0 0.0
      %2370 = vmatprep.subr.mxu0 0.0
      %2371 = vmatpush1.msra.mxu0 0.0
      %2372 = vmatprep.subr.mxu0 0.0
      %2373 = vmatpush1.msra.mxu0 0.0
      %2374 = vmatprep.subr.mxu0 0.0
      %2375 = vmatpush1.msra.mxu0 0.0
      %2376 = vmatprep.subr.mxu0 0.0
      %2377 = vmatpush1.msra.mxu0 0.0
      %2378 = vmatprep.subr.mxu0 0.0
      %2379 = vmatpush1.msra.mxu0 0.0
      %2380 = vmatprep.subr.mxu0 0.0
      %2381 = vmatpush1.msra.mxu0 0.0
      %2382 = vmatprep.subr.mxu0 0.0
      %2383 = vmatpush1.msra.mxu0 0.0
      %2384 = vmatprep.subr.mxu0 0.0
      %2385 = vmatpush1.msra.mxu0 0.0
      %2386 = vmatprep.subr.mxu0 0.0
      %2387 = vmatpush1.msra.mxu0 0.0
      %2388 = vmatprep.mubr.f32.mxu0 0.0
      %2389 = vmatmul.mubr.f32.gmra.mrb[0].mxu0 %v2319
      %v2390 = vpop.f32.mrb[0].mxu0
      %v2391 = vadd.f32 0.0, %v2390
      %v2392 = vpop.f32.mrb[0].mxu0
      %2393 = vmatprep.mubr.f32.mxu0 0.0
      %2394 = vmatmul.mubr.f32.gmra.mrb[0].mxu0 %v2322
      %v2395 = vpop.f32.mrb[0].mxu0
      %v2396 = vadd.f32 0.0, %v2395
      %v2397 = vpop.f32.mrb[0].mxu0
      %2398 = vdwg.mxu0
      %v2400 = vsel %vm390, %v2108, 0
      %v2403 = vsel %vm390, %v2109, 0
      %2405 = vmatprep.subr.mxu0 0.0
      %2406 = vmatpush1.msra.mxu0 %v2108
      %2407 = vmatprep.subr.mxu0 0.0
      %2408 = vmatpush1.msra.mxu0 %v2109
      %2409 = vmatprep.subr.mxu0 0.0
      %2410 = vmatpush1.msra.mxu0 0.0
      %2411 = vmatprep.subr.mxu0 0.0
      %2412 = vmatpush1.msra.mxu0 0.0
      %2413 = vmatprep.subr.mxu0 0.0
      %2414 = vmatpush1.msra.mxu0 0.0
      %2415 = vmatprep.subr.mxu0 0.0
      %2416 = vmatpush1.msra.mxu0 0.0
      %2417 = vmatprep.subr.mxu0 0.0
      %2418 = vmatpush1.msra.mxu0 0.0
      %2419 = vmatprep.subr.mxu0 0.0
      %2420 = vmatpush1.msra.mxu0 0.0
      %2421 = vmatprep.subr.mxu0 0.0
      %2422 = vmatpush1.msra.mxu0 0.0
      %2423 = vmatprep.subr.mxu0 0.0
      %2424 = vmatpush1.msra.mxu0 0.0
      %2425 = vmatprep.subr.mxu0 0.0
      %2426 = vmatpush1.msra.mxu0 0.0
      %2427 = vmatprep.subr.mxu0 0.0
      %2428 = vmatpush1.msra.mxu0 0.0
      %2429 = vmatprep.subr.mxu0 0.0
      %2430 = vmatpush1.msra.mxu0 0.0
      %2431 = vmatprep.subr.mxu0 0.0
      %2432 = vmatpush1.msra.mxu0 0.0
      %2433 = vmatprep.subr.mxu0 0.0
      %2434 = vmatpush1.msra.mxu0 0.0
      %2435 = vmatprep.subr.mxu0 0.0
      %2436 = vmatpush1.msra.mxu0 0.0
      %2437 = vmatprep.subr.mxu0 0.0
      %2438 = vmatpush1.msra.mxu0 0.0
      %2439 = vmatprep.subr.mxu0 0.0
      %2440 = vmatpush1.msra.mxu0 0.0
      %2441 = vmatprep.subr.mxu0 0.0
      %2442 = vmatpush1.msra.mxu0 0.0
      %2443 = vmatprep.subr.mxu0 0.0
      %2444 = vmatpush1.msra.mxu0 0.0
      %2445 = vmatprep.subr.mxu0 0.0
      %2446 = vmatpush1.msra.mxu0 0.0
      %2447 = vmatprep.subr.mxu0 0.0
      %2448 = vmatpush1.msra.mxu0 0.0
      %2449 = vmatprep.subr.mxu0 0.0
      %2450 = vmatpush1.msra.mxu0 0.0
      %2451 = vmatprep.subr.mxu0 0.0
      %2452 = vmatpush1.msra.mxu0 0.0
      %2453 = vmatprep.subr.mxu0 0.0
      %2454 = vmatpush1.msra.mxu0 0.0
      %2455 = vmatprep.subr.mxu0 0.0
      %2456 = vmatpush1.msra.mxu0 0.0
      %2457 = vmatprep.subr.mxu0 0.0
      %2458 = vmatpush1.msra.mxu0 0.0
      %2459 = vmatprep.subr.mxu0 0.0
      %2460 = vmatpush1.msra.mxu0 0.0
      %2461 = vmatprep.subr.mxu0 0.0
      %2462 = vmatpush1.msra.mxu0 0.0
      %2463 = vmatprep.subr.mxu0 0.0
      %2464 = vmatpush1.msra.mxu0 0.0
      %2465 = vmatprep.subr.mxu0 0.0
      %2466 = vmatpush1.msra.mxu0 0.0
      %2467 = vmatprep.subr.mxu0 0.0
      %2468 = vmatpush1.msra.mxu0 0.0
      %2469 = vmatprep.mubr.f32.mxu0 0.0
      %2470 = vmatmul.mubr.f32.gmra.mrb[0].mxu0 %v2400
      %v2471 = vpop.f32.mrb[0].mxu0
      %v2472 = vadd.f32 0.0, %v2471
      %v2473 = vpop.f32.mrb[0].mxu0
      %2474 = vmatprep.mubr.f32.mxu0 0.0
      %2475 = vmatmul.mubr.f32.gmra.mrb[0].mxu0 %v2403
      %v2476 = vpop.f32.mrb[0].mxu0
      %v2477 = vadd.f32 0.0, %v2476
      %v2478 = vpop.f32.mrb[0].mxu0
      %2479 = vdwg.mxu0
      %v2481 = vsel %vm390, %v2110, 0
      %v2484 = vsel %vm390, %v2111, 0
      %2486 = vmatprep.subr.mxu0 0.0
      %2487 = vmatpush1.msra.mxu0 %v2110
      %2488 = vmatprep.subr.mxu0 0.0
      %2489 = vmatpush1.msra.mxu0 %v2111
      %2490 = vmatprep.subr.mxu0 0.0
      %2491 = vmatpush1.msra.mxu0 0.0
      %2492 = vmatprep.subr.mxu0 0.0
      %2493 = vmatpush1.msra.mxu0 0.0
      %2494 = vmatprep.subr.mxu0 0.0
      %2495 = vmatpush1.msra.mxu0 0.0
      %2496 = vmatprep.subr.mxu0 0.0
      %2497 = vmatpush1.msra.mxu0 0.0
      %2498 = vmatprep.subr.mxu0 0.0
      %2499 = vmatpush1.msra.mxu0 0.0
      %2500 = vmatprep.subr.mxu0 0.0
      %2501 = vmatpush1.msra.mxu0 0.0
      %2502 = vmatprep.subr.mxu0 0.0
      %2503 = vmatpush1.msra.mxu0 0.0
      %2504 = vmatprep.subr.mxu0 0.0
      %2505 = vmatpush1.msra.mxu0 0.0
      %2506 = vmatprep.subr.mxu0 0.0
      %2507 = vmatpush1.msra.mxu0 0.0
      %2508 = vmatprep.subr.mxu0 0.0
      %2509 = vmatpush1.msra.mxu0 0.0
      %2510 = vmatprep.subr.mxu0 0.0
      %2511 = vmatpush1.msra.mxu0 0.0
      %2512 = vmatprep.subr.mxu0 0.0
      %2513 = vmatpush1.msra.mxu0 0.0
      %2514 = vmatprep.subr.mxu0 0.0
      %2515 = vmatpush1.msra.mxu0 0.0
      %2516 = vmatprep.subr.mxu0 0.0
      %2517 = vmatpush1.msra.mxu0 0.0
      %2518 = vmatprep.subr.mxu0 0.0
      %2519 = vmatpush1.msra.mxu0 0.0
      %2520 = vmatprep.subr.mxu0 0.0
      %2521 = vmatpush1.msra.mxu0 0.0
      %2522 = vmatprep.subr.mxu0 0.0
      %2523 = vmatpush1.msra.mxu0 0.0
      %2524 = vmatprep.subr.mxu0 0.0
      %2525 = vmatpush1.msra.mxu0 0.0
      %2526 = vmatprep.subr.mxu0 0.0
      %2527 = vmatpush1.msra.mxu0 0.0
      %2528 = vmatprep.subr.mxu0 0.0
      %2529 = vmatpush1.msra.mxu0 0.0
      %2530 = vmatprep.subr.mxu0 0.0
      %2531 = vmatpush1.msra.mxu0 0.0
      %2532 = vmatprep.subr.mxu0 0.0
      %2533 = vmatpush1.msra.mxu0 0.0
      %2534 = vmatprep.subr.mxu0 0.0
      %2535 = vmatpush1.msra.mxu0 0.0
      %2536 = vmatprep.subr.mxu0 0.0
      %2537 = vmatpush1.msra.mxu0 0.0
      %2538 = vmatprep.subr.mxu0 0.0
      %2539 = vmatpush1.msra.mxu0 0.0
      %2540 = vmatprep.subr.mxu0 0.0
      %2541 = vmatpush1.msra.mxu0 0.0
      %2542 = vmatprep.subr.mxu0 0.0
      %2543 = vmatpush1.msra.mxu0 0.0
      %2544 = vmatprep.subr.mxu0 0.0
      %2545 = vmatpush1.msra.mxu0 0.0
      %2546 = vmatprep.subr.mxu0 0.0
      %2547 = vmatpush1.msra.mxu0 0.0
      %2548 = vmatprep.subr.mxu0 0.0
      %2549 = vmatpush1.msra.mxu0 0.0
      %2550 = vmatprep.mubr.f32.mxu0 0.0
      %2551 = vmatmul.mubr.f32.gmra.mrb[0].mxu0 %v2481
      %v2552 = vpop.f32.mrb[0].mxu0
      %v2553 = vadd.f32 0.0, %v2552
      %v2554 = vpop.f32.mrb[0].mxu0
      %2555 = vmatprep.mubr.f32.mxu0 0.0
      %2556 = vmatmul.mubr.f32.gmra.mrb[0].mxu0 %v2484
      %v2557 = vpop.f32.mrb[0].mxu0
      %v2558 = vadd.f32 0.0, %v2557
      %v2559 = vpop.f32.mrb[0].mxu0
      %2560 = vdwg.mxu0
      %v2562 = vsel %vm390, %v2112, 0
      %v2565 = vsel %vm390, %v2113, 0
      %2567 = vmatprep.subr.mxu0 0.0
      %2568 = vmatpush1.msra.mxu0 %v2112
      %2569 = vmatprep.subr.mxu0 0.0
      %2570 = vmatpush1.msra.mxu0 %v2113
      %2571 = vmatprep.subr.mxu0 0.0
      %2572 = vmatpush1.msra.mxu0 0.0
      %2573 = vmatprep.subr.mxu0 0.0
      %2574 = vmatpush1.msra.mxu0 0.0
      %2575 = vmatprep.subr.mxu0 0.0
      %2576 = vmatpush1.msra.mxu0 0.0
      %2577 = vmatprep.subr.mxu0 0.0
      %2578 = vmatpush1.msra.mxu0 0.0
      %2579 = vmatprep.subr.mxu0 0.0
      %2580 = vmatpush1.msra.mxu0 0.0
      %2581 = vmatprep.subr.mxu0 0.0
      %2582 = vmatpush1.msra.mxu0 0.0
      %2583 = vmatprep.subr.mxu0 0.0
      %2584 = vmatpush1.msra.mxu0 0.0
      %2585 = vmatprep.subr.mxu0 0.0
      %2586 = vmatpush1.msra.mxu0 0.0
      %2587 = vmatprep.subr.mxu0 0.0
      %2588 = vmatpush1.msra.mxu0 0.0
      %2589 = vmatprep.subr.mxu0 0.0
      %2590 = vmatpush1.msra.mxu0 0.0
      %2591 = vmatprep.subr.mxu0 0.0
      %2592 = vmatpush1.msra.mxu0 0.0
      %2593 = vmatprep.subr.mxu0 0.0
      %2594 = vmatpush1.msra.mxu0 0.0
      %2595 = vmatprep.subr.mxu0 0.0
      %2596 = vmatpush1.msra.mxu0 0.0
      %2597 = vmatprep.subr.mxu0 0.0
      %2598 = vmatpush1.msra.mxu0 0.0
      %2599 = vmatprep.subr.mxu0 0.0
      %2600 = vmatpush1.msra.mxu0 0.0
      %2601 = vmatprep.subr.mxu0 0.0
      %2602 = vmatpush1.msra.mxu0 0.0
      %2603 = vmatprep.subr.mxu0 0.0
      %2604 = vmatpush1.msra.mxu0 0.0
      %2605 = vmatprep.subr.mxu0 0.0
      %2606 = vmatpush1.msra.mxu0 0.0
      %2607 = vmatprep.subr.mxu0 0.0
      %2608 = vmatpush1.msra.mxu0 0.0
      %2609 = vmatprep.subr.mxu0 0.0
      %2610 = vmatpush1.msra.mxu0 0.0
      %2611 = vmatprep.subr.mxu0 0.0
      %2612 = vmatpush1.msra.mxu0 0.0
      %2613 = vmatprep.subr.mxu0 0.0
      %2614 = vmatpush1.msra.mxu0 0.0
      %2615 = vmatprep.subr.mxu0 0.0
      %2616 = vmatpush1.msra.mxu0 0.0
      %2617 = vmatprep.subr.mxu0 0.0
      %2618 = vmatpush1.msra.mxu0 0.0
      %2619 = vmatprep.subr.mxu0 0.0
      %2620 = vmatpush1.msra.mxu0 0.0
      %2621 = vmatprep.subr.mxu0 0.0
      %2622 = vmatpush1.msra.mxu0 0.0
      %2623 = vmatprep.subr.mxu0 0.0
      %2624 = vmatpush1.msra.mxu0 0.0
      %2625 = vmatprep.subr.mxu0 0.0
      %2626 = vmatpush1.msra.mxu0 0.0
      %2627 = vmatprep.subr.mxu0 0.0
      %2628 = vmatpush1.msra.mxu0 0.0
      %2629 = vmatprep.subr.mxu0 0.0
      %2630 = vmatpush1.msra.mxu0 0.0
      %2631 = vmatprep.mubr.f32.mxu0 0.0
      %2632 = vmatmul.mubr.f32.gmra.mrb[0].mxu0 %v2562
      %v2633 = vpop.f32.mrb[0].mxu0
      %v2634 = vadd.f32 0.0, %v2633
      %v2635 = vpop.f32.mrb[0].mxu0
      %2636 = vmatprep.mubr.f32.mxu0 0.0
      %2637 = vmatmul.mubr.f32.gmra.mrb[0].mxu0 %v2565
      %v2638 = vpop.f32.mrb[0].mxu0
      %v2639 = vadd.f32 0.0, %v2638
      %v2640 = vpop.f32.mrb[0].mxu0
      %2641 = vdwg.mxu0
      %v2643 = vsel %vm390, %v2114, 0
      %v2646 = vsel %vm390, %v2115, 0
      %2648 = vmatprep.subr.mxu0 0.0
      %2649 = vmatpush1.msra.mxu0 %v2114
      %2650 = vmatprep.subr.mxu0 0.0
      %2651 = vmatpush1.msra.mxu0 %v2115
      %2652 = vmatprep.subr.mxu0 0.0
      %2653 = vmatpush1.msra.mxu0 0.0
      %2654 = vmatprep.subr.mxu0 0.0
      %2655 = vmatpush1.msra.mxu0 0.0
      %2656 = vmatprep.subr.mxu0 0.0
      %2657 = vmatpush1.msra.mxu0 0.0
      %2658 = vmatprep.subr.mxu0 0.0
      %2659 = vmatpush1.msra.mxu0 0.0
      %2660 = vmatprep.subr.mxu0 0.0
      %2661 = vmatpush1.msra.mxu0 0.0
      %2662 = vmatprep.subr.mxu0 0.0
      %2663 = vmatpush1.msra.mxu0 0.0
      %2664 = vmatprep.subr.mxu0 0.0
      %2665 = vmatpush1.msra.mxu0 0.0
      %2666 = vmatprep.subr.mxu0 0.0
      %2667 = vmatpush1.msra.mxu0 0.0
      %2668 = vmatprep.subr.mxu0 0.0
      %2669 = vmatpush1.msra.mxu0 0.0
      %2670 = vmatprep.subr.mxu0 0.0
      %2671 = vmatpush1.msra.mxu0 0.0
      %2672 = vmatprep.subr.mxu0 0.0
      %2673 = vmatpush1.msra.mxu0 0.0
      %2674 = vmatprep.subr.mxu0 0.0
      %2675 = vmatpush1.msra.mxu0 0.0
      %2676 = vmatprep.subr.mxu0 0.0
      %2677 = vmatpush1.msra.mxu0 0.0
      %2678 = vmatprep.subr.mxu0 0.0
      %2679 = vmatpush1.msra.mxu0 0.0
      %2680 = vmatprep.subr.mxu0 0.0
      %2681 = vmatpush1.msra.mxu0 0.0
      %2682 = vmatprep.subr.mxu0 0.0
      %2683 = vmatpush1.msra.mxu0 0.0
      %2684 = vmatprep.subr.mxu0 0.0
      %2685 = vmatpush1.msra.mxu0 0.0
      %2686 = vmatprep.subr.mxu0 0.0
      %2687 = vmatpush1.msra.mxu0 0.0
      %2688 = vmatprep.subr.mxu0 0.0
      %2689 = vmatpush1.msra.mxu0 0.0
      %2690 = vmatprep.subr.mxu0 0.0
      %2691 = vmatpush1.msra.mxu0 0.0
      %2692 = vmatprep.subr.mxu0 0.0
      %2693 = vmatpush1.msra.mxu0 0.0
      %2694 = vmatprep.subr.mxu0 0.0
      %2695 = vmatpush1.msra.mxu0 0.0
      %2696 = vmatprep.subr.mxu0 0.0
      %2697 = vmatpush1.msra.mxu0 0.0
      %2698 = vmatprep.subr.mxu0 0.0
      %2699 = vmatpush1.msra.mxu0 0.0
      %2700 = vmatprep.subr.mxu0 0.0
      %2701 = vmatpush1.msra.mxu0 0.0
      %2702 = vmatprep.subr.mxu0 0.0
      %2703 = vmatpush1.msra.mxu0 0.0
      %2704 = vmatprep.subr.mxu0 0.0
      %2705 = vmatpush1.msra.mxu0 0.0
      %2706 = vmatprep.subr.mxu0 0.0
      %2707 = vmatpush1.msra.mxu0 0.0
      %2708 = vmatprep.subr.mxu0 0.0
      %2709 = vmatpush1.msra.mxu0 0.0
      %2710 = vmatprep.subr.mxu0 0.0
      %2711 = vmatpush1.msra.mxu0 0.0
      %2712 = vmatprep.mubr.f32.mxu0 0.0
      %2713 = vmatmul.mubr.f32.gmra.mrb[0].mxu0 %v2643
      %v2714 = vpop.f32.mrb[0].mxu0
      %v2715 = vadd.f32 0.0, %v2714
      %v2716 = vpop.f32.mrb[0].mxu0
      %2717 = vmatprep.mubr.f32.mxu0 0.0
      %2718 = vmatmul.mubr.f32.gmra.mrb[0].mxu0 %v2646
      %v2719 = vpop.f32.mrb[0].mxu0
      %v2720 = vadd.f32 0.0, %v2719
      %v2721 = vpop.f32.mrb[0].mxu0
      %2722 = vdwg.mxu0
      %v2724 = vsel %vm390, %v2116, 0
      %v2727 = vsel %vm390, %v2117, 0
      %2729 = vmatprep.subr.mxu0 0.0
      %2730 = vmatpush1.msra.mxu0 %v2116
      %2731 = vmatprep.subr.mxu0 0.0
      %2732 = vmatpush1.msra.mxu0 %v2117
      %2733 = vmatprep.subr.mxu0 0.0
      %2734 = vmatpush1.msra.mxu0 0.0
      %2735 = vmatprep.subr.mxu0 0.0
      %2736 = vmatpush1.msra.mxu0 0.0
      %2737 = vmatprep.subr.mxu0 0.0
      %2738 = vmatpush1.msra.mxu0 0.0
      %2739 = vmatprep.subr.mxu0 0.0
      %2740 = vmatpush1.msra.mxu0 0.0
      %2741 = vmatprep.subr.mxu0 0.0
      %2742 = vmatpush1.msra.mxu0 0.0
      %2743 = vmatprep.subr.mxu0 0.0
      %2744 = vmatpush1.msra.mxu0 0.0
      %2745 = vmatprep.subr.mxu0 0.0
      %2746 = vmatpush1.msra.mxu0 0.0
      %2747 = vmatprep.subr.mxu0 0.0
      %2748 = vmatpush1.msra.mxu0 0.0
      %2749 = vmatprep.subr.mxu0 0.0
      %2750 = vmatpush1.msra.mxu0 0.0
      %2751 = vmatprep.subr.mxu0 0.0
      %2752 = vmatpush1.msra.mxu0 0.0
      %2753 = vmatprep.subr.mxu0 0.0
      %2754 = vmatpush1.msra.mxu0 0.0
      %2755 = vmatprep.subr.mxu0 0.0
      %2756 = vmatpush1.msra.mxu0 0.0
      %2757 = vmatprep.subr.mxu0 0.0
      %2758 = vmatpush1.msra.mxu0 0.0
      %2759 = vmatprep.subr.mxu0 0.0
      %2760 = vmatpush1.msra.mxu0 0.0
      %2761 = vmatprep.subr.mxu0 0.0
      %2762 = vmatpush1.msra.mxu0 0.0
      %2763 = vmatprep.subr.mxu0 0.0
      %2764 = vmatpush1.msra.mxu0 0.0
      %2765 = vmatprep.subr.mxu0 0.0
      %2766 = vmatpush1.msra.mxu0 0.0
      %2767 = vmatprep.subr.mxu0 0.0
      %2768 = vmatpush1.msra.mxu0 0.0
      %2769 = vmatprep.subr.mxu0 0.0
      %2770 = vmatpush1.msra.mxu0 0.0
      %2771 = vmatprep.subr.mxu0 0.0
      %2772 = vmatpush1.msra.mxu0 0.0
      %2773 = vmatprep.subr.mxu0 0.0
      %2774 = vmatpush1.msra.mxu0 0.0
      %2775 = vmatprep.subr.mxu0 0.0
      %2776 = vmatpush1.msra.mxu0 0.0
      %2777 = vmatprep.subr.mxu0 0.0
      %2778 = vmatpush1.msra.mxu0 0.0
      %2779 = vmatprep.subr.mxu0 0.0
      %2780 = vmatpush1.msra.mxu0 0.0
      %2781 = vmatprep.subr.mxu0 0.0
      %2782 = vmatpush1.msra.mxu0 0.0
      %2783 = vmatprep.subr.mxu0 0.0
      %2784 = vmatpush1.msra.mxu0 0.0
      %2785 = vmatprep.subr.mxu0 0.0
      %2786 = vmatpush1.msra.mxu0 0.0
      %2787 = vmatprep.subr.mxu0 0.0
      %2788 = vmatpush1.msra.mxu0 0.0
      %2789 = vmatprep.subr.mxu0 0.0
      %2790 = vmatpush1.msra.mxu0 0.0
      %2791 = vmatprep.subr.mxu0 0.0
      %2792 = vmatpush1.msra.mxu0 0.0
      %2793 = vmatprep.mubr.f32.mxu0 0.0
      %2794 = vmatmul.mubr.f32.gmra.mrb[0].mxu0 %v2724
      %v2795 = vpop.f32.mrb[0].mxu0
      %v2796 = vadd.f32 0.0, %v2795
      %v2797 = vpop.f32.mrb[0].mxu0
      %2798 = vmatprep.mubr.f32.mxu0 0.0
      %2799 = vmatmul.mubr.f32.gmra.mrb[0].mxu0 %v2727
      %v2800 = vpop.f32.mrb[0].mxu0
      %v2801 = vadd.f32 0.0, %v2800
      %v2802 = vpop.f32.mrb[0].mxu0
      %2803 = vdwg.mxu0
      %2804 = vmatprep.subr.mxu0 0.0
      %2805 = vmatpush1.msra.mxu0 %v2229
      %2806 = vmatprep.subr.mxu0 0.0
      %2807 = vmatpush1.msra.mxu0 %v2234
      %2808 = vmatprep.subr.mxu0 0.0
      %2809 = vmatpush1.msra.mxu0 %v2310
      %2810 = vmatprep.subr.mxu0 0.0
      %2811 = vmatpush1.msra.mxu0 %v2315
      %2812 = vmatprep.subr.mxu0 0.0
      %2813 = vmatpush1.msra.mxu0 %v2391
      %2814 = vmatprep.subr.mxu0 0.0
      %2815 = vmatpush1.msra.mxu0 %v2396
      %2816 = vmatprep.subr.mxu0 0.0
      %2817 = vmatpush1.msra.mxu0 %v2472
      %2818 = vmatprep.subr.mxu0 0.0
      %2819 = vmatpush1.msra.mxu0 %v2477
      %2820 = vmatprep.subr.mxu0 0.0
      %2821 = vmatpush1.msra.mxu0 %v2553
      %2822 = vmatprep.subr.mxu0 0.0
      %2823 = vmatpush1.msra.mxu0 %v2558
      %2824 = vmatprep.subr.mxu0 0.0
      %2825 = vmatpush1.msra.mxu0 %v2634
      %2826 = vmatprep.subr.mxu0 0.0
      %2827 = vmatpush1.msra.mxu0 %v2639
      %2828 = vmatprep.subr.mxu0 0.0
      %2829 = vmatpush1.msra.mxu0 %v2715
      %2830 = vmatprep.subr.mxu0 0.0
      %2831 = vmatpush1.msra.mxu0 %v2720
      %2832 = vmatprep.subr.mxu0 0.0
      %2833 = vmatpush1.msra.mxu0 %v2796
      %2834 = vmatprep.subr.mxu0 0.0
      %2835 = vmatpush1.msra.mxu0 %v2801
      %2836 = vmatprep.subr.mxu0 0.0
      %2837 = vmatpush1.msra.mxu0 0.0
      %2838 = vmatprep.subr.mxu0 0.0
      %2839 = vmatpush1.msra.mxu0 0.0
      %2840 = vmatprep.subr.mxu0 0.0
      %2841 = vmatpush1.msra.mxu0 0.0
      %2842 = vmatprep.subr.mxu0 0.0
      %2843 = vmatpush1.msra.mxu0 0.0
      %2844 = vmatprep.subr.mxu0 0.0
      %2845 = vmatpush1.msra.mxu0 0.0
      %2846 = vmatprep.subr.mxu0 0.0
      %2847 = vmatpush1.msra.mxu0 0.0
      %2848 = vmatprep.subr.mxu0 0.0
      %2849 = vmatpush1.msra.mxu0 0.0
      %2850 = vmatprep.subr.mxu0 0.0
      %2851 = vmatpush1.msra.mxu0 0.0
      %2852 = vmatprep.subr.mxu0 0.0
      %2853 = vmatpush1.msra.mxu0 0.0
      %2854 = vmatprep.subr.mxu0 0.0
      %2855 = vmatpush1.msra.mxu0 0.0
      %2856 = vmatprep.subr.mxu0 0.0
      %2857 = vmatpush1.msra.mxu0 0.0
      %2858 = vmatprep.subr.mxu0 0.0
      %2859 = vmatpush1.msra.mxu0 0.0
      %2860 = vmatprep.subr.mxu0 0.0
      %2861 = vmatpush1.msra.mxu0 0.0
      %2862 = vmatprep.subr.mxu0 0.0
      %2863 = vmatpush1.msra.mxu0 0.0
      %2864 = vmatprep.subr.mxu0 0.0
      %2865 = vmatpush1.msra.mxu0 0.0
      %2866 = vmatprep.subr.mxu0 0.0
      %2867 = vmatpush1.msra.mxu0 0.0
      %2868 = vmatprep.mubr.f32.mxu0 0.0
      %2869 = vmatmul.mubr.f32.gmra.mrb[0].mxu0 %v2118
      %v2870 = vpop.f32.mrb[0].mxu0
      %v2871 = vadd.f32 0.0, %v2870
      %v2872 = vpop.f32.mrb[0].mxu0
      %2873 = vmatprep.mubr.f32.mxu0 0.0
      %2874 = vmatmul.mubr.f32.gmra.mrb[0].mxu0 %v2119
      %v2875 = vpop.f32.mrb[0].mxu0
      %v2876 = vadd.f32 0.0, %v2875
      %v2877 = vpop.f32.mrb[0].mxu0
      %2878 = vmatprep.mubr.f32.mxu0 0.0
      %2879 = vmatmul.mubr.f32.gmra.mrb[0].mxu0 %v2120
      %v2880 = vpop.f32.mrb[0].mxu0
      %v2881 = vadd.f32 0.0, %v2880
      %v2882 = vpop.f32.mrb[0].mxu0
      %2883 = vmatprep.mubr.f32.mxu0 0.0
      %2884 = vmatmul.mubr.f32.gmra.mrb[0].mxu0 %v2121
      %v2885 = vpop.f32.mrb[0].mxu0
      %v2886 = vadd.f32 0.0, %v2885
      %v2887 = vpop.f32.mrb[0].mxu0
      %2888 = vmatprep.mubr.f32.mxu0 0.0
      %2889 = vmatmul.mubr.f32.gmra.mrb[0].mxu0 %v2122
      %v2890 = vpop.f32.mrb[0].mxu0
      %v2891 = vadd.f32 0.0, %v2890
      %v2892 = vpop.f32.mrb[0].mxu0
      %2893 = vmatprep.mubr.f32.mxu0 0.0
      %2894 = vmatmul.mubr.f32.gmra.mrb[0].mxu0 %v2123
      %v2895 = vpop.f32.mrb[0].mxu0
      %v2896 = vadd.f32 0.0, %v2895
      %v2897 = vpop.f32.mrb[0].mxu0
      %2898 = vmatprep.mubr.f32.mxu0 0.0
      %2899 = vmatmul.mubr.f32.gmra.mrb[0].mxu0 %v2124
      %v2900 = vpop.f32.mrb[0].mxu0
      %v2901 = vadd.f32 0.0, %v2900
      %v2902 = vpop.f32.mrb[0].mxu0
      %2903 = vmatprep.mubr.f32.mxu0 0.0
      %2904 = vmatmul.mubr.f32.gmra.mrb[0].mxu0 %v2125
      %v2905 = vpop.f32.mrb[0].mxu0
      %v2906 = vadd.f32 0.0, %v2905
      %v2907 = vpop.f32.mrb[0].mxu0
      %2908 = vmatprep.mubr.f32.mxu0 0.0
      %2909 = vmatmul.mubr.f32.gmra.mrb[0].mxu0 %v2126
      %v2910 = vpop.f32.mrb[0].mxu0
      %v2911 = vadd.f32 0.0, %v2910
      %v2912 = vpop.f32.mrb[0].mxu0
      %2913 = vmatprep.mubr.f32.mxu0 0.0
      %2914 = vmatmul.mubr.f32.gmra.mrb[0].mxu0 %v2127
      %v2915 = vpop.f32.mrb[0].mxu0
      %v2916 = vadd.f32 0.0, %v2915
      %v2917 = vpop.f32.mrb[0].mxu0
      %2918 = vmatprep.mubr.f32.mxu0 0.0
      %2919 = vmatmul.mubr.f32.gmra.mrb[0].mxu0 %v2128
      %v2920 = vpop.f32.mrb[0].mxu0
      %v2921 = vadd.f32 0.0, %v2920
      %v2922 = vpop.f32.mrb[0].mxu0
      %2923 = vmatprep.mubr.f32.mxu0 0.0
      %2924 = vmatmul.mubr.f32.gmra.mrb[0].mxu0 %v2129
      %v2925 = vpop.f32.mrb[0].mxu0
      %v2926 = vadd.f32 0.0, %v2925
      %v2927 = vpop.f32.mrb[0].mxu0
      %2928 = vmatprep.mubr.f32.mxu0 0.0
      %2929 = vmatmul.mubr.f32.gmra.mrb[0].mxu0 %v2130
      %v2930 = vpop.f32.mrb[0].mxu0
      %v2931 = vadd.f32 0.0, %v2930
      %v2932 = vpop.f32.mrb[0].mxu0
      %2933 = vmatprep.mubr.f32.mxu0 0.0
      %2934 = vmatmul.mubr.f32.gmra.mrb[0].mxu0 %v2131
      %v2935 = vpop.f32.mrb[0].mxu0
      %v2936 = vadd.f32 0.0, %v2935
      %v2937 = vpop.f32.mrb[0].mxu0
      %2938 = vmatprep.mubr.f32.mxu0 0.0
      %2939 = vmatmul.mubr.f32.gmra.mrb[0].mxu0 %v2132
      %v2940 = vpop.f32.mrb[0].mxu0
      %v2941 = vadd.f32 0.0, %v2940
      %v2942 = vpop.f32.mrb[0].mxu0
      %2943 = vmatprep.mubr.f32.mxu0 0.0
      %2944 = vmatmul.mubr.f32.gmra.mrb[0].mxu0 %v2133
      %v2945 = vpop.f32.mrb[0].mxu0
      %v2946 = vadd.f32 0.0, %v2945
      %v2947 = vpop.f32.mrb[0].mxu0
      %2948 = vmatprep.mubr.f32.mxu0 0.0
      %2949 = vmatmul.mubr.f32.gmra.mrb[0].mxu0 %v2134
      %v2950 = vpop.f32.mrb[0].mxu0
      %v2951 = vadd.f32 0.0, %v2950
      %v2952 = vpop.f32.mrb[0].mxu0
      %2953 = vmatprep.mubr.f32.mxu0 0.0
      %2954 = vmatmul.mubr.f32.gmra.mrb[0].mxu0 %v2135
      %v2955 = vpop.f32.mrb[0].mxu0
      %v2956 = vadd.f32 0.0, %v2955
      %v2957 = vpop.f32.mrb[0].mxu0
      %2958 = vmatprep.mubr.f32.mxu0 0.0
      %2959 = vmatmul.mubr.f32.gmra.mrb[0].mxu0 %v2136
      %v2960 = vpop.f32.mrb[0].mxu0
      %v2961 = vadd.f32 0.0, %v2960
      %v2962 = vpop.f32.mrb[0].mxu0
      %2963 = vmatprep.mubr.f32.mxu0 0.0
      %2964 = vmatmul.mubr.f32.gmra.mrb[0].mxu0 %v2137
      %v2965 = vpop.f32.mrb[0].mxu0
      %v2966 = vadd.f32 0.0, %v2965
      %v2967 = vpop.f32.mrb[0].mxu0
      %2968 = vmatprep.mubr.f32.mxu0 0.0
      %2969 = vmatmul.mubr.f32.gmra.mrb[0].mxu0 %v2138
      %v2970 = vpop.f32.mrb[0].mxu0
      %v2971 = vadd.f32 0.0, %v2970
      %v2972 = vpop.f32.mrb[0].mxu0
      %2973 = vmatprep.mubr.f32.mxu0 0.0
      %2974 = vmatmul.mubr.f32.gmra.mrb[0].mxu0 %v2139
      %v2975 = vpop.f32.mrb[0].mxu0
      %v2976 = vadd.f32 0.0, %v2975
      %v2977 = vpop.f32.mrb[0].mxu0
      %2978 = vmatprep.mubr.f32.mxu0 0.0
      %2979 = vmatmul.mubr.f32.gmra.mrb[0].mxu0 %v2140
      %v2980 = vpop.f32.mrb[0].mxu0
      %v2981 = vadd.f32 0.0, %v2980
      %v2982 = vpop.f32.mrb[0].mxu0
      %2983 = vmatprep.mubr.f32.mxu0 0.0
      %2984 = vmatmul.mubr.f32.gmra.mrb[0].mxu0 %v2141
      %v2985 = vpop.f32.mrb[0].mxu0
      %v2986 = vadd.f32 0.0, %v2985
      %v2987 = vpop.f32.mrb[0].mxu0
      %2988 = vmatprep.mubr.f32.mxu0 0.0
      %2989 = vmatmul.mubr.f32.gmra.mrb[0].mxu0 %v2142
      %v2990 = vpop.f32.mrb[0].mxu0
      %v2991 = vadd.f32 0.0, %v2990
      %v2992 = vpop.f32.mrb[0].mxu0
      %2993 = vmatprep.mubr.f32.mxu0 0.0
      %2994 = vmatmul.mubr.f32.gmra.mrb[0].mxu0 %v2143
      %v2995 = vpop.f32.mrb[0].mxu0
      %v2996 = vadd.f32 0.0, %v2995
      %v2997 = vpop.f32.mrb[0].mxu0
      %2998 = vmatprep.mubr.f32.mxu0 0.0
      %2999 = vmatmul.mubr.f32.gmra.mrb[0].mxu0 %v2144
      %v3000 = vpop.f32.mrb[0].mxu0
      %v3001 = vadd.f32 0.0, %v3000
      %v3002 = vpop.f32.mrb[0].mxu0
      %3003 = vmatprep.mubr.f32.mxu0 0.0
      %3004 = vmatmul.mubr.f32.gmra.mrb[0].mxu0 %v2145
      %v3005 = vpop.f32.mrb[0].mxu0
      %v3006 = vadd.f32 0.0, %v3005
      %v3007 = vpop.f32.mrb[0].mxu0
      %3008 = vmatprep.mubr.f32.mxu0 0.0
      %3009 = vmatmul.mubr.f32.gmra.mrb[0].mxu0 %v2146
      %v3010 = vpop.f32.mrb[0].mxu0
      %v3011 = vadd.f32 0.0, %v3010
      %v3012 = vpop.f32.mrb[0].mxu0
      %3013 = vmatprep.mubr.f32.mxu0 0.0
      %3014 = vmatmul.mubr.f32.gmra.mrb[0].mxu0 %v2147
      %v3015 = vpop.f32.mrb[0].mxu0
      %v3016 = vadd.f32 0.0, %v3015
      %v3017 = vpop.f32.mrb[0].mxu0
      %3018 = vmatprep.mubr.f32.mxu0 0.0
      %3019 = vmatmul.mubr.f32.gmra.mrb[0].mxu0 %v2148
      %v3020 = vpop.f32.mrb[0].mxu0
      %v3021 = vadd.f32 0.0, %v3020
      %v3022 = vpop.f32.mrb[0].mxu0
      %3023 = vmatprep.mubr.f32.mxu0 0.0
      %3024 = vmatmul.mubr.f32.gmra.mrb[0].mxu0 %v2149
      %v3025 = vpop.f32.mrb[0].mxu0
      %v3026 = vadd.f32 0.0, %v3025
      %v3027 = vpop.f32.mrb[0].mxu0
      %3028 = vdwg.mxu0
      %3029 = vxpose.xlu0.b32.start [1/16] %v2951, 128
      %3030 = vxpose.xlu0.b32.cont [2/16] %v2956, 128
      %3031 = vxpose.xlu0.b32.cont [3/16] 0.0, 128
      %3032 = vxpose.xlu0.b32.cont [4/16] 0.0, 128
      %3033 = vxpose.xlu0.b32.cont [5/16] 0.0, 128
      %3034 = vxpose.xlu0.b32.cont [6/16] 0.0, 128
      %3035 = vxpose.xlu0.b32.cont [7/16] 0.0, 128
      %3036 = vxpose.xlu0.b32.cont [8/16] 0.0, 128
      %3037 = vxpose.xlu0.b32.cont [9/16] 0.0, 128
      %3038 = vxpose.xlu0.b32.cont [10/16] 0.0, 128
      %3039 = vxpose.xlu0.b32.cont [11/16] 0.0, 128
      %3040 = vxpose.xlu0.b32.cont [12/16] 0.0, 128
      %3041 = vxpose.xlu0.b32.cont [13/16] 0.0, 128
      %3042 = vxpose.xlu0.b32.cont [14/16] 0.0, 128
      %3043 = vxpose.xlu0.b32.cont [15/16] 0.0, 128
      %3044 = vxpose.xlu0.b32.end [16/16] 0.0, 128
      %v3045 = vpop.trf.xlu0
      %v3046 = vpop.trf.xlu0
      %v3047 = vpop.trf.xlu0
      %v3048 = vpop.trf.xlu0
      %v3049 = vpop.trf.xlu0
      %v3050 = vpop.trf.xlu0
      %v3051 = vpop.trf.xlu0
      %v3052 = vpop.trf.xlu0
      %v3053 = vpop.trf.xlu0
      %v3054 = vpop.trf.xlu0
      %v3055 = vpop.trf.xlu0
      %v3056 = vpop.trf.xlu0
      %v3057 = vpop.trf.xlu0
      %v3058 = vpop.trf.xlu0
      %v3059 = vpop.trf.xlu0
      %v3060 = vpop.trf.xlu0
      %3061 = vxpose.xlu0.b32.start [1/16] %v2961, 128
      %3062 = vxpose.xlu0.b32.cont [2/16] %v2966, 128
      %3063 = vxpose.xlu0.b32.cont [3/16] 0.0, 128
      %3064 = vxpose.xlu0.b32.cont [4/16] 0.0, 128
      %3065 = vxpose.xlu0.b32.cont [5/16] 0.0, 128
      %3066 = vxpose.xlu0.b32.cont [6/16] 0.0, 128
      %3067 = vxpose.xlu0.b32.cont [7/16] 0.0, 128
      %3068 = vxpose.xlu0.b32.cont [8/16] 0.0, 128
      %3069 = vxpose.xlu0.b32.cont [9/16] 0.0, 128
      %3070 = vxpose.xlu0.b32.cont [10/16] 0.0, 128
      %3071 = vxpose.xlu0.b32.cont [11/16] 0.0, 128
      %3072 = vxpose.xlu0.b32.cont [12/16] 0.0, 128
      %3073 = vxpose.xlu0.b32.cont [13/16] 0.0, 128
      %3074 = vxpose.xlu0.b32.cont [14/16] 0.0, 128
      %3075 = vxpose.xlu0.b32.cont [15/16] 0.0, 128
      %3076 = vxpose.xlu0.b32.end [16/16] 0.0, 128
      %v3077 = vpop.trf.xlu0
      %v3078 = vpop.trf.xlu0
      %v3079 = vpop.trf.xlu0
      %v3080 = vpop.trf.xlu0
      %v3081 = vpop.trf.xlu0
      %v3082 = vpop.trf.xlu0
      %v3083 = vpop.trf.xlu0
      %v3084 = vpop.trf.xlu0
      %v3085 = vpop.trf.xlu0
      %v3086 = vpop.trf.xlu0
      %v3087 = vpop.trf.xlu0
      %v3088 = vpop.trf.xlu0
      %v3089 = vpop.trf.xlu0
      %v3090 = vpop.trf.xlu0
      %v3091 = vpop.trf.xlu0
      %v3092 = vpop.trf.xlu0
      %3093 = vxpose.xlu0.b32.start [1/16] %v2971, 128
      %3094 = vxpose.xlu0.b32.cont [2/16] %v2976, 128
      %3095 = vxpose.xlu0.b32.cont [3/16] 0.0, 128
      %3096 = vxpose.xlu0.b32.cont [4/16] 0.0, 128
      %3097 = vxpose.xlu0.b32.cont [5/16] 0.0, 128
      %3098 = vxpose.xlu0.b32.cont [6/16] 0.0, 128
      %3099 = vxpose.xlu0.b32.cont [7/16] 0.0, 128
      %3100 = vxpose.xlu0.b32.cont [8/16] 0.0, 128
      %3101 = vxpose.xlu0.b32.cont [9/16] 0.0, 128
      %3102 = vxpose.xlu0.b32.cont [10/16] 0.0, 128
      %3103 = vxpose.xlu0.b32.cont [11/16] 0.0, 128
      %3104 = vxpose.xlu0.b32.cont [12/16] 0.0, 128
      %3105 = vxpose.xlu0.b32.cont [13/16] 0.0, 128
      %3106 = vxpose.xlu0.b32.cont [14/16] 0.0, 128
      %3107 = vxpose.xlu0.b32.cont [15/16] 0.0, 128
      %3108 = vxpose.xlu0.b32.end [16/16] 0.0, 128
      %v3109 = vpop.trf.xlu0
      %v3110 = vpop.trf.xlu0
      %v3111 = vpop.trf.xlu0
      %v3112 = vpop.trf.xlu0
      %v3113 = vpop.trf.xlu0
      %v3114 = vpop.trf.xlu0
      %v3115 = vpop.trf.xlu0
      %v3116 = vpop.trf.xlu0
      %v3117 = vpop.trf.xlu0
      %v3118 = vpop.trf.xlu0
      %v3119 = vpop.trf.xlu0
      %v3120 = vpop.trf.xlu0
      %v3121 = vpop.trf.xlu0
      %v3122 = vpop.trf.xlu0
      %v3123 = vpop.trf.xlu0
      %v3124 = vpop.trf.xlu0
      %3125 = vxpose.xlu0.b32.start [1/16] %v2981, 128
      %3126 = vxpose.xlu0.b32.cont [2/16] %v2986, 128
      %3127 = vxpose.xlu0.b32.cont [3/16] 0.0, 128
      %3128 = vxpose.xlu0.b32.cont [4/16] 0.0, 128
      %3129 = vxpose.xlu0.b32.cont [5/16] 0.0, 128
      %3130 = vxpose.xlu0.b32.cont [6/16] 0.0, 128
      %3131 = vxpose.xlu0.b32.cont [7/16] 0.0, 128
      %3132 = vxpose.xlu0.b32.cont [8/16] 0.0, 128
      %3133 = vxpose.xlu0.b32.cont [9/16] 0.0, 128
      %3134 = vxpose.xlu0.b32.cont [10/16] 0.0, 128
      %3135 = vxpose.xlu0.b32.cont [11/16] 0.0, 128
      %3136 = vxpose.xlu0.b32.cont [12/16] 0.0, 128
      %3137 = vxpose.xlu0.b32.cont [13/16] 0.0, 128
      %3138 = vxpose.xlu0.b32.cont [14/16] 0.0, 128
      %3139 = vxpose.xlu0.b32.cont [15/16] 0.0, 128
      %3140 = vxpose.xlu0.b32.end [16/16] 0.0, 128
      %v3141 = vpop.trf.xlu0
      %v3142 = vpop.trf.xlu0
      %v3143 = vpop.trf.xlu0
      %v3144 = vpop.trf.xlu0
      %v3145 = vpop.trf.xlu0
      %v3146 = vpop.trf.xlu0
      %v3147 = vpop.trf.xlu0
      %v3148 = vpop.trf.xlu0
      %v3149 = vpop.trf.xlu0
      %v3150 = vpop.trf.xlu0
      %v3151 = vpop.trf.xlu0
      %v3152 = vpop.trf.xlu0
      %v3153 = vpop.trf.xlu0
      %v3154 = vpop.trf.xlu0
      %v3155 = vpop.trf.xlu0
      %v3156 = vpop.trf.xlu0
      %3157 = vxpose.xlu0.b32.start [1/16] %v2991, 128
      %3158 = vxpose.xlu0.b32.cont [2/16] %v2996, 128
      %3159 = vxpose.xlu0.b32.cont [3/16] 0.0, 128
      %3160 = vxpose.xlu0.b32.cont [4/16] 0.0, 128
      %3161 = vxpose.xlu0.b32.cont [5/16] 0.0, 128
      %3162 = vxpose.xlu0.b32.cont [6/16] 0.0, 128
      %3163 = vxpose.xlu0.b32.cont [7/16] 0.0, 128
      %3164 = vxpose.xlu0.b32.cont [8/16] 0.0, 128
      %3165 = vxpose.xlu0.b32.cont [9/16] 0.0, 128
      %3166 = vxpose.xlu0.b32.cont [10/16] 0.0, 128
      %3167 = vxpose.xlu0.b32.cont [11/16] 0.0, 128
      %3168 = vxpose.xlu0.b32.cont [12/16] 0.0, 128
      %3169 = vxpose.xlu0.b32.cont [13/16] 0.0, 128
      %3170 = vxpose.xlu0.b32.cont [14/16] 0.0, 128
      %3171 = vxpose.xlu0.b32.cont [15/16] 0.0, 128
      %3172 = vxpose.xlu0.b32.end [16/16] 0.0, 128
      %v3173 = vpop.trf.xlu0
      %v3174 = vpop.trf.xlu0
      %v3175 = vpop.trf.xlu0
      %v3176 = vpop.trf.xlu0
      %v3177 = vpop.trf.xlu0
      %v3178 = vpop.trf.xlu0
      %v3179 = vpop.trf.xlu0
      %v3180 = vpop.trf.xlu0
      %v3181 = vpop.trf.xlu0
      %v3182 = vpop.trf.xlu0
      %v3183 = vpop.trf.xlu0
      %v3184 = vpop.trf.xlu0
      %v3185 = vpop.trf.xlu0
      %v3186 = vpop.trf.xlu0
      %v3187 = vpop.trf.xlu0
      %v3188 = vpop.trf.xlu0
      %3189 = vxpose.xlu0.b32.start [1/16] %v3001, 128
      %3190 = vxpose.xlu0.b32.cont [2/16] %v3006, 128
      %3191 = vxpose.xlu0.b32.cont [3/16] 0.0, 128
      %3192 = vxpose.xlu0.b32.cont [4/16] 0.0, 128
      %3193 = vxpose.xlu0.b32.cont [5/16] 0.0, 128
      %3194 = vxpose.xlu0.b32.cont [6/16] 0.0, 128
      %3195 = vxpose.xlu0.b32.cont [7/16] 0.0, 128
      %3196 = vxpose.xlu0.b32.cont [8/16] 0.0, 128
      %3197 = vxpose.xlu0.b32.cont [9/16] 0.0, 128
      %3198 = vxpose.xlu0.b32.cont [10/16] 0.0, 128
      %3199 = vxpose.xlu0.b32.cont [11/16] 0.0, 128
      %3200 = vxpose.xlu0.b32.cont [12/16] 0.0, 128
      %3201 = vxpose.xlu0.b32.cont [13/16] 0.0, 128
      %3202 = vxpose.xlu0.b32.cont [14/16] 0.0, 128
      %3203 = vxpose.xlu0.b32.cont [15/16] 0.0, 128
      %3204 = vxpose.xlu0.b32.end [16/16] 0.0, 128
      %v3205 = vpop.trf.xlu0
      %v3206 = vpop.trf.xlu0
      %v3207 = vpop.trf.xlu0
      %v3208 = vpop.trf.xlu0
      %v3209 = vpop.trf.xlu0
      %v3210 = vpop.trf.xlu0
      %v3211 = vpop.trf.xlu0
      %v3212 = vpop.trf.xlu0
      %v3213 = vpop.trf.xlu0
      %v3214 = vpop.trf.xlu0
      %v3215 = vpop.trf.xlu0
      %v3216 = vpop.trf.xlu0
      %v3217 = vpop.trf.xlu0
      %v3218 = vpop.trf.xlu0
      %v3219 = vpop.trf.xlu0
      %v3220 = vpop.trf.xlu0
      %3221 = vxpose.xlu0.b32.start [1/16] %v3011, 128
      %3222 = vxpose.xlu0.b32.cont [2/16] %v3016, 128
      %3223 = vxpose.xlu0.b32.cont [3/16] 0.0, 128
      %3224 = vxpose.xlu0.b32.cont [4/16] 0.0, 128
      %3225 = vxpose.xlu0.b32.cont [5/16] 0.0, 128
      %3226 = vxpose.xlu0.b32.cont [6/16] 0.0, 128
      %3227 = vxpose.xlu0.b32.cont [7/16] 0.0, 128
      %3228 = vxpose.xlu0.b32.cont [8/16] 0.0, 128
      %3229 = vxpose.xlu0.b32.cont [9/16] 0.0, 128
      %3230 = vxpose.xlu0.b32.cont [10/16] 0.0, 128
      %3231 = vxpose.xlu0.b32.cont [11/16] 0.0, 128
      %3232 = vxpose.xlu0.b32.cont [12/16] 0.0, 128
      %3233 = vxpose.xlu0.b32.cont [13/16] 0.0, 128
      %3234 = vxpose.xlu0.b32.cont [14/16] 0.0, 128
      %3235 = vxpose.xlu0.b32.cont [15/16] 0.0, 128
      %3236 = vxpose.xlu0.b32.end [16/16] 0.0, 128
      %v3237 = vpop.trf.xlu0
      %v3238 = vpop.trf.xlu0
      %v3239 = vpop.trf.xlu0
      %v3240 = vpop.trf.xlu0
      %v3241 = vpop.trf.xlu0
      %v3242 = vpop.trf.xlu0
      %v3243 = vpop.trf.xlu0
      %v3244 = vpop.trf.xlu0
      %v3245 = vpop.trf.xlu0
      %v3246 = vpop.trf.xlu0
      %v3247 = vpop.trf.xlu0
      %v3248 = vpop.trf.xlu0
      %v3249 = vpop.trf.xlu0
      %v3250 = vpop.trf.xlu0
      %v3251 = vpop.trf.xlu0
      %v3252 = vpop.trf.xlu0
      %3253 = vxpose.xlu0.b32.start [1/16] %v3021, 128
      %3254 = vxpose.xlu0.b32.cont [2/16] %v3026, 128
      %3255 = vxpose.xlu0.b32.cont [3/16] 0.0, 128
      %3256 = vxpose.xlu0.b32.cont [4/16] 0.0, 128
      %3257 = vxpose.xlu0.b32.cont [5/16] 0.0, 128
      %3258 = vxpose.xlu0.b32.cont [6/16] 0.0, 128
      %3259 = vxpose.xlu0.b32.cont [7/16] 0.0, 128
      %3260 = vxpose.xlu0.b32.cont [8/16] 0.0, 128
      %3261 = vxpose.xlu0.b32.cont [9/16] 0.0, 128
      %3262 = vxpose.xlu0.b32.cont [10/16] 0.0, 128
      %3263 = vxpose.xlu0.b32.cont [11/16] 0.0, 128
      %3264 = vxpose.xlu0.b32.cont [12/16] 0.0, 128
      %3265 = vxpose.xlu0.b32.cont [13/16] 0.0, 128
      %3266 = vxpose.xlu0.b32.cont [14/16] 0.0, 128
      %3267 = vxpose.xlu0.b32.cont [15/16] 0.0, 128
      %3268 = vxpose.xlu0.b32.end [16/16] 0.0, 128
      %v3269 = vpop.trf.xlu0
      %v3270 = vpop.trf.xlu0
      %v3271 = vpop.trf.xlu0
      %v3272 = vpop.trf.xlu0
      %v3273 = vpop.trf.xlu0
      %v3274 = vpop.trf.xlu0
      %v3275 = vpop.trf.xlu0
      %v3276 = vpop.trf.xlu0
      %v3277 = vpop.trf.xlu0
      %v3278 = vpop.trf.xlu0
      %v3279 = vpop.trf.xlu0
      %v3280 = vpop.trf.xlu0
      %v3281 = vpop.trf.xlu0
      %v3282 = vpop.trf.xlu0
      %v3283 = vpop.trf.xlu0
      %v3284 = vpop.trf.xlu0
      %v3285 = vadd.f32 %v2871, %v3045
      %v3286 = vadd.f32 %v2876, %v3046
      %v3287 = vadd.f32 %v2881, %v3077
      %v3288 = vadd.f32 %v2886, %v3078
      %v3289 = vadd.f32 %v2891, %v3109
      %v3290 = vadd.f32 %v2896, %v3110
      %v3291 = vadd.f32 %v2901, %v3141
      %v3292 = vadd.f32 %v2906, %v3142
      %v3293 = vadd.f32 %v2911, %v3173
      %v3294 = vadd.f32 %v2916, %v3174
      %v3295 = vadd.f32 %v2921, %v3205
      %v3296 = vadd.f32 %v2926, %v3206
      %v3297 = vadd.f32 %v2931, %v3237
      %v3298 = vadd.f32 %v2936, %v3238
      %v3299 = vadd.f32 %v2941, %v3269
      %v3300 = vadd.f32 %v2946, %v3270
      %v3301 = vsel %vm390, %v2229, 0.0
      %3302 = vadd.xlane.f32.xlu0 %v3301
      %v3303 = vpop.xlane.xlu0 %3302
      %v3304 = vsel %vm390, %v2234, 0.0
      %3305 = vadd.xlane.f32.xlu0 %v3304
      %v3306 = vpop.xlane.xlu0 %3305
      %v3307 = vsel %vm390, %v2310, 0.0
      %3308 = vadd.xlane.f32.xlu0 %v3307
      %v3309 = vpop.xlane.xlu0 %3308
      %v3310 = vsel %vm390, %v2315, 0.0
      %3311 = vadd.xlane.f32.xlu0 %v3310
      %v3312 = vpop.xlane.xlu0 %3311
      %v3313 = vsel %vm390, %v2391, 0.0
      %3314 = vadd.xlane.f32.xlu0 %v3313
      %v3315 = vpop.xlane.xlu0 %3314
      %v3316 = vsel %vm390, %v2396, 0.0
      %3317 = vadd.xlane.f32.xlu0 %v3316
      %v3318 = vpop.xlane.xlu0 %3317
      %v3319 = vsel %vm390, %v2472, 0.0
      %3320 = vadd.xlane.f32.xlu0 %v3319
      %v3321 = vpop.xlane.xlu0 %3320
      %v3322 = vsel %vm390, %v2477, 0.0
      %3323 = vadd.xlane.f32.xlu0 %v3322
      %v3324 = vpop.xlane.xlu0 %3323
      %v3325 = vsel %vm390, %v2553, 0.0
      %3326 = vadd.xlane.f32.xlu0 %v3325
      %v3327 = vpop.xlane.xlu0 %3326
      %v3328 = vsel %vm390, %v2558, 0.0
      %3329 = vadd.xlane.f32.xlu0 %v3328
      %v3330 = vpop.xlane.xlu0 %3329
      %v3331 = vsel %vm390, %v2634, 0.0
      %3332 = vadd.xlane.f32.xlu0 %v3331
      %v3333 = vpop.xlane.xlu0 %3332
      %v3334 = vsel %vm390, %v2639, 0.0
      %3335 = vadd.xlane.f32.xlu0 %v3334
      %v3336 = vpop.xlane.xlu0 %3335
      %v3337 = vsel %vm390, %v2715, 0.0
      %3338 = vadd.xlane.f32.xlu0 %v3337
      %v3339 = vpop.xlane.xlu0 %3338
      %v3340 = vsel %vm390, %v2720, 0.0
      %3341 = vadd.xlane.f32.xlu0 %v3340
      %v3342 = vpop.xlane.xlu0 %3341
      %v3343 = vsel %vm390, %v2796, 0.0
      %3344 = vadd.xlane.f32.xlu0 %v3343
      %v3345 = vpop.xlane.xlu0 %3344
      %v3346 = vsel %vm390, %v2801, 0.0
      %3347 = vadd.xlane.f32.xlu0 %v3346
      %v3348 = vpop.xlane.xlu0 %3347
      %v3349 = vadd.f32 %v3301, %v3304
      %v3350 = vrot.slane %v3349, 4
      %v3351 = vadd.f32 %v3349, %v3350
      %v3352 = vrot.slane %v3351, 2
      %v3353 = vadd.f32 %v3351, %v3352
      %v3354 = vrot.slane %v3353, 1
      %v3355 = vadd.f32 %v3353, %v3354
      %v3356 = vadd.f32 %v3307, %v3310
      %v3357 = vrot.slane %v3356, 4
      %v3358 = vadd.f32 %v3356, %v3357
      %v3359 = vrot.slane %v3358, 2
      %v3360 = vadd.f32 %v3358, %v3359
      %v3361 = vrot.slane %v3360, 1
      %v3362 = vadd.f32 %v3360, %v3361
      %v3363 = vadd.f32 %v3313, %v3316
      %v3364 = vrot.slane %v3363, 4
      %v3365 = vadd.f32 %v3363, %v3364
      %v3366 = vrot.slane %v3365, 2
      %v3367 = vadd.f32 %v3365, %v3366
      %v3368 = vrot.slane %v3367, 1
      %v3369 = vadd.f32 %v3367, %v3368
      %v3370 = vadd.f32 %v3319, %v3322
      %v3371 = vrot.slane %v3370, 4
      %v3372 = vadd.f32 %v3370, %v3371
      %v3373 = vrot.slane %v3372, 2
      %v3374 = vadd.f32 %v3372, %v3373
      %v3375 = vrot.slane %v3374, 1
      %v3376 = vadd.f32 %v3374, %v3375
      %v3377 = vadd.f32 %v3325, %v3328
      %v3378 = vrot.slane %v3377, 4
      %v3379 = vadd.f32 %v3377, %v3378
      %v3380 = vrot.slane %v3379, 2
      %v3381 = vadd.f32 %v3379, %v3380
      %v3382 = vrot.slane %v3381, 1
      %v3383 = vadd.f32 %v3381, %v3382
      %v3384 = vadd.f32 %v3331, %v3334
      %v3385 = vrot.slane %v3384, 4
      %v3386 = vadd.f32 %v3384, %v3385
      %v3387 = vrot.slane %v3386, 2
      %v3388 = vadd.f32 %v3386, %v3387
      %v3389 = vrot.slane %v3388, 1
      %v3390 = vadd.f32 %v3388, %v3389
      %v3391 = vadd.f32 %v3337, %v3340
      %v3392 = vrot.slane %v3391, 4
      %v3393 = vadd.f32 %v3391, %v3392
      %v3394 = vrot.slane %v3393, 2
      %v3395 = vadd.f32 %v3393, %v3394
      %v3396 = vrot.slane %v3395, 1
      %v3397 = vadd.f32 %v3395, %v3396
      %v3398 = vadd.f32 %v3343, %v3346
      %v3399 = vrot.slane %v3398, 4
      %v3400 = vadd.f32 %v3398, %v3399
      %v3401 = vrot.slane %v3400, 2
      %v3402 = vadd.f32 %v3400, %v3401
      %v3403 = vrot.slane %v3402, 1
      %v3404 = vadd.f32 %v3402, %v3403
      %v3405 = vmul.f32 %v2229, %v342
      %v3406 = vmul.f32 %v2234, %v343
      %v3407 = vmul.f32 %v2310, %v342
      %v3408 = vmul.f32 %v2315, %v343
      %v3409 = vmul.f32 %v2391, %v342
      %v3410 = vmul.f32 %v2396, %v343
      %v3411 = vmul.f32 %v2472, %v342
      %v3412 = vmul.f32 %v2477, %v343
      %v3413 = vmul.f32 %v2553, %v342
      %v3414 = vmul.f32 %v2558, %v343
      %v3415 = vmul.f32 %v2634, %v342
      %v3416 = vmul.f32 %v2639, %v343
      %v3417 = vmul.f32 %v2715, %v342
      %v3418 = vmul.f32 %v2720, %v343
      %v3419 = vmul.f32 %v2796, %v342
      %v3420 = vmul.f32 %v2801, %v343
      %v3421 = vsel %vm390, %v3405, 0.0
      %3422 = vadd.xlane.f32.xlu0 %v3421
      %v3423 = vpop.xlane.xlu0 %3422
      %v3424 = vsel %vm390, %v3406, 0.0
      %3425 = vadd.xlane.f32.xlu0 %v3424
      %v3426 = vpop.xlane.xlu0 %3425
      %v3427 = vsel %vm390, %v3407, 0.0
      %3428 = vadd.xlane.f32.xlu0 %v3427
      %v3429 = vpop.xlane.xlu0 %3428
      %v3430 = vsel %vm390, %v3408, 0.0
      %3431 = vadd.xlane.f32.xlu0 %v3430
      %v3432 = vpop.xlane.xlu0 %3431
      %v3433 = vsel %vm390, %v3409, 0.0
      %3434 = vadd.xlane.f32.xlu0 %v3433
      %v3435 = vpop.xlane.xlu0 %3434
      %v3436 = vsel %vm390, %v3410, 0.0
      %3437 = vadd.xlane.f32.xlu0 %v3436
      %v3438 = vpop.xlane.xlu0 %3437
      %v3439 = vsel %vm390, %v3411, 0.0
      %3440 = vadd.xlane.f32.xlu0 %v3439
      %v3441 = vpop.xlane.xlu0 %3440
      %v3442 = vsel %vm390, %v3412, 0.0
      %3443 = vadd.xlane.f32.xlu0 %v3442
      %v3444 = vpop.xlane.xlu0 %3443
      %v3445 = vsel %vm390, %v3413, 0.0
      %3446 = vadd.xlane.f32.xlu0 %v3445
      %v3447 = vpop.xlane.xlu0 %3446
      %v3448 = vsel %vm390, %v3414, 0.0
      %3449 = vadd.xlane.f32.xlu0 %v3448
      %v3450 = vpop.xlane.xlu0 %3449
      %v3451 = vsel %vm390, %v3415, 0.0
      %3452 = vadd.xlane.f32.xlu0 %v3451
      %v3453 = vpop.xlane.xlu0 %3452
      %v3454 = vsel %vm390, %v3416, 0.0
      %3455 = vadd.xlane.f32.xlu0 %v3454
      %v3456 = vpop.xlane.xlu0 %3455
      %v3457 = vsel %vm390, %v3417, 0.0
      %3458 = vadd.xlane.f32.xlu0 %v3457
      %v3459 = vpop.xlane.xlu0 %3458
      %v3460 = vsel %vm390, %v3418, 0.0
      %3461 = vadd.xlane.f32.xlu0 %v3460
      %v3462 = vpop.xlane.xlu0 %3461
      %v3463 = vsel %vm390, %v3419, 0.0
      %3464 = vadd.xlane.f32.xlu0 %v3463
      %v3465 = vpop.xlane.xlu0 %3464
      %v3466 = vsel %vm390, %v3420, 0.0
      %3467 = vadd.xlane.f32.xlu0 %v3466
      %v3468 = vpop.xlane.xlu0 %3467
      %v3485 = vlaneseq
      %v3486 = vshrl.u32 %v3485, 7
      %v3487 = vsub.s32 %v337, %v3486
      %v3488 = vrot.slane %v3303, %v3487
      %v3489 = vlaneseq
      %v3490 = vshrl.u32 %v3489, 7
      %v3491 = vsub.s32 %v1405, %v3490
      %v3492 = vrot.slane %v3306, %v3491
      %v3493 = vsel %vm1410, %v3492, %v3488
      %v3494 = vlaneseq
      %v3495 = vshrl.u32 %v3494, 7
      %v3496 = vsub.s32 %v337, %v3495
      %v3497 = vrot.slane %v3309, %v3496
      %v3498 = vlaneseq
      %v3499 = vshrl.u32 %v3498, 7
      %v3500 = vsub.s32 %v1405, %v3499
      %v3501 = vrot.slane %v3312, %v3500
      %v3502 = vsel %vm1410, %v3501, %v3497
      %v3503 = vlaneseq
      %v3504 = vshrl.u32 %v3503, 7
      %v3505 = vsub.s32 %v337, %v3504
      %v3506 = vrot.slane %v3315, %v3505
      %v3507 = vlaneseq
      %v3508 = vshrl.u32 %v3507, 7
      %v3509 = vsub.s32 %v1405, %v3508
      %v3510 = vrot.slane %v3318, %v3509
      %v3511 = vsel %vm1410, %v3510, %v3506
      %v3512 = vlaneseq
      %v3513 = vshrl.u32 %v3512, 7
      %v3514 = vsub.s32 %v337, %v3513
      %v3515 = vrot.slane %v3321, %v3514
      %v3516 = vlaneseq
      %v3517 = vshrl.u32 %v3516, 7
      %v3518 = vsub.s32 %v1405, %v3517
      %v3519 = vrot.slane %v3324, %v3518
      %v3520 = vsel %vm1410, %v3519, %v3515
      %v3521 = vlaneseq
      %v3522 = vshrl.u32 %v3521, 7
      %v3523 = vsub.s32 %v337, %v3522
      %v3524 = vrot.slane %v3327, %v3523
      %v3525 = vlaneseq
      %v3526 = vshrl.u32 %v3525, 7
      %v3527 = vsub.s32 %v1405, %v3526
      %v3528 = vrot.slane %v3330, %v3527
      %v3529 = vsel %vm1410, %v3528, %v3524
      %v3530 = vlaneseq
      %v3531 = vshrl.u32 %v3530, 7
      %v3532 = vsub.s32 %v337, %v3531
      %v3533 = vrot.slane %v3333, %v3532
      %v3534 = vlaneseq
      %v3535 = vshrl.u32 %v3534, 7
      %v3536 = vsub.s32 %v1405, %v3535
      %v3537 = vrot.slane %v3336, %v3536
      %v3538 = vsel %vm1410, %v3537, %v3533
      %v3539 = vlaneseq
      %v3540 = vshrl.u32 %v3539, 7
      %v3541 = vsub.s32 %v337, %v3540
      %v3542 = vrot.slane %v3339, %v3541
      %v3543 = vlaneseq
      %v3544 = vshrl.u32 %v3543, 7
      %v3545 = vsub.s32 %v1405, %v3544
      %v3546 = vrot.slane %v3342, %v3545
      %v3547 = vsel %vm1410, %v3546, %v3542
      %v3548 = vlaneseq
      %v3549 = vshrl.u32 %v3548, 7
      %v3550 = vsub.s32 %v337, %v3549
      %v3551 = vrot.slane %v3345, %v3550
      %v3552 = vlaneseq
      %v3553 = vshrl.u32 %v3552, 7
      %v3554 = vsub.s32 %v1405, %v3553
      %v3555 = vrot.slane %v3348, %v3554
      %v3556 = vsel %vm1410, %v3555, %v3551
      %v3557 = vsel %vm1439, %v3502, %v3493
      %v3558 = vsel %vm1441, %v3511, %v3557
      %v3559 = vsel %vm1443, %v3520, %v3558
      %vm3560 = vcmask 1044484
      %v3561 = vsel %vm3560, %v3529, %v3559
      %vm3562 = vcmask 1045509
      %v3563 = vsel %vm3562, %v3538, %v3561
      %vm3564 = vcmask 1046534
      %v3565 = vsel %vm3564, %v3547, %v3563
      %vm3566 = vcmask 1047559
      %v3567 = vsel %vm3566, %v3556, %v3565
      %v3569 = vsel %vm390, %v3567, 0.0
      %3570 = vadd.xlane.f32.xlu0 %v3569
      %v3571 = vpop.xlane.xlu0 %3570
      %v3588 = vlaneseq
      %v3589 = vshrl.u32 %v3588, 7
      %v3590 = vsub.s32 %v337, %v3589
      %v3591 = vrot.slane %v3423, %v3590
      %v3592 = vlaneseq
      %v3593 = vshrl.u32 %v3592, 7
      %v3594 = vsub.s32 %v1405, %v3593
      %v3595 = vrot.slane %v3426, %v3594
      %v3596 = vsel %vm1410, %v3595, %v3591
      %v3597 = vlaneseq
      %v3598 = vshrl.u32 %v3597, 7
      %v3599 = vsub.s32 %v337, %v3598
      %v3600 = vrot.slane %v3429, %v3599
      %v3601 = vlaneseq
      %v3602 = vshrl.u32 %v3601, 7
      %v3603 = vsub.s32 %v1405, %v3602
      %v3604 = vrot.slane %v3432, %v3603
      %v3605 = vsel %vm1410, %v3604, %v3600
      %v3606 = vlaneseq
      %v3607 = vshrl.u32 %v3606, 7
      %v3608 = vsub.s32 %v337, %v3607
      %v3609 = vrot.slane %v3435, %v3608
      %v3610 = vlaneseq
      %v3611 = vshrl.u32 %v3610, 7
      %v3612 = vsub.s32 %v1405, %v3611
      %v3613 = vrot.slane %v3438, %v3612
      %v3614 = vsel %vm1410, %v3613, %v3609
      %v3615 = vlaneseq
      %v3616 = vshrl.u32 %v3615, 7
      %v3617 = vsub.s32 %v337, %v3616
      %v3618 = vrot.slane %v3441, %v3617
      %v3619 = vlaneseq
      %v3620 = vshrl.u32 %v3619, 7
      %v3621 = vsub.s32 %v1405, %v3620
      %v3622 = vrot.slane %v3444, %v3621
      %v3623 = vsel %vm1410, %v3622, %v3618
      %v3624 = vlaneseq
      %v3625 = vshrl.u32 %v3624, 7
      %v3626 = vsub.s32 %v337, %v3625
      %v3627 = vrot.slane %v3447, %v3626
      %v3628 = vlaneseq
      %v3629 = vshrl.u32 %v3628, 7
      %v3630 = vsub.s32 %v1405, %v3629
      %v3631 = vrot.slane %v3450, %v3630
      %v3632 = vsel %vm1410, %v3631, %v3627
      %v3633 = vlaneseq
      %v3634 = vshrl.u32 %v3633, 7
      %v3635 = vsub.s32 %v337, %v3634
      %v3636 = vrot.slane %v3453, %v3635
      %v3637 = vlaneseq
      %v3638 = vshrl.u32 %v3637, 7
      %v3639 = vsub.s32 %v1405, %v3638
      %v3640 = vrot.slane %v3456, %v3639
      %v3641 = vsel %vm1410, %v3640, %v3636
      %v3642 = vlaneseq
      %v3643 = vshrl.u32 %v3642, 7
      %v3644 = vsub.s32 %v337, %v3643
      %v3645 = vrot.slane %v3459, %v3644
      %v3646 = vlaneseq
      %v3647 = vshrl.u32 %v3646, 7
      %v3648 = vsub.s32 %v1405, %v3647
      %v3649 = vrot.slane %v3462, %v3648
      %v3650 = vsel %vm1410, %v3649, %v3645
      %v3651 = vlaneseq
      %v3652 = vshrl.u32 %v3651, 7
      %v3653 = vsub.s32 %v337, %v3652
      %v3654 = vrot.slane %v3465, %v3653
      %v3655 = vlaneseq
      %v3656 = vshrl.u32 %v3655, 7
      %v3657 = vsub.s32 %v1405, %v3656
      %v3658 = vrot.slane %v3468, %v3657
      %v3659 = vsel %vm1410, %v3658, %v3654
      %v3660 = vsel %vm1439, %v3605, %v3596
      %v3661 = vsel %vm1441, %v3614, %v3660
      %v3662 = vsel %vm1443, %v3623, %v3661
      %v3663 = vsel %vm3560, %v3632, %v3662
      %v3664 = vsel %vm3562, %v3641, %v3663
      %v3665 = vsel %vm3564, %v3650, %v3664
      %v3666 = vsel %vm3566, %v3659, %v3665
      %vm3668 = vcmask 64512
      %v3670 = vsel %vm3668, %v2152, 0
      %3672 = vmatprep.subr.mxu0 0.0
      %3673 = vmatpush1.msra.mxu0 %v3666
      %3674 = vmatprep.subr.mxu0 0.0
      %3675 = vmatpush1.msra.mxu0 0.0
      %3676 = vmatprep.subr.mxu0 0.0
      %3677 = vmatpush1.msra.mxu0 0.0
      %3678 = vmatprep.subr.mxu0 0.0
      %3679 = vmatpush1.msra.mxu0 0.0
      %3680 = vmatprep.subr.mxu0 0.0
      %3681 = vmatpush1.msra.mxu0 0.0
      %3682 = vmatprep.subr.mxu0 0.0
      %3683 = vmatpush1.msra.mxu0 0.0
      %3684 = vmatprep.subr.mxu0 0.0
      %3685 = vmatpush1.msra.mxu0 0.0
      %3686 = vmatprep.subr.mxu0 0.0
      %3687 = vmatpush1.msra.mxu0 0.0
      %3688 = vmatprep.subr.mxu0 0.0
      %3689 = vmatpush1.msra.mxu0 0.0
      %3690 = vmatprep.subr.mxu0 0.0
      %3691 = vmatpush1.msra.mxu0 0.0
      %3692 = vmatprep.subr.mxu0 0.0
      %3693 = vmatpush1.msra.mxu0 0.0
      %3694 = vmatprep.subr.mxu0 0.0
      %3695 = vmatpush1.msra.mxu0 0.0
      %3696 = vmatprep.subr.mxu0 0.0
      %3697 = vmatpush1.msra.mxu0 0.0
      %3698 = vmatprep.subr.mxu0 0.0
      %3699 = vmatpush1.msra.mxu0 0.0
      %3700 = vmatprep.subr.mxu0 0.0
      %3701 = vmatpush1.msra.mxu0 0.0
      %3702 = vmatprep.subr.mxu0 0.0
      %3703 = vmatpush1.msra.mxu0 0.0
      %3704 = vmatprep.subr.mxu0 0.0
      %3705 = vmatpush1.msra.mxu0 0.0
      %3706 = vmatprep.subr.mxu0 0.0
      %3707 = vmatpush1.msra.mxu0 0.0
      %3708 = vmatprep.subr.mxu0 0.0
      %3709 = vmatpush1.msra.mxu0 0.0
      %3710 = vmatprep.subr.mxu0 0.0
      %3711 = vmatpush1.msra.mxu0 0.0
      %3712 = vmatprep.subr.mxu0 0.0
      %3713 = vmatpush1.msra.mxu0 0.0
      %3714 = vmatprep.subr.mxu0 0.0
      %3715 = vmatpush1.msra.mxu0 0.0
      %3716 = vmatprep.subr.mxu0 0.0
      %3717 = vmatpush1.msra.mxu0 0.0
      %3718 = vmatprep.subr.mxu0 0.0
      %3719 = vmatpush1.msra.mxu0 0.0
      %3720 = vmatprep.subr.mxu0 0.0
      %3721 = vmatpush1.msra.mxu0 0.0
      %3722 = vmatprep.subr.mxu0 0.0
      %3723 = vmatpush1.msra.mxu0 0.0
      %3724 = vmatprep.subr.mxu0 0.0
      %3725 = vmatpush1.msra.mxu0 0.0
      %3726 = vmatprep.subr.mxu0 0.0
      %3727 = vmatpush1.msra.mxu0 0.0
      %3728 = vmatprep.subr.mxu0 0.0
      %3729 = vmatpush1.msra.mxu0 0.0
      %3730 = vmatprep.subr.mxu0 0.0
      %3731 = vmatpush1.msra.mxu0 0.0
      %3732 = vmatprep.subr.mxu0 0.0
      %3733 = vmatpush1.msra.mxu0 0.0
      %3734 = vmatprep.subr.mxu0 0.0
      %3735 = vmatpush1.msra.mxu0 0.0
      %3736 = vmatprep.mubr.f32.mxu0 0.0
      %3737 = vmatmul.mubr.f32.gmra.mrb[0].mxu0 %v3670
      %v3738 = vpop.f32.mrb[0].mxu0
      %v3739 = vadd.f32 0.0, %v3738
      %v3740 = vpop.f32.mrb[0].mxu0
      %3741 = vdwg.mxu0
      %v3743 = vsel %vm3668, %v2150, 0
      %3745 = vmatprep.subr.mxu0 0.0
      %3746 = vmatpush1.msra.mxu0 %v3567
      %3747 = vmatprep.subr.mxu0 0.0
      %3748 = vmatpush1.msra.mxu0 0.0
      %3749 = vmatprep.subr.mxu0 0.0
      %3750 = vmatpush1.msra.mxu0 0.0
      %3751 = vmatprep.subr.mxu0 0.0
      %3752 = vmatpush1.msra.mxu0 0.0
      %3753 = vmatprep.subr.mxu0 0.0
      %3754 = vmatpush1.msra.mxu0 0.0
      %3755 = vmatprep.subr.mxu0 0.0
      %3756 = vmatpush1.msra.mxu0 0.0
      %3757 = vmatprep.subr.mxu0 0.0
      %3758 = vmatpush1.msra.mxu0 0.0
      %3759 = vmatprep.subr.mxu0 0.0
      %3760 = vmatpush1.msra.mxu0 0.0
      %3761 = vmatprep.subr.mxu0 0.0
      %3762 = vmatpush1.msra.mxu0 0.0
      %3763 = vmatprep.subr.mxu0 0.0
      %3764 = vmatpush1.msra.mxu0 0.0
      %3765 = vmatprep.subr.mxu0 0.0
      %3766 = vmatpush1.msra.mxu0 0.0
      %3767 = vmatprep.subr.mxu0 0.0
      %3768 = vmatpush1.msra.mxu0 0.0
      %3769 = vmatprep.subr.mxu0 0.0
      %3770 = vmatpush1.msra.mxu0 0.0
      %3771 = vmatprep.subr.mxu0 0.0
      %3772 = vmatpush1.msra.mxu0 0.0
      %3773 = vmatprep.subr.mxu0 0.0
      %3774 = vmatpush1.msra.mxu0 0.0
      %3775 = vmatprep.subr.mxu0 0.0
      %3776 = vmatpush1.msra.mxu0 0.0
      %3777 = vmatprep.subr.mxu0 0.0
      %3778 = vmatpush1.msra.mxu0 0.0
      %3779 = vmatprep.subr.mxu0 0.0
      %3780 = vmatpush1.msra.mxu0 0.0
      %3781 = vmatprep.subr.mxu0 0.0
      %3782 = vmatpush1.msra.mxu0 0.0
      %3783 = vmatprep.subr.mxu0 0.0
      %3784 = vmatpush1.msra.mxu0 0.0
      %3785 = vmatprep.subr.mxu0 0.0
      %3786 = vmatpush1.msra.mxu0 0.0
      %3787 = vmatprep.subr.mxu0 0.0
      %3788 = vmatpush1.msra.mxu0 0.0
      %3789 = vmatprep.subr.mxu0 0.0
      %3790 = vmatpush1.msra.mxu0 0.0
      %3791 = vmatprep.subr.mxu0 0.0
      %3792 = vmatpush1.msra.mxu0 0.0
      %3793 = vmatprep.subr.mxu0 0.0
      %3794 = vmatpush1.msra.mxu0 0.0
      %3795 = vmatprep.subr.mxu0 0.0
      %3796 = vmatpush1.msra.mxu0 0.0
      %3797 = vmatprep.subr.mxu0 0.0
      %3798 = vmatpush1.msra.mxu0 0.0
      %3799 = vmatprep.subr.mxu0 0.0
      %3800 = vmatpush1.msra.mxu0 0.0
      %3801 = vmatprep.subr.mxu0 0.0
      %3802 = vmatpush1.msra.mxu0 0.0
      %3803 = vmatprep.subr.mxu0 0.0
      %3804 = vmatpush1.msra.mxu0 0.0
      %3805 = vmatprep.subr.mxu0 0.0
      %3806 = vmatpush1.msra.mxu0 0.0
      %3807 = vmatprep.subr.mxu0 0.0
      %3808 = vmatpush1.msra.mxu0 0.0
      %3809 = vmatprep.mubr.f32.mxu0 0.0
      %3810 = vmatmul.mubr.f32.gmra.mrb[0].mxu0 %v3743
      %v3811 = vpop.f32.mrb[0].mxu0
      %v3812 = vadd.f32 %v3739, %v3811
      %v3813 = vpop.f32.mrb[0].mxu0
      %3814 = vdwg.mxu0
      %v3816 = vsel %vm3668, %v2154, 0
      %3818 = vmatprep.subr.mxu0 0.0
      %3819 = vmatpush1.msra.mxu0 %v3571
      %3820 = vmatprep.subr.mxu0 0.0
      %3821 = vmatpush1.msra.mxu0 0.0
      %3822 = vmatprep.subr.mxu0 0.0
      %3823 = vmatpush1.msra.mxu0 0.0
      %3824 = vmatprep.subr.mxu0 0.0
      %3825 = vmatpush1.msra.mxu0 0.0
      %3826 = vmatprep.subr.mxu0 0.0
      %3827 = vmatpush1.msra.mxu0 0.0
      %3828 = vmatprep.subr.mxu0 0.0
      %3829 = vmatpush1.msra.mxu0 0.0
      %3830 = vmatprep.subr.mxu0 0.0
      %3831 = vmatpush1.msra.mxu0 0.0
      %3832 = vmatprep.subr.mxu0 0.0
      %3833 = vmatpush1.msra.mxu0 0.0
      %3834 = vmatprep.subr.mxu0 0.0
      %3835 = vmatpush1.msra.mxu0 0.0
      %3836 = vmatprep.subr.mxu0 0.0
      %3837 = vmatpush1.msra.mxu0 0.0
      %3838 = vmatprep.subr.mxu0 0.0
      %3839 = vmatpush1.msra.mxu0 0.0
      %3840 = vmatprep.subr.mxu0 0.0
      %3841 = vmatpush1.msra.mxu0 0.0
      %3842 = vmatprep.subr.mxu0 0.0
      %3843 = vmatpush1.msra.mxu0 0.0
      %3844 = vmatprep.subr.mxu0 0.0
      %3845 = vmatpush1.msra.mxu0 0.0
      %3846 = vmatprep.subr.mxu0 0.0
      %3847 = vmatpush1.msra.mxu0 0.0
      %3848 = vmatprep.subr.mxu0 0.0
      %3849 = vmatpush1.msra.mxu0 0.0
      %3850 = vmatprep.subr.mxu0 0.0
      %3851 = vmatpush1.msra.mxu0 0.0
      %3852 = vmatprep.subr.mxu0 0.0
      %3853 = vmatpush1.msra.mxu0 0.0
      %3854 = vmatprep.subr.mxu0 0.0
      %3855 = vmatpush1.msra.mxu0 0.0
      %3856 = vmatprep.subr.mxu0 0.0
      %3857 = vmatpush1.msra.mxu0 0.0
      %3858 = vmatprep.subr.mxu0 0.0
      %3859 = vmatpush1.msra.mxu0 0.0
      %3860 = vmatprep.subr.mxu0 0.0
      %3861 = vmatpush1.msra.mxu0 0.0
      %3862 = vmatprep.subr.mxu0 0.0
      %3863 = vmatpush1.msra.mxu0 0.0
      %3864 = vmatprep.subr.mxu0 0.0
      %3865 = vmatpush1.msra.mxu0 0.0
      %3866 = vmatprep.subr.mxu0 0.0
      %3867 = vmatpush1.msra.mxu0 0.0
      %3868 = vmatprep.subr.mxu0 0.0
      %3869 = vmatpush1.msra.mxu0 0.0
      %3870 = vmatprep.subr.mxu0 0.0
      %3871 = vmatpush1.msra.mxu0 0.0
      %3872 = vmatprep.subr.mxu0 0.0
      %3873 = vmatpush1.msra.mxu0 0.0
      %3874 = vmatprep.subr.mxu0 0.0
      %3875 = vmatpush1.msra.mxu0 0.0
      %3876 = vmatprep.subr.mxu0 0.0
      %3877 = vmatpush1.msra.mxu0 0.0
      %3878 = vmatprep.subr.mxu0 0.0
      %3879 = vmatpush1.msra.mxu0 0.0
      %3880 = vmatprep.subr.mxu0 0.0
      %3881 = vmatpush1.msra.mxu0 0.0
      %3882 = vmatprep.mubr.f32.mxu0 0.0
      %3883 = vmatmul.mubr.f32.gmra.mrb[0].mxu0 %v3816
      %v3884 = vpop.f32.mrb[0].mxu0
      %v3885 = vadd.f32 0.0, %v3884
      %v3886 = vpop.f32.mrb[0].mxu0
      %3887 = vdwg.mxu0
      %3889 = vset.pattern.permute.xlu0 0
      %3890 = vperm.xlu0 %3889, %v3885
      %v3891 = vpop.permute.xlu0 %3890
      %v3893 = vadd.f32 %v3812, %v3891
      %3895 = vset.pattern.permute.xlu0 0
      %3896 = vperm.xlu0 %3895, %v2155
      %v3897 = vpop.permute.xlu0 %3896
      %v3899 = vadd.f32 %v3893, %v3897
      %v3901 = vsel %vm3668, %v2153, 0
      %3903 = vmatprep.subr.mxu0 0.0
      %3904 = vmatpush1.msra.mxu0 %v3666
      %3905 = vmatprep.subr.mxu0 0.0
      %3906 = vmatpush1.msra.mxu0 0.0
      %3907 = vmatprep.subr.mxu0 0.0
      %3908 = vmatpush1.msra.mxu0 0.0
      %3909 = vmatprep.subr.mxu0 0.0
      %3910 = vmatpush1.msra.mxu0 0.0
      %3911 = vmatprep.subr.mxu0 0.0
      %3912 = vmatpush1.msra.mxu0 0.0
      %3913 = vmatprep.subr.mxu0 0.0
      %3914 = vmatpush1.msra.mxu0 0.0
      %3915 = vmatprep.subr.mxu0 0.0
      %3916 = vmatpush1.msra.mxu0 0.0
      %3917 = vmatprep.subr.mxu0 0.0
      %3918 = vmatpush1.msra.mxu0 0.0
      %3919 = vmatprep.subr.mxu0 0.0
      %3920 = vmatpush1.msra.mxu0 0.0
      %3921 = vmatprep.subr.mxu0 0.0
      %3922 = vmatpush1.msra.mxu0 0.0
      %3923 = vmatprep.subr.mxu0 0.0
      %3924 = vmatpush1.msra.mxu0 0.0
      %3925 = vmatprep.subr.mxu0 0.0
      %3926 = vmatpush1.msra.mxu0 0.0
      %3927 = vmatprep.subr.mxu0 0.0
      %3928 = vmatpush1.msra.mxu0 0.0
      %3929 = vmatprep.subr.mxu0 0.0
      %3930 = vmatpush1.msra.mxu0 0.0
      %3931 = vmatprep.subr.mxu0 0.0
      %3932 = vmatpush1.msra.mxu0 0.0
      %3933 = vmatprep.subr.mxu0 0.0
      %3934 = vmatpush1.msra.mxu0 0.0
      %3935 = vmatprep.subr.mxu0 0.0
      %3936 = vmatpush1.msra.mxu0 0.0
      %3937 = vmatprep.subr.mxu0 0.0
      %3938 = vmatpush1.msra.mxu0 0.0
      %3939 = vmatprep.subr.mxu0 0.0
      %3940 = vmatpush1.msra.mxu0 0.0
      %3941 = vmatprep.subr.mxu0 0.0
      %3942 = vmatpush1.msra.mxu0 0.0
      %3943 = vmatprep.subr.mxu0 0.0
      %3944 = vmatpush1.msra.mxu0 0.0
      %3945 = vmatprep.subr.mxu0 0.0
      %3946 = vmatpush1.msra.mxu0 0.0
      %3947 = vmatprep.subr.mxu0 0.0
      %3948 = vmatpush1.msra.mxu0 0.0
      %3949 = vmatprep.subr.mxu0 0.0
      %3950 = vmatpush1.msra.mxu0 0.0
      %3951 = vmatprep.subr.mxu0 0.0
      %3952 = vmatpush1.msra.mxu0 0.0
      %3953 = vmatprep.subr.mxu0 0.0
      %3954 = vmatpush1.msra.mxu0 0.0
      %3955 = vmatprep.subr.mxu0 0.0
      %3956 = vmatpush1.msra.mxu0 0.0
      %3957 = vmatprep.subr.mxu0 0.0
      %3958 = vmatpush1.msra.mxu0 0.0
      %3959 = vmatprep.subr.mxu0 0.0
      %3960 = vmatpush1.msra.mxu0 0.0
      %3961 = vmatprep.subr.mxu0 0.0
      %3962 = vmatpush1.msra.mxu0 0.0
      %3963 = vmatprep.subr.mxu0 0.0
      %3964 = vmatpush1.msra.mxu0 0.0
      %3965 = vmatprep.subr.mxu0 0.0
      %3966 = vmatpush1.msra.mxu0 0.0
      %3967 = vmatprep.mubr.f32.mxu0 0.0
      %3968 = vmatmul.mubr.f32.gmra.mrb[0].mxu0 %v3901
      %v3969 = vpop.f32.mrb[0].mxu0
      %v3970 = vadd.f32 0.0, %v3969
      %v3971 = vpop.f32.mrb[0].mxu0
      %3972 = vdwg.mxu0
      %v3981 = vsel %vm1439, %v3362, %v3355
      %v3982 = vsel %vm1441, %v3369, %v3981
      %v3983 = vsel %vm1443, %v3376, %v3982
      %v3984 = vsel %vm3560, %v3383, %v3983
      %v3985 = vsel %vm3562, %v3390, %v3984
      %v3986 = vsel %vm3564, %v3397, %v3985
      %v3987 = vsel %vm3566, %v3404, %v3986
      %v3990 = vsel %vm3668, %v2151, 0
      %3992 = vmatprep.subr.mxu0 0.0
      %3993 = vmatpush1.msra.mxu0 %v3987
      %3994 = vmatprep.subr.mxu0 0.0
      %3995 = vmatpush1.msra.mxu0 0.0
      %3996 = vmatprep.subr.mxu0 0.0
      %3997 = vmatpush1.msra.mxu0 0.0
      %3998 = vmatprep.subr.mxu0 0.0
      %3999 = vmatpush1.msra.mxu0 0.0
      %4000 = vmatprep.subr.mxu0 0.0
      %4001 = vmatpush1.msra.mxu0 0.0
      %4002 = vmatprep.subr.mxu0 0.0
      %4003 = vmatpush1.msra.mxu0 0.0
      %4004 = vmatprep.subr.mxu0 0.0
      %4005 = vmatpush1.msra.mxu0 0.0
      %4006 = vmatprep.subr.mxu0 0.0
      %4007 = vmatpush1.msra.mxu0 0.0
      %4008 = vmatprep.subr.mxu0 0.0
      %4009 = vmatpush1.msra.mxu0 0.0
      %4010 = vmatprep.subr.mxu0 0.0
      %4011 = vmatpush1.msra.mxu0 0.0
      %4012 = vmatprep.subr.mxu0 0.0
      %4013 = vmatpush1.msra.mxu0 0.0
      %4014 = vmatprep.subr.mxu0 0.0
      %4015 = vmatpush1.msra.mxu0 0.0
      %4016 = vmatprep.subr.mxu0 0.0
      %4017 = vmatpush1.msra.mxu0 0.0
      %4018 = vmatprep.subr.mxu0 0.0
      %4019 = vmatpush1.msra.mxu0 0.0
      %4020 = vmatprep.subr.mxu0 0.0
      %4021 = vmatpush1.msra.mxu0 0.0
      %4022 = vmatprep.subr.mxu0 0.0
      %4023 = vmatpush1.msra.mxu0 0.0
      %4024 = vmatprep.subr.mxu0 0.0
      %4025 = vmatpush1.msra.mxu0 0.0
      %4026 = vmatprep.subr.mxu0 0.0
      %4027 = vmatpush1.msra.mxu0 0.0
      %4028 = vmatprep.subr.mxu0 0.0
      %4029 = vmatpush1.msra.mxu0 0.0
      %4030 = vmatprep.subr.mxu0 0.0
      %4031 = vmatpush1.msra.mxu0 0.0
      %4032 = vmatprep.subr.mxu0 0.0
      %4033 = vmatpush1.msra.mxu0 0.0
      %4034 = vmatprep.subr.mxu0 0.0
      %4035 = vmatpush1.msra.mxu0 0.0
      %4036 = vmatprep.subr.mxu0 0.0
      %4037 = vmatpush1.msra.mxu0 0.0
      %4038 = vmatprep.subr.mxu0 0.0
      %4039 = vmatpush1.msra.mxu0 0.0
      %4040 = vmatprep.subr.mxu0 0.0
      %4041 = vmatpush1.msra.mxu0 0.0
      %4042 = vmatprep.subr.mxu0 0.0
      %4043 = vmatpush1.msra.mxu0 0.0
      %4044 = vmatprep.subr.mxu0 0.0
      %4045 = vmatpush1.msra.mxu0 0.0
      %4046 = vmatprep.subr.mxu0 0.0
      %4047 = vmatpush1.msra.mxu0 0.0
      %4048 = vmatprep.subr.mxu0 0.0
      %4049 = vmatpush1.msra.mxu0 0.0
      %4050 = vmatprep.subr.mxu0 0.0
      %4051 = vmatpush1.msra.mxu0 0.0
      %4052 = vmatprep.subr.mxu0 0.0
      %4053 = vmatpush1.msra.mxu0 0.0
      %4054 = vmatprep.subr.mxu0 0.0
      %4055 = vmatpush1.msra.mxu0 0.0
      %4056 = vmatprep.mubr.f32.mxu0 0.0
      %4057 = vmatmul.mubr.f32.gmra.mrb[0].mxu0 %v3990
      %v4058 = vpop.f32.mrb[0].mxu0
      %v4059 = vadd.f32 %v3970, %v4058
      %v4060 = vpop.f32.mrb[0].mxu0
      %4061 = vdwg.mxu0
      %v4062 = vlaneseq
      %v4063 = vshrl.u32 %v4062, 7
      %v4064 = vsub.s32 0, %v4063
      %v4065 = vrot.slane %v3899, %v4064
      %4067 = vbcast.lane.b32.xlu0 %v4065, 256
      %v4068 = vpop.permute.xlu0 %4067
      %s4070 = sor.u32 256, 8
      %4071 = vbcast.lane.b32.xlu0 %v4065, %s4070
      %v4072 = vpop.permute.xlu0 %4071
      %v4073 = vlaneseq
      %v4074 = vshrl.u32 %v4073, 7
      %v4075 = vsub.s32 1, %v4074
      %v4076 = vrot.slane %v3899, %v4075
      %4078 = vbcast.lane.b32.xlu0 %v4076, 256
      %v4079 = vpop.permute.xlu0 %4078
      %s4081 = sor.u32 256, 8
      %4082 = vbcast.lane.b32.xlu0 %v4076, %s4081
      %v4083 = vpop.permute.xlu0 %4082
      %v4084 = vlaneseq
      %v4085 = vshrl.u32 %v4084, 7
      %v4086 = vsub.s32 2, %v4085
      %v4087 = vrot.slane %v3899, %v4086
      %4089 = vbcast.lane.b32.xlu0 %v4087, 256
      %v4090 = vpop.permute.xlu0 %4089
      %s4092 = sor.u32 256, 8
      %4093 = vbcast.lane.b32.xlu0 %v4087, %s4092
      %v4094 = vpop.permute.xlu0 %4093
      %v4095 = vlaneseq
      %v4096 = vshrl.u32 %v4095, 7
      %v4097 = vsub.s32 3, %v4096
      %v4098 = vrot.slane %v3899, %v4097
      %4100 = vbcast.lane.b32.xlu0 %v4098, 256
      %v4101 = vpop.permute.xlu0 %4100
      %s4103 = sor.u32 256, 8
      %4104 = vbcast.lane.b32.xlu0 %v4098, %s4103
      %v4105 = vpop.permute.xlu0 %4104
      %v4106 = vlaneseq
      %v4107 = vshrl.u32 %v4106, 7
      %v4108 = vsub.s32 4, %v4107
      %v4109 = vrot.slane %v3899, %v4108
      %4111 = vbcast.lane.b32.xlu0 %v4109, 256
      %v4112 = vpop.permute.xlu0 %4111
      %s4114 = sor.u32 256, 8
      %4115 = vbcast.lane.b32.xlu0 %v4109, %s4114
      %v4116 = vpop.permute.xlu0 %4115
      %v4117 = vlaneseq
      %v4118 = vshrl.u32 %v4117, 7
      %v4119 = vsub.s32 5, %v4118
      %v4120 = vrot.slane %v3899, %v4119
      %4122 = vbcast.lane.b32.xlu0 %v4120, 256
      %v4123 = vpop.permute.xlu0 %4122
      %s4125 = sor.u32 256, 8
      %4126 = vbcast.lane.b32.xlu0 %v4120, %s4125
      %v4127 = vpop.permute.xlu0 %4126
      %v4128 = vlaneseq
      %v4129 = vshrl.u32 %v4128, 7
      %v4130 = vsub.s32 6, %v4129
      %v4131 = vrot.slane %v3899, %v4130
      %4133 = vbcast.lane.b32.xlu0 %v4131, 256
      %v4134 = vpop.permute.xlu0 %4133
      %s4136 = sor.u32 256, 8
      %4137 = vbcast.lane.b32.xlu0 %v4131, %s4136
      %v4138 = vpop.permute.xlu0 %4137
      %v4139 = vlaneseq
      %v4140 = vshrl.u32 %v4139, 7
      %v4141 = vsub.s32 7, %v4140
      %v4142 = vrot.slane %v3899, %v4141
      %4144 = vbcast.lane.b32.xlu0 %v4142, 256
      %v4145 = vpop.permute.xlu0 %4144
      %s4147 = sor.u32 256, 8
      %4148 = vbcast.lane.b32.xlu0 %v4142, %s4147
      %v4149 = vpop.permute.xlu0 %4148
      %v4150 = vadd.f32 %v3285, %v4068
      %v4151 = vadd.f32 %v3286, %v4072
      %v4152 = vadd.f32 %v3287, %v4079
      %v4153 = vadd.f32 %v3288, %v4083
      %v4154 = vadd.f32 %v3289, %v4090
      %v4155 = vadd.f32 %v3290, %v4094
      %v4156 = vadd.f32 %v3291, %v4101
      %v4157 = vadd.f32 %v3292, %v4105
      %v4158 = vadd.f32 %v3293, %v4112
      %v4159 = vadd.f32 %v3294, %v4116
      %v4160 = vadd.f32 %v3295, %v4123
      %v4161 = vadd.f32 %v3296, %v4127
      %v4162 = vadd.f32 %v3297, %v4134
      %v4163 = vadd.f32 %v3298, %v4138
      %v4164 = vadd.f32 %v3299, %v4145
      %v4165 = vadd.f32 %v3300, %v4149
      %v4167 = vcombine.high %v4059, %v4059
      %v4169 = vunpack.c.l.s4 1966171168
      %v4170 = vunpack.c.0.s8 %v4169
      %v4171 = vlaneseq
      %v4172 = vshrl.u32 %v4171, 7
      %v4173 = vsub.s32 %v4170, %v4172
      %v4174 = vrot.slane %v4059, %v4173
      %v4176 = vunpack.c.l.s4 1966171168
      %v4177 = vunpack.c.0.s8 %v4176
      %v4178 = vlaneseq
      %v4179 = vshrl.u32 %v4178, 7
      %v4180 = vsub.s32 %v4177, %v4179
      %v4181 = vrot.slane %v4167, %v4180
      %v4182 = vcombine.high %v4174, %v4174
      %v4183 = vcombine.high %v4181, %v4181
      %v4185 = vunpack.c.l.s4 1966171168
      %v4186 = vunpack.c.0.s8 %v4185
      %v4187 = vlaneseq
      %v4188 = vshrl.u32 %v4187, 7
      %v4189 = vsub.s32 %v4186, %v4188
      %v4190 = vrot.slane %v4174, %v4189
      %v4192 = vunpack.c.l.s4 1966171168
      %v4193 = vunpack.c.0.s8 %v4192
      %v4194 = vlaneseq
      %v4195 = vshrl.u32 %v4194, 7
      %v4196 = vsub.s32 %v4193, %v4195
      %v4197 = vrot.slane %v4181, %v4196
      %v4199 = vunpack.c.l.s4 1966171168
      %v4200 = vunpack.c.0.s8 %v4199
      %v4201 = vlaneseq
      %v4202 = vshrl.u32 %v4201, 7
      %v4203 = vsub.s32 %v4200, %v4202
      %v4204 = vrot.slane %v4182, %v4203
      %v4206 = vunpack.c.l.s4 1966171168
      %v4207 = vunpack.c.0.s8 %v4206
      %v4208 = vlaneseq
      %v4209 = vshrl.u32 %v4208, 7
      %v4210 = vsub.s32 %v4207, %v4209
      %v4211 = vrot.slane %v4183, %v4210
      %v4212 = vcombine.high %v4190, %v4190
      %v4213 = vcombine.high %v4197, %v4197
      %v4214 = vcombine.high %v4204, %v4204
      %v4215 = vcombine.high %v4211, %v4211
      %v4216 = vlaneseq
      %v4217 = vshrl.u32 %v4216, 7
      %v4218 = vsub.s32 0, %v4217
      %v4219 = vrot.slane %v4190, %v4218
      %v4220 = vlaneseq
      %v4221 = vshrl.u32 %v4220, 7
      %v4222 = vsub.s32 0, %v4221
      %v4223 = vrot.slane %v4204, %v4222
      %v4224 = vlaneseq
      %v4225 = vshrl.u32 %v4224, 7
      %v4226 = vsub.s32 0, %v4225
      %v4227 = vrot.slane %v4212, %v4226
      %v4228 = vlaneseq
      %v4229 = vshrl.u32 %v4228, 7
      %v4230 = vsub.s32 0, %v4229
      %v4231 = vrot.slane %v4214, %v4230
      %v4232 = vlaneseq
      %v4233 = vshrl.u32 %v4232, 7
      %v4234 = vsub.s32 0, %v4233
      %v4235 = vrot.slane %v4197, %v4234
      %v4236 = vlaneseq
      %v4237 = vshrl.u32 %v4236, 7
      %v4238 = vsub.s32 0, %v4237
      %v4239 = vrot.slane %v4211, %v4238
      %v4240 = vlaneseq
      %v4241 = vshrl.u32 %v4240, 7
      %v4242 = vsub.s32 0, %v4241
      %v4243 = vrot.slane %v4213, %v4242
      %v4244 = vlaneseq
      %v4245 = vshrl.u32 %v4244, 7
      %v4246 = vsub.s32 0, %v4245
      %v4247 = vrot.slane %v4215, %v4246
      %v4256 = vadd.f32 %v4150, %v4219
      %v4257 = vadd.f32 %v4151, %v4219
      %v4258 = vadd.f32 %v4152, %v4223
      %v4259 = vadd.f32 %v4153, %v4223
      %v4260 = vadd.f32 %v4154, %v4227
      %v4261 = vadd.f32 %v4155, %v4227
      %v4262 = vadd.f32 %v4156, %v4231
      %v4263 = vadd.f32 %v4157, %v4231
      %v4264 = vadd.f32 %v4158, %v4235
      %v4265 = vadd.f32 %v4159, %v4235
      %v4266 = vadd.f32 %v4160, %v4239
      %v4267 = vadd.f32 %v4161, %v4239
      %v4268 = vadd.f32 %v4162, %v4243
      %v4269 = vadd.f32 %v4163, %v4243
      %v4270 = vadd.f32 %v4164, %v4247
      %v4271 = vadd.f32 %v4165, %v4247
      %v4272 = vmax.f32 %v4256, 0.0
      %v4273 = vmax.f32 %v4257, 0.0
      %v4274 = vmax.f32 %v4258, 0.0
      %v4275 = vmax.f32 %v4259, 0.0
      %v4276 = vmax.f32 %v4260, 0.0
      %v4277 = vmax.f32 %v4261, 0.0
      %v4278 = vmax.f32 %v4262, 0.0
      %v4279 = vmax.f32 %v4263, 0.0
      %v4280 = vmax.f32 %v4264, 0.0
      %v4281 = vmax.f32 %v4265, 0.0
      %v4282 = vmax.f32 %v4266, 0.0
      %v4283 = vmax.f32 %v4267, 0.0
      %v4284 = vmax.f32 %v4268, 0.0
      %v4285 = vmax.f32 %v4269, 0.0
      %v4286 = vmax.f32 %v4270, 0.0
      %v4287 = vmax.f32 %v4271, 0.0
      %v4288 = vld [vmem:[%s7] sm:$0xf]
      %v4289 = vld [vmem:[%s7 + $0x4] sm:$0xf]
      %v4290 = vld [vmem:[%s7 + $0x8] sm:$0xf]
      %v4291 = vld [vmem:[%s7 + $0xc] sm:$0xf]
      %v4292 = vld [vmem:[%s8] sm:$0xf]
      %v4293 = vmul.f32 %v4272, %v342
      %v4294 = vmul.f32 %v4273, %v343
      %v4295 = vmul.f32 %v4274, %v342
      %v4296 = vmul.f32 %v4275, %v343
      %v4297 = vmul.f32 %v4276, %v342
      %v4298 = vmul.f32 %v4277, %v343
      %v4299 = vmul.f32 %v4278, %v342
      %v4300 = vmul.f32 %v4279, %v343
      %v4301 = vmul.f32 %v4280, %v342
      %v4302 = vmul.f32 %v4281, %v343
      %v4303 = vmul.f32 %v4282, %v342
      %v4304 = vmul.f32 %v4283, %v343
      %v4305 = vmul.f32 %v4284, %v342
      %v4306 = vmul.f32 %v4285, %v343
      %v4307 = vmul.f32 %v4286, %v342
      %v4308 = vmul.f32 %v4287, %v343
      %v4309 = vsel %vm390, %v4293, 0.0
      %4310 = vadd.xlane.f32.xlu0 %v4309
      %v4311 = vpop.xlane.xlu0 %4310
      %v4312 = vsel %vm390, %v4294, 0.0
      %4313 = vadd.xlane.f32.xlu0 %v4312
      %v4314 = vpop.xlane.xlu0 %4313
      %v4315 = vsel %vm390, %v4295, 0.0
      %4316 = vadd.xlane.f32.xlu0 %v4315
      %v4317 = vpop.xlane.xlu0 %4316
      %v4318 = vsel %vm390, %v4296, 0.0
      %4319 = vadd.xlane.f32.xlu0 %v4318
      %v4320 = vpop.xlane.xlu0 %4319
      %v4321 = vsel %vm390, %v4297, 0.0
      %4322 = vadd.xlane.f32.xlu0 %v4321
      %v4323 = vpop.xlane.xlu0 %4322
      %v4324 = vsel %vm390, %v4298, 0.0
      %4325 = vadd.xlane.f32.xlu0 %v4324
      %v4326 = vpop.xlane.xlu0 %4325
      %v4327 = vsel %vm390, %v4299, 0.0
      %4328 = vadd.xlane.f32.xlu0 %v4327
      %v4329 = vpop.xlane.xlu0 %4328
      %v4330 = vsel %vm390, %v4300, 0.0
      %4331 = vadd.xlane.f32.xlu0 %v4330
      %v4332 = vpop.xlane.xlu0 %4331
      %v4333 = vsel %vm390, %v4301, 0.0
      %4334 = vadd.xlane.f32.xlu0 %v4333
      %v4335 = vpop.xlane.xlu0 %4334
      %v4336 = vsel %vm390, %v4302, 0.0
      %4337 = vadd.xlane.f32.xlu0 %v4336
      %v4338 = vpop.xlane.xlu0 %4337
      %v4339 = vsel %vm390, %v4303, 0.0
      %4340 = vadd.xlane.f32.xlu0 %v4339
      %v4341 = vpop.xlane.xlu0 %4340
      %v4342 = vsel %vm390, %v4304, 0.0
      %4343 = vadd.xlane.f32.xlu0 %v4342
      %v4344 = vpop.xlane.xlu0 %4343
      %v4345 = vsel %vm390, %v4305, 0.0
      %4346 = vadd.xlane.f32.xlu0 %v4345
      %v4347 = vpop.xlane.xlu0 %4346
      %v4348 = vsel %vm390, %v4306, 0.0
      %4349 = vadd.xlane.f32.xlu0 %v4348
      %v4350 = vpop.xlane.xlu0 %4349
      %v4351 = vsel %vm390, %v4307, 0.0
      %4352 = vadd.xlane.f32.xlu0 %v4351
      %v4353 = vpop.xlane.xlu0 %4352
      %v4354 = vsel %vm390, %v4308, 0.0
      %4355 = vadd.xlane.f32.xlu0 %v4354
      %v4356 = vpop.xlane.xlu0 %4355
      %v4357 = vsel %vm390, %v4272, 0.0
      %4358 = vadd.xlane.f32.xlu0 %v4357
      %v4359 = vpop.xlane.xlu0 %4358
      %v4360 = vsel %vm390, %v4273, 0.0
      %4361 = vadd.xlane.f32.xlu0 %v4360
      %v4362 = vpop.xlane.xlu0 %4361
      %v4363 = vsel %vm390, %v4274, 0.0
      %4364 = vadd.xlane.f32.xlu0 %v4363
      %v4365 = vpop.xlane.xlu0 %4364
      %v4366 = vsel %vm390, %v4275, 0.0
      %4367 = vadd.xlane.f32.xlu0 %v4366
      %v4368 = vpop.xlane.xlu0 %4367
      %v4369 = vsel %vm390, %v4276, 0.0
      %4370 = vadd.xlane.f32.xlu0 %v4369
      %v4371 = vpop.xlane.xlu0 %4370
      %v4372 = vsel %vm390, %v4277, 0.0
      %4373 = vadd.xlane.f32.xlu0 %v4372
      %v4374 = vpop.xlane.xlu0 %4373
      %v4375 = vsel %vm390, %v4278, 0.0
      %4376 = vadd.xlane.f32.xlu0 %v4375
      %v4377 = vpop.xlane.xlu0 %4376
      %v4378 = vsel %vm390, %v4279, 0.0
      %4379 = vadd.xlane.f32.xlu0 %v4378
      %v4380 = vpop.xlane.xlu0 %4379
      %v4381 = vsel %vm390, %v4280, 0.0
      %4382 = vadd.xlane.f32.xlu0 %v4381
      %v4383 = vpop.xlane.xlu0 %4382
      %v4384 = vsel %vm390, %v4281, 0.0
      %4385 = vadd.xlane.f32.xlu0 %v4384
      %v4386 = vpop.xlane.xlu0 %4385
      %v4387 = vsel %vm390, %v4282, 0.0
      %4388 = vadd.xlane.f32.xlu0 %v4387
      %v4389 = vpop.xlane.xlu0 %4388
      %v4390 = vsel %vm390, %v4283, 0.0
      %4391 = vadd.xlane.f32.xlu0 %v4390
      %v4392 = vpop.xlane.xlu0 %4391
      %v4393 = vsel %vm390, %v4284, 0.0
      %4394 = vadd.xlane.f32.xlu0 %v4393
      %v4395 = vpop.xlane.xlu0 %4394
      %v4396 = vsel %vm390, %v4285, 0.0
      %4397 = vadd.xlane.f32.xlu0 %v4396
      %v4398 = vpop.xlane.xlu0 %4397
      %v4399 = vsel %vm390, %v4286, 0.0
      %4400 = vadd.xlane.f32.xlu0 %v4399
      %v4401 = vpop.xlane.xlu0 %4400
      %v4402 = vsel %vm390, %v4287, 0.0
      %4403 = vadd.xlane.f32.xlu0 %v4402
      %v4404 = vpop.xlane.xlu0 %4403
      %v4405 = vadd.f32 %v4357, %v4360
      %v4406 = vrot.slane %v4405, 4
      %v4407 = vadd.f32 %v4405, %v4406
      %v4408 = vrot.slane %v4407, 2
      %v4409 = vadd.f32 %v4407, %v4408
      %v4410 = vrot.slane %v4409, 1
      %v4411 = vadd.f32 %v4409, %v4410
      %v4412 = vadd.f32 %v4363, %v4366
      %v4413 = vrot.slane %v4412, 4
      %v4414 = vadd.f32 %v4412, %v4413
      %v4415 = vrot.slane %v4414, 2
      %v4416 = vadd.f32 %v4414, %v4415
      %v4417 = vrot.slane %v4416, 1
      %v4418 = vadd.f32 %v4416, %v4417
      %v4419 = vadd.f32 %v4369, %v4372
      %v4420 = vrot.slane %v4419, 4
      %v4421 = vadd.f32 %v4419, %v4420
      %v4422 = vrot.slane %v4421, 2
      %v4423 = vadd.f32 %v4421, %v4422
      %v4424 = vrot.slane %v4423, 1
      %v4425 = vadd.f32 %v4423, %v4424
      %v4426 = vadd.f32 %v4375, %v4378
      %v4427 = vrot.slane %v4426, 4
      %v4428 = vadd.f32 %v4426, %v4427
      %v4429 = vrot.slane %v4428, 2
      %v4430 = vadd.f32 %v4428, %v4429
      %v4431 = vrot.slane %v4430, 1
      %v4432 = vadd.f32 %v4430, %v4431
      %v4433 = vadd.f32 %v4381, %v4384
      %v4434 = vrot.slane %v4433, 4
      %v4435 = vadd.f32 %v4433, %v4434
      %v4436 = vrot.slane %v4435, 2
      %v4437 = vadd.f32 %v4435, %v4436
      %v4438 = vrot.slane %v4437, 1
      %v4439 = vadd.f32 %v4437, %v4438
      %v4440 = vadd.f32 %v4387, %v4390
      %v4441 = vrot.slane %v4440, 4
      %v4442 = vadd.f32 %v4440, %v4441
      %v4443 = vrot.slane %v4442, 2
      %v4444 = vadd.f32 %v4442, %v4443
      %v4445 = vrot.slane %v4444, 1
      %v4446 = vadd.f32 %v4444, %v4445
      %v4447 = vadd.f32 %v4393, %v4396
      %v4448 = vrot.slane %v4447, 4
      %v4449 = vadd.f32 %v4447, %v4448
      %v4450 = vrot.slane %v4449, 2
      %v4451 = vadd.f32 %v4449, %v4450
      %v4452 = vrot.slane %v4451, 1
      %v4453 = vadd.f32 %v4451, %v4452
      %v4454 = vadd.f32 %v4399, %v4402
      %v4455 = vrot.slane %v4454, 4
      %v4456 = vadd.f32 %v4454, %v4455
      %v4457 = vrot.slane %v4456, 2
      %v4458 = vadd.f32 %v4456, %v4457
      %v4459 = vrot.slane %v4458, 1
      %v4460 = vadd.f32 %v4458, %v4459
      %v4477 = vlaneseq
      %v4478 = vshrl.u32 %v4477, 7
      %v4479 = vsub.s32 %v337, %v4478
      %v4480 = vrot.slane %v4359, %v4479
      %v4481 = vlaneseq
      %v4482 = vshrl.u32 %v4481, 7
      %v4483 = vsub.s32 %v1405, %v4482
      %v4484 = vrot.slane %v4362, %v4483
      %v4485 = vsel %vm1410, %v4484, %v4480
      %v4486 = vlaneseq
      %v4487 = vshrl.u32 %v4486, 7
      %v4488 = vsub.s32 %v337, %v4487
      %v4489 = vrot.slane %v4365, %v4488
      %v4490 = vlaneseq
      %v4491 = vshrl.u32 %v4490, 7
      %v4492 = vsub.s32 %v1405, %v4491
      %v4493 = vrot.slane %v4368, %v4492
      %v4494 = vsel %vm1410, %v4493, %v4489
      %v4495 = vlaneseq
      %v4496 = vshrl.u32 %v4495, 7
      %v4497 = vsub.s32 %v337, %v4496
      %v4498 = vrot.slane %v4371, %v4497
      %v4499 = vlaneseq
      %v4500 = vshrl.u32 %v4499, 7
      %v4501 = vsub.s32 %v1405, %v4500
      %v4502 = vrot.slane %v4374, %v4501
      %v4503 = vsel %vm1410, %v4502, %v4498
      %v4504 = vlaneseq
      %v4505 = vshrl.u32 %v4504, 7
      %v4506 = vsub.s32 %v337, %v4505
      %v4507 = vrot.slane %v4377, %v4506
      %v4508 = vlaneseq
      %v4509 = vshrl.u32 %v4508, 7
      %v4510 = vsub.s32 %v1405, %v4509
      %v4511 = vrot.slane %v4380, %v4510
      %v4512 = vsel %vm1410, %v4511, %v4507
      %v4513 = vlaneseq
      %v4514 = vshrl.u32 %v4513, 7
      %v4515 = vsub.s32 %v337, %v4514
      %v4516 = vrot.slane %v4383, %v4515
      %v4517 = vlaneseq
      %v4518 = vshrl.u32 %v4517, 7
      %v4519 = vsub.s32 %v1405, %v4518
      %v4520 = vrot.slane %v4386, %v4519
      %v4521 = vsel %vm1410, %v4520, %v4516
      %v4522 = vlaneseq
      %v4523 = vshrl.u32 %v4522, 7
      %v4524 = vsub.s32 %v337, %v4523
      %v4525 = vrot.slane %v4389, %v4524
      %v4526 = vlaneseq
      %v4527 = vshrl.u32 %v4526, 7
      %v4528 = vsub.s32 %v1405, %v4527
      %v4529 = vrot.slane %v4392, %v4528
      %v4530 = vsel %vm1410, %v4529, %v4525
      %v4531 = vlaneseq
      %v4532 = vshrl.u32 %v4531, 7
      %v4533 = vsub.s32 %v337, %v4532
      %v4534 = vrot.slane %v4395, %v4533
      %v4535 = vlaneseq
      %v4536 = vshrl.u32 %v4535, 7
      %v4537 = vsub.s32 %v1405, %v4536
      %v4538 = vrot.slane %v4398, %v4537
      %v4539 = vsel %vm1410, %v4538, %v4534
      %v4540 = vlaneseq
      %v4541 = vshrl.u32 %v4540, 7
      %v4542 = vsub.s32 %v337, %v4541
      %v4543 = vrot.slane %v4401, %v4542
      %v4544 = vlaneseq
      %v4545 = vshrl.u32 %v4544, 7
      %v4546 = vsub.s32 %v1405, %v4545
      %v4547 = vrot.slane %v4404, %v4546
      %v4548 = vsel %vm1410, %v4547, %v4543
      %v4549 = vsel %vm1439, %v4494, %v4485
      %v4550 = vsel %vm1441, %v4503, %v4549
      %v4551 = vsel %vm1443, %v4512, %v4550
      %v4552 = vsel %vm3560, %v4521, %v4551
      %v4553 = vsel %vm3562, %v4530, %v4552
      %v4554 = vsel %vm3564, %v4539, %v4553
      %v4555 = vsel %vm3566, %v4548, %v4554
      %v4557 = vsel %vm390, %v4555, 0.0
      %4558 = vadd.xlane.f32.xlu0 %v4557
      %v4559 = vpop.xlane.xlu0 %4558
      %v4561 = vsel %vm3668, %v4289, 0
      %4563 = vmatprep.subr.mxu0 0.0
      %4564 = vmatpush1.msra.mxu0 %v4555
      %4565 = vmatprep.subr.mxu0 0.0
      %4566 = vmatpush1.msra.mxu0 0.0
      %4567 = vmatprep.subr.mxu0 0.0
      %4568 = vmatpush1.msra.mxu0 0.0
      %4569 = vmatprep.subr.mxu0 0.0
      %4570 = vmatpush1.msra.mxu0 0.0
      %4571 = vmatprep.subr.mxu0 0.0
      %4572 = vmatpush1.msra.mxu0 0.0
      %4573 = vmatprep.subr.mxu0 0.0
      %4574 = vmatpush1.msra.mxu0 0.0
      %4575 = vmatprep.subr.mxu0 0.0
      %4576 = vmatpush1.msra.mxu0 0.0
      %4577 = vmatprep.subr.mxu0 0.0
      %4578 = vmatpush1.msra.mxu0 0.0
      %4579 = vmatprep.subr.mxu0 0.0
      %4580 = vmatpush1.msra.mxu0 0.0
      %4581 = vmatprep.subr.mxu0 0.0
      %4582 = vmatpush1.msra.mxu0 0.0
      %4583 = vmatprep.subr.mxu0 0.0
      %4584 = vmatpush1.msra.mxu0 0.0
      %4585 = vmatprep.subr.mxu0 0.0
      %4586 = vmatpush1.msra.mxu0 0.0
      %4587 = vmatprep.subr.mxu0 0.0
      %4588 = vmatpush1.msra.mxu0 0.0
      %4589 = vmatprep.subr.mxu0 0.0
      %4590 = vmatpush1.msra.mxu0 0.0
      %4591 = vmatprep.subr.mxu0 0.0
      %4592 = vmatpush1.msra.mxu0 0.0
      %4593 = vmatprep.subr.mxu0 0.0
      %4594 = vmatpush1.msra.mxu0 0.0
      %4595 = vmatprep.subr.mxu0 0.0
      %4596 = vmatpush1.msra.mxu0 0.0
      %4597 = vmatprep.subr.mxu0 0.0
      %4598 = vmatpush1.msra.mxu0 0.0
      %4599 = vmatprep.subr.mxu0 0.0
      %4600 = vmatpush1.msra.mxu0 0.0
      %4601 = vmatprep.subr.mxu0 0.0
      %4602 = vmatpush1.msra.mxu0 0.0
      %4603 = vmatprep.subr.mxu0 0.0
      %4604 = vmatpush1.msra.mxu0 0.0
      %4605 = vmatprep.subr.mxu0 0.0
      %4606 = vmatpush1.msra.mxu0 0.0
      %4607 = vmatprep.subr.mxu0 0.0
      %4608 = vmatpush1.msra.mxu0 0.0
      %4609 = vmatprep.subr.mxu0 0.0
      %4610 = vmatpush1.msra.mxu0 0.0
      %4611 = vmatprep.subr.mxu0 0.0
      %4612 = vmatpush1.msra.mxu0 0.0
      %4613 = vmatprep.subr.mxu0 0.0
      %4614 = vmatpush1.msra.mxu0 0.0
      %4615 = vmatprep.subr.mxu0 0.0
      %4616 = vmatpush1.msra.mxu0 0.0
      %4617 = vmatprep.subr.mxu0 0.0
      %4618 = vmatpush1.msra.mxu0 0.0
      %4619 = vmatprep.subr.mxu0 0.0
      %4620 = vmatpush1.msra.mxu0 0.0
      %4621 = vmatprep.subr.mxu0 0.0
      %4622 = vmatpush1.msra.mxu0 0.0
      %4623 = vmatprep.subr.mxu0 0.0
      %4624 = vmatpush1.msra.mxu0 0.0
      %4625 = vmatprep.subr.mxu0 0.0
      %4626 = vmatpush1.msra.mxu0 0.0
      %4627 = vmatprep.mubr.f32.mxu0 0.0
      %4628 = vmatmul.mubr.f32.gmra.mrb[0].mxu0 %v4561
      %v4629 = vpop.f32.mrb[0].mxu0
      %v4630 = vadd.f32 0.0, %v4629
      %v4631 = vpop.f32.mrb[0].mxu0
      %4632 = vdwg.mxu0
      %v4649 = vlaneseq
      %v4650 = vshrl.u32 %v4649, 7
      %v4651 = vsub.s32 %v337, %v4650
      %v4652 = vrot.slane %v4311, %v4651
      %v4653 = vlaneseq
      %v4654 = vshrl.u32 %v4653, 7
      %v4655 = vsub.s32 %v1405, %v4654
      %v4656 = vrot.slane %v4314, %v4655
      %v4657 = vsel %vm1410, %v4656, %v4652
      %v4658 = vlaneseq
      %v4659 = vshrl.u32 %v4658, 7
      %v4660 = vsub.s32 %v337, %v4659
      %v4661 = vrot.slane %v4317, %v4660
      %v4662 = vlaneseq
      %v4663 = vshrl.u32 %v4662, 7
      %v4664 = vsub.s32 %v1405, %v4663
      %v4665 = vrot.slane %v4320, %v4664
      %v4666 = vsel %vm1410, %v4665, %v4661
      %v4667 = vlaneseq
      %v4668 = vshrl.u32 %v4667, 7
      %v4669 = vsub.s32 %v337, %v4668
      %v4670 = vrot.slane %v4323, %v4669
      %v4671 = vlaneseq
      %v4672 = vshrl.u32 %v4671, 7
      %v4673 = vsub.s32 %v1405, %v4672
      %v4674 = vrot.slane %v4326, %v4673
      %v4675 = vsel %vm1410, %v4674, %v4670
      %v4676 = vlaneseq
      %v4677 = vshrl.u32 %v4676, 7
      %v4678 = vsub.s32 %v337, %v4677
      %v4679 = vrot.slane %v4329, %v4678
      %v4680 = vlaneseq
      %v4681 = vshrl.u32 %v4680, 7
      %v4682 = vsub.s32 %v1405, %v4681
      %v4683 = vrot.slane %v4332, %v4682
      %v4684 = vsel %vm1410, %v4683, %v4679
      %v4685 = vlaneseq
      %v4686 = vshrl.u32 %v4685, 7
      %v4687 = vsub.s32 %v337, %v4686
      %v4688 = vrot.slane %v4335, %v4687
      %v4689 = vlaneseq
      %v4690 = vshrl.u32 %v4689, 7
      %v4691 = vsub.s32 %v1405, %v4690
      %v4692 = vrot.slane %v4338, %v4691
      %v4693 = vsel %vm1410, %v4692, %v4688
      %v4694 = vlaneseq
      %v4695 = vshrl.u32 %v4694, 7
      %v4696 = vsub.s32 %v337, %v4695
      %v4697 = vrot.slane %v4341, %v4696
      %v4698 = vlaneseq
      %v4699 = vshrl.u32 %v4698, 7
      %v4700 = vsub.s32 %v1405, %v4699
      %v4701 = vrot.slane %v4344, %v4700
      %v4702 = vsel %vm1410, %v4701, %v4697
      %v4703 = vlaneseq
      %v4704 = vshrl.u32 %v4703, 7
      %v4705 = vsub.s32 %v337, %v4704
      %v4706 = vrot.slane %v4347, %v4705
      %v4707 = vlaneseq
      %v4708 = vshrl.u32 %v4707, 7
      %v4709 = vsub.s32 %v1405, %v4708
      %v4710 = vrot.slane %v4350, %v4709
      %v4711 = vsel %vm1410, %v4710, %v4706
      %v4712 = vlaneseq
      %v4713 = vshrl.u32 %v4712, 7
      %v4714 = vsub.s32 %v337, %v4713
      %v4715 = vrot.slane %v4353, %v4714
      %v4716 = vlaneseq
      %v4717 = vshrl.u32 %v4716, 7
      %v4718 = vsub.s32 %v1405, %v4717
      %v4719 = vrot.slane %v4356, %v4718
      %v4720 = vsel %vm1410, %v4719, %v4715
      %v4721 = vsel %vm1439, %v4666, %v4657
      %v4722 = vsel %vm1441, %v4675, %v4721
      %v4723 = vsel %vm1443, %v4684, %v4722
      %v4724 = vsel %vm3560, %v4693, %v4723
      %v4725 = vsel %vm3562, %v4702, %v4724
      %v4726 = vsel %vm3564, %v4711, %v4725
      %v4727 = vsel %vm3566, %v4720, %v4726
      %v4730 = vsel %vm3668, %v4288, 0
      %4732 = vmatprep.subr.mxu0 0.0
      %4733 = vmatpush1.msra.mxu0 %v4727
      %4734 = vmatprep.subr.mxu0 0.0
      %4735 = vmatpush1.msra.mxu0 0.0
      %4736 = vmatprep.subr.mxu0 0.0
      %4737 = vmatpush1.msra.mxu0 0.0
      %4738 = vmatprep.subr.mxu0 0.0
      %4739 = vmatpush1.msra.mxu0 0.0
      %4740 = vmatprep.subr.mxu0 0.0
      %4741 = vmatpush1.msra.mxu0 0.0
      %4742 = vmatprep.subr.mxu0 0.0
      %4743 = vmatpush1.msra.mxu0 0.0
      %4744 = vmatprep.subr.mxu0 0.0
      %4745 = vmatpush1.msra.mxu0 0.0
      %4746 = vmatprep.subr.mxu0 0.0
      %4747 = vmatpush1.msra.mxu0 0.0
      %4748 = vmatprep.subr.mxu0 0.0
      %4749 = vmatpush1.msra.mxu0 0.0
      %4750 = vmatprep.subr.mxu0 0.0
      %4751 = vmatpush1.msra.mxu0 0.0
      %4752 = vmatprep.subr.mxu0 0.0
      %4753 = vmatpush1.msra.mxu0 0.0
      %4754 = vmatprep.subr.mxu0 0.0
      %4755 = vmatpush1.msra.mxu0 0.0
      %4756 = vmatprep.subr.mxu0 0.0
      %4757 = vmatpush1.msra.mxu0 0.0
      %4758 = vmatprep.subr.mxu0 0.0
      %4759 = vmatpush1.msra.mxu0 0.0
      %4760 = vmatprep.subr.mxu0 0.0
      %4761 = vmatpush1.msra.mxu0 0.0
      %4762 = vmatprep.subr.mxu0 0.0
      %4763 = vmatpush1.msra.mxu0 0.0
      %4764 = vmatprep.subr.mxu0 0.0
      %4765 = vmatpush1.msra.mxu0 0.0
      %4766 = vmatprep.subr.mxu0 0.0
      %4767 = vmatpush1.msra.mxu0 0.0
      %4768 = vmatprep.subr.mxu0 0.0
      %4769 = vmatpush1.msra.mxu0 0.0
      %4770 = vmatprep.subr.mxu0 0.0
      %4771 = vmatpush1.msra.mxu0 0.0
      %4772 = vmatprep.subr.mxu0 0.0
      %4773 = vmatpush1.msra.mxu0 0.0
      %4774 = vmatprep.subr.mxu0 0.0
      %4775 = vmatpush1.msra.mxu0 0.0
      %4776 = vmatprep.subr.mxu0 0.0
      %4777 = vmatpush1.msra.mxu0 0.0
      %4778 = vmatprep.subr.mxu0 0.0
      %4779 = vmatpush1.msra.mxu0 0.0
      %4780 = vmatprep.subr.mxu0 0.0
      %4781 = vmatpush1.msra.mxu0 0.0
      %4782 = vmatprep.subr.mxu0 0.0
      %4783 = vmatpush1.msra.mxu0 0.0
      %4784 = vmatprep.subr.mxu0 0.0
      %4785 = vmatpush1.msra.mxu0 0.0
      %4786 = vmatprep.subr.mxu0 0.0
      %4787 = vmatpush1.msra.mxu0 0.0
      %4788 = vmatprep.subr.mxu0 0.0
      %4789 = vmatpush1.msra.mxu0 0.0
      %4790 = vmatprep.subr.mxu0 0.0
      %4791 = vmatpush1.msra.mxu0 0.0
      %4792 = vmatprep.subr.mxu0 0.0
      %4793 = vmatpush1.msra.mxu0 0.0
      %4794 = vmatprep.subr.mxu0 0.0
      %4795 = vmatpush1.msra.mxu0 0.0
      %4796 = vmatprep.mubr.f32.mxu0 0.0
      %4797 = vmatmul.mubr.f32.gmra.mrb[0].mxu0 %v4730
      %v4798 = vpop.f32.mrb[0].mxu0
      %v4799 = vadd.f32 %v4630, %v4798
      %v4800 = vpop.f32.mrb[0].mxu0
      %4801 = vdwg.mxu0
      %v4810 = vsel %vm1439, %v4418, %v4411
      %v4811 = vsel %vm1441, %v4425, %v4810
      %v4812 = vsel %vm1443, %v4432, %v4811
      %v4813 = vsel %vm3560, %v4439, %v4812
      %v4814 = vsel %vm3562, %v4446, %v4813
      %v4815 = vsel %vm3564, %v4453, %v4814
      %v4816 = vsel %vm3566, %v4460, %v4815
      %v4819 = vsel %vm3668, %v4290, 0
      %4821 = vmatprep.subr.mxu0 0.0
      %4822 = vmatpush1.msra.mxu0 %v4816
      %4823 = vmatprep.subr.mxu0 0.0
      %4824 = vmatpush1.msra.mxu0 0.0
      %4825 = vmatprep.subr.mxu0 0.0
      %4826 = vmatpush1.msra.mxu0 0.0
      %4827 = vmatprep.subr.mxu0 0.0
      %4828 = vmatpush1.msra.mxu0 0.0
      %4829 = vmatprep.subr.mxu0 0.0
      %4830 = vmatpush1.msra.mxu0 0.0
      %4831 = vmatprep.subr.mxu0 0.0
      %4832 = vmatpush1.msra.mxu0 0.0
      %4833 = vmatprep.subr.mxu0 0.0
      %4834 = vmatpush1.msra.mxu0 0.0
      %4835 = vmatprep.subr.mxu0 0.0
      %4836 = vmatpush1.msra.mxu0 0.0
      %4837 = vmatprep.subr.mxu0 0.0
      %4838 = vmatpush1.msra.mxu0 0.0
      %4839 = vmatprep.subr.mxu0 0.0
      %4840 = vmatpush1.msra.mxu0 0.0
      %4841 = vmatprep.subr.mxu0 0.0
      %4842 = vmatpush1.msra.mxu0 0.0
      %4843 = vmatprep.subr.mxu0 0.0
      %4844 = vmatpush1.msra.mxu0 0.0
      %4845 = vmatprep.subr.mxu0 0.0
      %4846 = vmatpush1.msra.mxu0 0.0
      %4847 = vmatprep.subr.mxu0 0.0
      %4848 = vmatpush1.msra.mxu0 0.0
      %4849 = vmatprep.subr.mxu0 0.0
      %4850 = vmatpush1.msra.mxu0 0.0
      %4851 = vmatprep.subr.mxu0 0.0
      %4852 = vmatpush1.msra.mxu0 0.0
      %4853 = vmatprep.subr.mxu0 0.0
      %4854 = vmatpush1.msra.mxu0 0.0
      %4855 = vmatprep.subr.mxu0 0.0
      %4856 = vmatpush1.msra.mxu0 0.0
      %4857 = vmatprep.subr.mxu0 0.0
      %4858 = vmatpush1.msra.mxu0 0.0
      %4859 = vmatprep.subr.mxu0 0.0
      %4860 = vmatpush1.msra.mxu0 0.0
      %4861 = vmatprep.subr.mxu0 0.0
      %4862 = vmatpush1.msra.mxu0 0.0
      %4863 = vmatprep.subr.mxu0 0.0
      %4864 = vmatpush1.msra.mxu0 0.0
      %4865 = vmatprep.subr.mxu0 0.0
      %4866 = vmatpush1.msra.mxu0 0.0
      %4867 = vmatprep.subr.mxu0 0.0
      %4868 = vmatpush1.msra.mxu0 0.0
      %4869 = vmatprep.subr.mxu0 0.0
      %4870 = vmatpush1.msra.mxu0 0.0
      %4871 = vmatprep.subr.mxu0 0.0
      %4872 = vmatpush1.msra.mxu0 0.0
      %4873 = vmatprep.subr.mxu0 0.0
      %4874 = vmatpush1.msra.mxu0 0.0
      %4875 = vmatprep.subr.mxu0 0.0
      %4876 = vmatpush1.msra.mxu0 0.0
      %4877 = vmatprep.subr.mxu0 0.0
      %4878 = vmatpush1.msra.mxu0 0.0
      %4879 = vmatprep.subr.mxu0 0.0
      %4880 = vmatpush1.msra.mxu0 0.0
      %4881 = vmatprep.subr.mxu0 0.0
      %4882 = vmatpush1.msra.mxu0 0.0
      %4883 = vmatprep.subr.mxu0 0.0
      %4884 = vmatpush1.msra.mxu0 0.0
      %4885 = vmatprep.mubr.f32.mxu0 0.0
      %4886 = vmatmul.mubr.f32.gmra.mrb[0].mxu0 %v4819
      %v4887 = vpop.f32.mrb[0].mxu0
      %v4888 = vadd.f32 0.0, %v4887
      %v4889 = vpop.f32.mrb[0].mxu0
      %4890 = vdwg.mxu0
      %v4891 = vadd.f32 %v4799, %v4888
      %v4893 = vsel %vm3668, %v4291, 0
      %4895 = vmatprep.subr.mxu0 0.0
      %4896 = vmatpush1.msra.mxu0 %v4559
      %4897 = vmatprep.subr.mxu0 0.0
      %4898 = vmatpush1.msra.mxu0 0.0
      %4899 = vmatprep.subr.mxu0 0.0
      %4900 = vmatpush1.msra.mxu0 0.0
      %4901 = vmatprep.subr.mxu0 0.0
      %4902 = vmatpush1.msra.mxu0 0.0
      %4903 = vmatprep.subr.mxu0 0.0
      %4904 = vmatpush1.msra.mxu0 0.0
      %4905 = vmatprep.subr.mxu0 0.0
      %4906 = vmatpush1.msra.mxu0 0.0
      %4907 = vmatprep.subr.mxu0 0.0
      %4908 = vmatpush1.msra.mxu0 0.0
      %4909 = vmatprep.subr.mxu0 0.0
      %4910 = vmatpush1.msra.mxu0 0.0
      %4911 = vmatprep.subr.mxu0 0.0
      %4912 = vmatpush1.msra.mxu0 0.0
      %4913 = vmatprep.subr.mxu0 0.0
      %4914 = vmatpush1.msra.mxu0 0.0
      %4915 = vmatprep.subr.mxu0 0.0
      %4916 = vmatpush1.msra.mxu0 0.0
      %4917 = vmatprep.subr.mxu0 0.0
      %4918 = vmatpush1.msra.mxu0 0.0
      %4919 = vmatprep.subr.mxu0 0.0
      %4920 = vmatpush1.msra.mxu0 0.0
      %4921 = vmatprep.subr.mxu0 0.0
      %4922 = vmatpush1.msra.mxu0 0.0
      %4923 = vmatprep.subr.mxu0 0.0
      %4924 = vmatpush1.msra.mxu0 0.0
      %4925 = vmatprep.subr.mxu0 0.0
      %4926 = vmatpush1.msra.mxu0 0.0
      %4927 = vmatprep.subr.mxu0 0.0
      %4928 = vmatpush1.msra.mxu0 0.0
      %4929 = vmatprep.subr.mxu0 0.0
      %4930 = vmatpush1.msra.mxu0 0.0
      %4931 = vmatprep.subr.mxu0 0.0
      %4932 = vmatpush1.msra.mxu0 0.0
      %4933 = vmatprep.subr.mxu0 0.0
      %4934 = vmatpush1.msra.mxu0 0.0
      %4935 = vmatprep.subr.mxu0 0.0
      %4936 = vmatpush1.msra.mxu0 0.0
      %4937 = vmatprep.subr.mxu0 0.0
      %4938 = vmatpush1.msra.mxu0 0.0
      %4939 = vmatprep.subr.mxu0 0.0
      %4940 = vmatpush1.msra.mxu0 0.0
      %4941 = vmatprep.subr.mxu0 0.0
      %4942 = vmatpush1.msra.mxu0 0.0
      %4943 = vmatprep.subr.mxu0 0.0
      %4944 = vmatpush1.msra.mxu0 0.0
      %4945 = vmatprep.subr.mxu0 0.0
      %4946 = vmatpush1.msra.mxu0 0.0
      %4947 = vmatprep.subr.mxu0 0.0
      %4948 = vmatpush1.msra.mxu0 0.0
      %4949 = vmatprep.subr.mxu0 0.0
      %4950 = vmatpush1.msra.mxu0 0.0
      %4951 = vmatprep.subr.mxu0 0.0
      %4952 = vmatpush1.msra.mxu0 0.0
      %4953 = vmatprep.subr.mxu0 0.0
      %4954 = vmatpush1.msra.mxu0 0.0
      %4955 = vmatprep.subr.mxu0 0.0
      %4956 = vmatpush1.msra.mxu0 0.0
      %4957 = vmatprep.subr.mxu0 0.0
      %4958 = vmatpush1.msra.mxu0 0.0
      %4959 = vmatprep.mubr.f32.mxu0 0.0
      %4960 = vmatmul.mubr.f32.gmra.mrb[0].mxu0 %v4893
      %v4961 = vpop.f32.mrb[0].mxu0
      %v4962 = vadd.f32 0.0, %v4961
      %v4963 = vpop.f32.mrb[0].mxu0
      %4964 = vdwg.mxu0
      %4966 = vset.pattern.permute.xlu0 0
      %4967 = vperm.xlu0 %4966, %v4962
      %v4968 = vpop.permute.xlu0 %4967
      %v4970 = vadd.f32 %v4891, %v4968
      %4972 = vset.pattern.permute.xlu0 0
      %4973 = vperm.xlu0 %4972, %v4292
      %v4974 = vpop.permute.xlu0 %4973
      %v4976 = vadd.f32 %v4970, %v4974
      %4977 = vxpose.xlu0.b32.start [1/16] %v4976, 128
      %4978 = vxpose.xlu0.b32.cont [2/16] 0.0, 128
      %4979 = vxpose.xlu0.b32.cont [3/16] 0.0, 128
      %4980 = vxpose.xlu0.b32.cont [4/16] 0.0, 128
      %4981 = vxpose.xlu0.b32.cont [5/16] 0.0, 128
      %4982 = vxpose.xlu0.b32.cont [6/16] 0.0, 128
      %4983 = vxpose.xlu0.b32.cont [7/16] 0.0, 128
      %4984 = vxpose.xlu0.b32.cont [8/16] 0.0, 128
      %4985 = vxpose.xlu0.b32.cont [9/16] 0.0, 128
      %4986 = vxpose.xlu0.b32.cont [10/16] 0.0, 128
      %4987 = vxpose.xlu0.b32.cont [11/16] 0.0, 128
      %4988 = vxpose.xlu0.b32.cont [12/16] 0.0, 128
      %4989 = vxpose.xlu0.b32.cont [13/16] 0.0, 128
      %4990 = vxpose.xlu0.b32.cont [14/16] 0.0, 128
      %4991 = vxpose.xlu0.b32.cont [15/16] 0.0, 128
      %4992 = vxpose.xlu0.b32.end [16/16] 0.0, 128
      %v4993 = vpop.trf.xlu0
      %v4994 = vpop.trf.xlu0
      %v4995 = vpop.trf.xlu0
      %v4996 = vpop.trf.xlu0
      %v4997 = vpop.trf.xlu0
      %v4998 = vpop.trf.xlu0
      %v4999 = vpop.trf.xlu0
      %v5000 = vpop.trf.xlu0
      %v5001 = vpop.trf.xlu0
      %v5002 = vpop.trf.xlu0
      %v5003 = vpop.trf.xlu0
      %v5004 = vpop.trf.xlu0
      %v5005 = vpop.trf.xlu0
      %v5006 = vpop.trf.xlu0
      %v5007 = vpop.trf.xlu0
      %v5008 = vpop.trf.xlu0
      %5009 = vst.msk [vmem:[%s332] sm:$0xff] %vm1497, %v4993
      %5010 = vst.msk [vmem:[%s332 + $0x8] sm:$0xff] %vm1497, %v4994
      %p5011 = scmp.lt.s32.totalorder %s20, 1
      %s5012 = scalar_select %p5011, %s20, 1
      %s5013 = smul.addr %s5012, 2
      %s5014 = smul.addr %s5013, 8
      %s5015 = scalar_lea.vmem %s9, %s5014
      // Predicated region
      $region57: #{sn_mult_encoder_fused.1} parent=55 // pred_check
        %p5016 = pneg %p232
      $region58: #{sn_mult_encoder_fused.1} parent=55 // pred_check_branch
        %5018 = sbr.rel (%p5016) target = $region60
      $region59: #{sn_mult_encoder_fused.1} parent=55 // pred_region
        _
      $region60: #{sn_mult_encoder_fused.1} parent=55 // pred_fallthru
        _
    $region56: #{sn_mult_encoder_fused.1} parent=5 // pred_fallthru
      _
    %p5019 = scmp.le.s32.totalorder 2, %s15
    // Predicated region
    $region61: #{sn_mult_encoder_fused.1} parent=5 // pred_check
      %p5020 = pneg %p5019
    $region62: #{sn_mult_encoder_fused.1} parent=5 // pred_check_branch
      %5022 = sbr.rel (%p5020) target = $region64
    $region63: #{sn_mult_encoder_fused.1} parent=5 // pred_region
      %s5023 = ssub.s32 %s15, 2
      // Predicated region
      $region65: #{sn_mult_encoder_fused.1} parent=63 // pred_check
        %p5024 = pneg %p238
      $region66: #{sn_mult_encoder_fused.1} parent=63 // pred_check_branch
        %5026 = sbr.rel (%p5024) target = $region68
      $region67: #{sn_mult_encoder_fused.1} parent=63 // pred_region
        %p5027 = scmp.lt.s32.totalorder %s21, 1
        %s5028 = scalar_select %p5027, %s21, 1
        %s5029 = smul.addr %s5028, 2
        %s5030 = smul.addr %s5029, 8
        %s5031 = scalar_lea.vmem %s9, %s5030
      $region68: #{sn_mult_encoder_fused.1} parent=63 // pred_fallthru
        _
    $region64: #{sn_mult_encoder_fused.1} parent=5 // pred_fallthru
      _
  $region6: #{sn_mult_encoder_fused.1} parent=0 // loop_footer
    %s19 = sadd.s32 1, %s15
  $region7: #{sn_mult_encoder_fused.1} parent=0 // loop_footer_branch
    %14 = sbr.rel target = $region3
  $region8: #{sn_mult_encoder_fused.1} parent=0 // loop_exit
    _

</llo_original>
